<compile_context>
chip_gen: v6e
topology: v6e:2x2x1
jax: 0.10.0
libtpu: 0.0.40
codegen_flags: <defaults>
</compile_context>

<pallas_src>
import functools

import jax
import jax.numpy as jnp
from jax import lax
from jax.experimental import pallas as pl
from jax.experimental.pallas import tpu as pltpu


_UNROLL_T_MAX = 16  # static unroll up to here; fori_loop(unroll=2) beyond.


def _for_each_t(T, body):
    """Loop over timesteps: static unroll for small T, fori_loop otherwise."""
    if T <= _UNROLL_T_MAX:
        for t in range(T):
            body(t)
    else:
        def _body(t, carry):
            body(t)
            return carry
        lax.fori_loop(0, T, _body, 0, unroll=2)


# ----------------------------------------------------------------------------
# Pallas kernel (one grid program = one batch block, full sequence)
# ----------------------------------------------------------------------------
def residual_lstm_kernel(
    x_ref,      # (T, B_blk, D)   input block (time-major)
    wih_ref,    # (D, 8H)         [fwd | bwd] input-proj weights, gate order (i,f,o,g)
    bih_ref,    # (1, 8H)         combined biases (b_ih + b_hh), same order
    whh_ref,    # (2H, 8H)        blockdiag(Whh_f^T, Whh_b^T)
    w1_ref,     # (2H, 4D)        linear1 weight^T
    b1_ref,     # (1, 4D)
    w2_ref,     # (4D, D)         linear2 weight^T
    b2_ref,     # (1, D)
    o_ref,      # (T, B_blk, D)   output block
    gx_sc,      # (T, B_blk, 8H)  scratch: hoisted input projections
    hc_sc,      # (T, B_blk, 2H)  scratch: [h_fwd | h_bwd] in concat layout
    *,
    T,
    B_blk,
    H,
):
    G = 4 * H

    # ---- Phase 1: input projections (both directions), off the critical path
    wih = wih_ref[...]
    bih = bih_ref[...]

    def project(t):
        gx_sc[t] = (
            jnp.dot(x_ref[t], wih, preferred_element_type=jnp.float32) + bih
        )

    _for_each_t(T, project)

    # ---- Phase 2: interleaved fwd/bwd recurrence --------------------------
    whh = whh_ref[...]

    def step(s, hf, cf, hb, cb):
        t_rev = T - 1 - s
        # One merged recurrent matmul for both directions.
        h_cat = jnp.concatenate([hf, hb], axis=1)                 # (B, 2H)
        rec = jnp.dot(h_cat, whh, preferred_element_type=jnp.float32)  # (B, 8H)
        gates_f = gx_sc[s, :, 0:G] + rec[:, 0:G]
        gates_b = gx_sc[t_rev, :, G:2 * G] + rec[:, G:2 * G]
        # Gate order is (i, f, o, g): sigmoid on the first 3H, tanh on last H.
        sf = jax.nn.sigmoid(gates_f[:, 0:3 * H])
        gf = jnp.tanh(gates_f[:, 3 * H:G])
        sb = jax.nn.sigmoid(gates_b[:, 0:3 * H])
        gb = jnp.tanh(gates_b[:, 3 * H:G])
        cf = sf[:, H:2 * H] * cf + sf[:, 0:H] * gf
        cb = sb[:, H:2 * H] * cb + sb[:, 0:H] * gb
        hf = sf[:, 2 * H:3 * H] * jnp.tanh(cf)
        hb = sb[:, 2 * H:3 * H] * jnp.tanh(cb)
        # Write straight into the concatenated [h_fwd | h_bwd] layout.
        hc_sc[s, :, 0:H] = hf
        hc_sc[t_rev, :, H:2 * H] = hb
        return hf, cf, hb, cb

    z = jnp.zeros((B_blk, H), jnp.float32)
    hf, cf, hb, cb = z, z, z, z
    if T <= _UNROLL_T_MAX:
        for s in range(T):
            hf, cf, hb, cb = step(s, hf, cf, hb, cb)
    else:
        hf, cf, hb, cb = lax.fori_loop(
            0, T, lambda s, c: step(s, *c), (hf, cf, hb, cb), unroll=2
        )

    # ---- Phase 3: MLP head + residual, tiled per timestep ------------------
    w1 = w1_ref[...]
    b1 = b1_ref[...]
    w2 = w2_ref[...]
    b2 = b2_ref[...]

    def mlp(t):
        y = jnp.dot(hc_sc[t], w1, preferred_element_type=jnp.float32) + b1
        y = jnp.maximum(y, 0.0)                                   # ReLU
        y = jnp.dot(y, w2, preferred_element_type=jnp.float32) + b2
        o_ref[t] = 0.5 * y + 0.5 * x_ref[t]

    _for_each_t(T, mlp)


# ----------------------------------------------------------------------------
# Parameter preparation (done ONCE, outside the jitted call)
# ----------------------------------------------------------------------------
def _reorder_gates(w, H):
    """Torch gate order (i, f, g, o) -> (i, f, o, g) along the leading 4H axis."""
    return jnp.concatenate([w[0:H], w[H:2 * H], w[3 * H:4 * H], w[2 * H:3 * H]], axis=0)


def prepare_params(params):
    H = params["w2"].shape[0]
    wih_f = _reorder_gates(params["wih_f"], H)      # (4H, D)
    wih_b = _reorder_gates(params["wih_b"], H)
    whh_f = _reorder_gates(params["whh_f"], H)      # (4H, H)
    whh_b = _reorder_gates(params["whh_b"], H)
    b_f = _reorder_gates(params["bih_f"] + params["bhh_f"], H)
    b_b = _reorder_gates(params["bih_b"] + params["bhh_b"], H)

    wih = jnp.concatenate([wih_f.T, wih_b.T], axis=1)            # (D, 8H)
    bih = jnp.concatenate([b_f, b_b]).reshape(1, 8 * H)          # (1, 8H)

    # Merged recurrent weight: blockdiag(Whh_f^T, Whh_b^T) -> (2H, 8H).
    whh = jnp.zeros((2 * H, 8 * H), jnp.float32)
    whh = whh.at[0:H, 0:4 * H].set(whh_f.T)
    whh = whh.at[H:2 * H, 4 * H:8 * H].set(whh_b.T)

    return {
        "wih": wih,
        "bih": bih,
        "whh": whh,
        "w1": params["w1"].T,                  # (2H, 4D)
        "b1": params["b1"].reshape(1, -1),     # (1, 4D)
        "w2": params["w2"].T,                  # (4D, D)
        "b2": params["b2"].reshape(1, -1),     # (1, D)
    }


# ----------------------------------------------------------------------------
# Wrapper
# ----------------------------------------------------------------------------
@functools.partial(jax.jit, static_argnames=("b_blk",))
def residual_lstm(x, prep, b_blk=8):
    T, B, D = x.shape
    H = D
    # Pad batch to a multiple of the block (>= f32 sublane count of 8).
    B_pad = ((B + b_blk - 1) // b_blk) * b_blk
    x_p = x if B_pad == B else jnp.pad(x, ((0, 0), (0, B_pad - B), (0, 0)))
    nb = B_pad // b_blk

    kernel = functools.partial(residual_lstm_kernel, T=T, B_blk=b_blk, H=H)

    # Explicit per-program VMEM budget (bytes): x/out blocks (double-buffered)
    # + the two scratches + weights, with 2x headroom.  Capped well under the
    # v7x 64 MiB physical VMEM.
    per_block = 4 * (
        2 * 2 * T * b_blk * D            # x + out blocks, double-buffered
        + T * b_blk * 8 * H              # gx scratch
        + T * b_blk * 2 * H              # hc scratch
        + D * 8 * H + 2 * H * 8 * H      # wih, whh
        + 2 * H * 4 * D + 4 * D * D      # w1, w2
        + 8 * H + 4 * D + D              # biases
    )
    vmem_limit = int(min(max(4 * 1024 * 1024, 2 * per_block), 48 * 1024 * 1024))

    out = pl.pallas_call(
        kernel,
        out_shape=jax.ShapeDtypeStruct((T, B_pad, D), jnp.float32),
        grid_spec=pltpu.PrefetchScalarGridSpec(
            num_scalar_prefetch=0,
            grid=(nb,),
            in_specs=[
                pl.BlockSpec((T, b_blk, D), lambda b: (0, b, 0)),        # x
                pl.BlockSpec((D, 8 * H), lambda b: (0, 0)),              # wih
                pl.BlockSpec((1, 8 * H), lambda b: (0, 0)),              # bih
                pl.BlockSpec((2 * H, 8 * H), lambda b: (0, 0)),          # whh
                pl.BlockSpec((2 * H, 4 * D), lambda b: (0, 0)),          # w1
                pl.BlockSpec((1, 4 * D), lambda b: (0, 0)),              # b1
                pl.BlockSpec((4 * D, D), lambda b: (0, 0)),              # w2
                pl.BlockSpec((1, D), lambda b: (0, 0)),                  # b2
            ],
            out_specs=pl.BlockSpec((T, b_blk, D), lambda b: (0, b, 0)),
            scratch_shapes=[
                pltpu.VMEM((T, b_blk, 8 * H), jnp.float32),   # input projections
                pltpu.VMEM((T, b_blk, 2 * H), jnp.float32),   # [h_fwd | h_bwd]
            ],
        ),
        compiler_params=pltpu.CompilerParams(
            dimension_semantics=("parallel",),
            vmem_limit_bytes=vmem_limit,
        ),
    )(
        x_p,
        prep["wih"], prep["bih"], prep["whh"],
        prep["w1"], prep["b1"], prep["w2"], prep["b2"],
    )
    return out[:, :B, :]


# ----------------------------------------------------------------------------
# Pure-JAX reference (mirrors the PyTorch module)
# ----------------------------------------------------------------------------
def residual_lstm_ref(x, params):
    T, B, D = x.shape
    H = D

    def run_dir(wih, whh, bih, bhh, xs):
        def step(carry, x_t):
            h, c = carry
            gates = x_t @ wih.T + bih + h @ whh.T + bhh
            i, f, g, o = jnp.split(gates, 4, axis=-1)
            i, f, o = jax.nn.sigmoid(i), jax.nn.sigmoid(f), jax.nn.sigmoid(o)
            g = jnp.tanh(g)
            c = f * c + i * g
            h = o * jnp.tanh(c)
            return (h, c), h

        h0 = jnp.zeros((B, H), jnp.float32)
        c0 = jnp.zeros((B, H), jnp.float32)
        _, hs = lax.scan(step, (h0, c0), xs)
        return hs

    hf = run_dir(params["wih_f"], params["whh_f"], params["bih_f"], params["bhh_f"], x)
    hb = run_dir(params["wih_b"], params["whh_b"], params["bih_b"], params["bhh_b"], x[::-1])[::-1]
    out = jnp.concatenate([hf, hb], axis=-1)
    y = jax.nn.relu(out @ params["w1"].T + params["b1"])
    y = y @ params["w2"].T + params["b2"]
    return 0.5 * y + 0.5 * x


# ----------------------------------------------------------------------------
# Deterministic parameter init (PyTorch-like U(-1/sqrt(fan), 1/sqrt(fan)))
# ----------------------------------------------------------------------------
def init_params(key, d_model):
    H = d_model
    k = 1.0 / jnp.sqrt(H)
    names_shapes = [
        ("wih_f", (4 * H, d_model)), ("whh_f", (4 * H, H)),
        ("bih_f", (4 * H,)), ("bhh_f", (4 * H,)),
        ("wih_b", (4 * H, d_model)), ("whh_b", (4 * H, H)),
        ("bih_b", (4 * H,)), ("bhh_b", (4 * H,)),
        ("w1", (4 * d_model, 2 * d_model)), ("b1", (4 * d_model,)),
        ("w2", (d_model, 4 * d_model)), ("b2", (d_model,)),
    ]
    keys = jax.random.split(key, len(names_shapes))
    params = {}
    for (name, shape), kk in zip(names_shapes, keys):
        params[name] = jax.random.uniform(
            kk, shape, dtype=jnp.float32, minval=-k, maxval=k
        )
    return params


# ----------------------------------------------------------------------------
if __name__ == "__main__":
    T, B, D = 8, 2, 32          # seq=8, batch=2, d_model=32

    key = jax.random.PRNGKey(0)
    kx, kp = jax.random.split(key)
    x = jax.random.normal(kx, (T, B, D), dtype=jnp.float32)
    params = init_params(kp, D)

    prep = prepare_params(params)            # one-time weight prep (outside jit)
    out = residual_lstm(x, prep)
    out = jax.block_until_ready(out)

    ref = residual_lstm_ref(x, params)
    assert out.shape == (T, B, D)
    err = jnp.max(jnp.abs(out - ref))
    assert jnp.allclose(out, ref, atol=5e-5, rtol=5e-5), f"max abs err = {err}"
    print("KERNEL_OK")
</pallas_src>

<mosaic_0001>
module attributes {stable_mosaic.version = 11 : i64} {
  func.func @residual_lstm_kernel(%arg0: i32, %arg1: memref<8x8x32xf32, #tpu.memory_space<vmem>>, %arg2: memref<32x256xf32, #tpu.memory_space<vmem>>, %arg3: memref<1x256xf32, #tpu.memory_space<vmem>>, %arg4: memref<64x256xf32, #tpu.memory_space<vmem>>, %arg5: memref<64x128xf32, #tpu.memory_space<vmem>>, %arg6: memref<1x128xf32, #tpu.memory_space<vmem>>, %arg7: memref<128x32xf32, #tpu.memory_space<vmem>>, %arg8: memref<1x32xf32, #tpu.memory_space<vmem>>, %arg9: memref<8x8x32xf32, #tpu.memory_space<vmem>>, %arg10: memref<8x8x256xf32, #tpu.memory_space<vmem>>, %arg11: memref<8x8x64xf32, #tpu.memory_space<vmem>>) attributes {dimension_semantics = [#tpu.dimension_semantics<parallel>], iteration_bounds = array<i64: 1>, scalar_prefetch = 0 : i64, scratch_operands = 2 : i64, tpu.core_type = #tpu.core_type<tc>, window_params = [{transform_indices = @transform_0, window_bounds = array<i64: 8, 8, 32>}, {pipeline_mode = #tpu.pipeline_mode<synchronous>, transform_indices = @transform_1, window_bounds = array<i64: 32, 256>}, {pipeline_mode = #tpu.pipeline_mode<synchronous>, transform_indices = @transform_2, window_bounds = array<i64: 1, 256>}, {pipeline_mode = #tpu.pipeline_mode<synchronous>, transform_indices = @transform_3, window_bounds = array<i64: 64, 256>}, {pipeline_mode = #tpu.pipeline_mode<synchronous>, transform_indices = @transform_4, window_bounds = array<i64: 64, 128>}, {pipeline_mode = #tpu.pipeline_mode<synchronous>, transform_indices = @transform_5, window_bounds = array<i64: 1, 128>}, {pipeline_mode = #tpu.pipeline_mode<synchronous>, transform_indices = @transform_6, window_bounds = array<i64: 128, 32>}, {pipeline_mode = #tpu.pipeline_mode<synchronous>, transform_indices = @transform_7, window_bounds = array<i64: 1, 32>}, {transform_indices = @transform_8, window_bounds = array<i64: 8, 8, 32>}]} {
    %c0 = arith.constant 0 : index
    %c0_0 = arith.constant 0 : index
    %0 = vector.load %arg2[%c0, %c0_0] : memref<32x256xf32, #tpu.memory_space<vmem>>, vector<32x256xf32>
    %c0_1 = arith.constant 0 : index
    %c0_2 = arith.constant 0 : index
    %1 = vector.load %arg3[%c0_1, %c0_2] : memref<1x256xf32, #tpu.memory_space<vmem>>, vector<1x256xf32>
    %c0_3 = arith.constant 0 : index
    %c0_4 = arith.constant 0 : index
    %c0_5 = arith.constant 0 : index
    %2 = vector.load %arg1[%c0_3, %c0_4, %c0_5] : memref<8x8x32xf32, #tpu.memory_space<vmem>>, vector<1x8x32xf32>
    %3 = vector.shape_cast %2 : vector<1x8x32xf32> to vector<8x32xf32>
    %cst = arith.constant dense<0.000000e+00> : vector<8x256xf32>
    %4 = tpu.matmul %3, %0, %cst {dimension_numbers = #tpu.dot_dimension_numbers<[1], [0], [0], [1], [0, 0, 1, 1], [], []>} : vector<8x32xf32>, vector<32x256xf32>, vector<8x256xf32> -> vector<8x256xf32>
    %5 = vector.broadcast %1 : vector<1x256xf32> to vector<8x256xf32>
    %6 = arith.addf %4, %5 : vector<8x256xf32>
    %c0_6 = arith.constant 0 : index
    %c0_7 = arith.constant 0 : index
    %c0_8 = arith.constant 0 : index
    %7 = vector.load %arg10[%c0_6, %c0_7, %c0_8] : memref<8x8x256xf32, #tpu.memory_space<vmem>>, vector<1x8x256xf32>
    %8 = vector.shape_cast %7 : vector<1x8x256xf32> to vector<8x256xf32>
    %9 = vector.shape_cast %6 : vector<8x256xf32> to vector<1x8x256xf32>
    tpu.vector_store %arg10[%c0_6, %c0_7, %c0_8], %9 {strides = array<i32>} : memref<8x8x256xf32, #tpu.memory_space<vmem>>, vector<1x8x256xf32>,
    %c1 = arith.constant 1 : index
    %c0_9 = arith.constant 0 : index
    %c0_10 = arith.constant 0 : index
    %10 = vector.load %arg1[%c1, %c0_9, %c0_10] : memref<8x8x32xf32, #tpu.memory_space<vmem>>, vector<1x8x32xf32>
    %11 = vector.shape_cast %10 : vector<1x8x32xf32> to vector<8x32xf32>
    %cst_11 = arith.constant dense<0.000000e+00> : vector<8x256xf32>
    %12 = tpu.matmul %11, %0, %cst_11 {dimension_numbers = #tpu.dot_dimension_numbers<[1], [0], [0], [1], [0, 0, 1, 1], [], []>} : vector<8x32xf32>, vector<32x256xf32>, vector<8x256xf32> -> vector<8x256xf32>
    %13 = vector.broadcast %1 : vector<1x256xf32> to vector<8x256xf32>
    %14 = arith.addf %12, %13 : vector<8x256xf32>
    %c1_12 = arith.constant 1 : index
    %c0_13 = arith.constant 0 : index
    %c0_14 = arith.constant 0 : index
    %15 = vector.load %arg10[%c1_12, %c0_13, %c0_14] : memref<8x8x256xf32, #tpu.memory_space<vmem>>, vector<1x8x256xf32>
    %16 = vector.shape_cast %15 : vector<1x8x256xf32> to vector<8x256xf32>
    %17 = vector.shape_cast %14 : vector<8x256xf32> to vector<1x8x256xf32>
    tpu.vector_store %arg10[%c1_12, %c0_13, %c0_14], %17 {strides = array<i32>} : memref<8x8x256xf32, #tpu.memory_space<vmem>>, vector<1x8x256xf32>,
    %c2 = arith.constant 2 : index
    %c0_15 = arith.constant 0 : index
    %c0_16 = arith.constant 0 : index
    %18 = vector.load %arg1[%c2, %c0_15, %c0_16] : memref<8x8x32xf32, #tpu.memory_space<vmem>>, vector<1x8x32xf32>
    %19 = vector.shape_cast %18 : vector<1x8x32xf32> to vector<8x32xf32>
    %cst_17 = arith.constant dense<0.000000e+00> : vector<8x256xf32>
    %20 = tpu.matmul %19, %0, %cst_17 {dimension_numbers = #tpu.dot_dimension_numbers<[1], [0], [0], [1], [0, 0, 1, 1], [], []>} : vector<8x32xf32>, vector<32x256xf32>, vector<8x256xf32> -> vector<8x256xf32>
    %21 = vector.broadcast %1 : vector<1x256xf32> to vector<8x256xf32>
    %22 = arith.addf %20, %21 : vector<8x256xf32>
    %c2_18 = arith.constant 2 : index
    %c0_19 = arith.constant 0 : index
    %c0_20 = arith.constant 0 : index
    %23 = vector.load %arg10[%c2_18, %c0_19, %c0_20] : memref<8x8x256xf32, #tpu.memory_space<vmem>>, vector<1x8x256xf32>
    %24 = vector.shape_cast %23 : vector<1x8x256xf32> to vector<8x256xf32>
    %25 = vector.shape_cast %22 : vector<8x256xf32> to vector<1x8x256xf32>
    tpu.vector_store %arg10[%c2_18, %c0_19, %c0_20], %25 {strides = array<i32>} : memref<8x8x256xf32, #tpu.memory_space<vmem>>, vector<1x8x256xf32>,
    %c3 = arith.constant 3 : index
    %c0_21 = arith.constant 0 : index
    %c0_22 = arith.constant 0 : index
    %26 = vector.load %arg1[%c3, %c0_21, %c0_22] : memref<8x8x32xf32, #tpu.memory_space<vmem>>, vector<1x8x32xf32>
    %27 = vector.shape_cast %26 : vector<1x8x32xf32> to vector<8x32xf32>
    %cst_23 = arith.constant dense<0.000000e+00> : vector<8x256xf32>
    %28 = tpu.matmul %27, %0, %cst_23 {dimension_numbers = #tpu.dot_dimension_numbers<[1], [0], [0], [1], [0, 0, 1, 1], [], []>} : vector<8x32xf32>, vector<32x256xf32>, vector<8x256xf32> -> vector<8x256xf32>
    %29 = vector.broadcast %1 : vector<1x256xf32> to vector<8x256xf32>
    %30 = arith.addf %28, %29 : vector<8x256xf32>
    %c3_24 = arith.constant 3 : index
    %c0_25 = arith.constant 0 : index
    %c0_26 = arith.constant 0 : index
    %31 = vector.load %arg10[%c3_24, %c0_25, %c0_26] : memref<8x8x256xf32, #tpu.memory_space<vmem>>, vector<1x8x256xf32>
    %32 = vector.shape_cast %31 : vector<1x8x256xf32> to vector<8x256xf32>
    %33 = vector.shape_cast %30 : vector<8x256xf32> to vector<1x8x256xf32>
    tpu.vector_store %arg10[%c3_24, %c0_25, %c0_26], %33 {strides = array<i32>} : memref<8x8x256xf32, #tpu.memory_space<vmem>>, vector<1x8x256xf32>,
    %c4 = arith.constant 4 : index
    %c0_27 = arith.constant 0 : index
    %c0_28 = arith.constant 0 : index
    %34 = vector.load %arg1[%c4, %c0_27, %c0_28] : memref<8x8x32xf32, #tpu.memory_space<vmem>>, vector<1x8x32xf32>
    %35 = vector.shape_cast %34 : vector<1x8x32xf32> to vector<8x32xf32>
    %cst_29 = arith.constant dense<0.000000e+00> : vector<8x256xf32>
    %36 = tpu.matmul %35, %0, %cst_29 {dimension_numbers = #tpu.dot_dimension_numbers<[1], [0], [0], [1], [0, 0, 1, 1], [], []>} : vector<8x32xf32>, vector<32x256xf32>, vector<8x256xf32> -> vector<8x256xf32>
    %37 = vector.broadcast %1 : vector<1x256xf32> to vector<8x256xf32>
    %38 = arith.addf %36, %37 : vector<8x256xf32>
    %c4_30 = arith.constant 4 : index
    %c0_31 = arith.constant 0 : index
    %c0_32 = arith.constant 0 : index
    %39 = vector.load %arg10[%c4_30, %c0_31, %c0_32] : memref<8x8x256xf32, #tpu.memory_space<vmem>>, vector<1x8x256xf32>
    %40 = vector.shape_cast %39 : vector<1x8x256xf32> to vector<8x256xf32>
    %41 = vector.shape_cast %38 : vector<8x256xf32> to vector<1x8x256xf32>
    tpu.vector_store %arg10[%c4_30, %c0_31, %c0_32], %41 {strides = array<i32>} : memref<8x8x256xf32, #tpu.memory_space<vmem>>, vector<1x8x256xf32>,
    %c5 = arith.constant 5 : index
    %c0_33 = arith.constant 0 : index
    %c0_34 = arith.constant 0 : index
    %42 = vector.load %arg1[%c5, %c0_33, %c0_34] : memref<8x8x32xf32, #tpu.memory_space<vmem>>, vector<1x8x32xf32>
    %43 = vector.shape_cast %42 : vector<1x8x32xf32> to vector<8x32xf32>
    %cst_35 = arith.constant dense<0.000000e+00> : vector<8x256xf32>
    %44 = tpu.matmul %43, %0, %cst_35 {dimension_numbers = #tpu.dot_dimension_numbers<[1], [0], [0], [1], [0, 0, 1, 1], [], []>} : vector<8x32xf32>, vector<32x256xf32>, vector<8x256xf32> -> vector<8x256xf32>
    %45 = vector.broadcast %1 : vector<1x256xf32> to vector<8x256xf32>
    %46 = arith.addf %44, %45 : vector<8x256xf32>
    %c5_36 = arith.constant 5 : index
    %c0_37 = arith.constant 0 : index
    %c0_38 = arith.constant 0 : index
    %47 = vector.load %arg10[%c5_36, %c0_37, %c0_38] : memref<8x8x256xf32, #tpu.memory_space<vmem>>, vector<1x8x256xf32>
    %48 = vector.shape_cast %47 : vector<1x8x256xf32> to vector<8x256xf32>
    %49 = vector.shape_cast %46 : vector<8x256xf32> to vector<1x8x256xf32>
    tpu.vector_store %arg10[%c5_36, %c0_37, %c0_38], %49 {strides = array<i32>} : memref<8x8x256xf32, #tpu.memory_space<vmem>>, vector<1x8x256xf32>,
    %c6 = arith.constant 6 : index
    %c0_39 = arith.constant 0 : index
    %c0_40 = arith.constant 0 : index
    %50 = vector.load %arg1[%c6, %c0_39, %c0_40] : memref<8x8x32xf32, #tpu.memory_space<vmem>>, vector<1x8x32xf32>
    %51 = vector.shape_cast %50 : vector<1x8x32xf32> to vector<8x32xf32>
    %cst_41 = arith.constant dense<0.000000e+00> : vector<8x256xf32>
    %52 = tpu.matmul %51, %0, %cst_41 {dimension_numbers = #tpu.dot_dimension_numbers<[1], [0], [0], [1], [0, 0, 1, 1], [], []>} : vector<8x32xf32>, vector<32x256xf32>, vector<8x256xf32> -> vector<8x256xf32>
    %53 = vector.broadcast %1 : vector<1x256xf32> to vector<8x256xf32>
    %54 = arith.addf %52, %53 : vector<8x256xf32>
    %c6_42 = arith.constant 6 : index
    %c0_43 = arith.constant 0 : index
    %c0_44 = arith.constant 0 : index
    %55 = vector.load %arg10[%c6_42, %c0_43, %c0_44] : memref<8x8x256xf32, #tpu.memory_space<vmem>>, vector<1x8x256xf32>
    %56 = vector.shape_cast %55 : vector<1x8x256xf32> to vector<8x256xf32>
    %57 = vector.shape_cast %54 : vector<8x256xf32> to vector<1x8x256xf32>
    tpu.vector_store %arg10[%c6_42, %c0_43, %c0_44], %57 {strides = array<i32>} : memref<8x8x256xf32, #tpu.memory_space<vmem>>, vector<1x8x256xf32>,
    %c7 = arith.constant 7 : index
    %c0_45 = arith.constant 0 : index
    %c0_46 = arith.constant 0 : index
    %58 = vector.load %arg1[%c7, %c0_45, %c0_46] : memref<8x8x32xf32, #tpu.memory_space<vmem>>, vector<1x8x32xf32>
    %59 = vector.shape_cast %58 : vector<1x8x32xf32> to vector<8x32xf32>
    %cst_47 = arith.constant dense<0.000000e+00> : vector<8x256xf32>
    %60 = tpu.matmul %59, %0, %cst_47 {dimension_numbers = #tpu.dot_dimension_numbers<[1], [0], [0], [1], [0, 0, 1, 1], [], []>} : vector<8x32xf32>, vector<32x256xf32>, vector<8x256xf32> -> vector<8x256xf32>
    %61 = vector.broadcast %1 : vector<1x256xf32> to vector<8x256xf32>
    %62 = arith.addf %60, %61 : vector<8x256xf32>
    %c7_48 = arith.constant 7 : index
    %c0_49 = arith.constant 0 : index
    %c0_50 = arith.constant 0 : index
    %63 = vector.load %arg10[%c7_48, %c0_49, %c0_50] : memref<8x8x256xf32, #tpu.memory_space<vmem>>, vector<1x8x256xf32>
    %64 = vector.shape_cast %63 : vector<1x8x256xf32> to vector<8x256xf32>
    %65 = vector.shape_cast %62 : vector<8x256xf32> to vector<1x8x256xf32>
    tpu.vector_store %arg10[%c7_48, %c0_49, %c0_50], %65 {strides = array<i32>} : memref<8x8x256xf32, #tpu.memory_space<vmem>>, vector<1x8x256xf32>,
    %c0_51 = arith.constant 0 : index
    %c0_52 = arith.constant 0 : index
    %66 = vector.load %arg4[%c0_51, %c0_52] : memref<64x256xf32, #tpu.memory_space<vmem>>, vector<64x256xf32>
    %cst_53 = arith.constant 0.000000e+00 : f32
    %67 = vector.broadcast %cst_53 : f32 to vector<8x32xf32>
    %68 = tpu.concatenate %67, %67 in 1 : vector<8x32xf32>, vector<8x32xf32> -> vector<8x64xf32>
    %cst_54 = arith.constant dense<0.000000e+00> : vector<8x256xf32>
    %69 = tpu.matmul %68, %66, %cst_54 {dimension_numbers = #tpu.dot_dimension_numbers<[1], [0], [0], [1], [0, 0, 1, 1], [], []>} : vector<8x64xf32>, vector<64x256xf32>, vector<8x256xf32> -> vector<8x256xf32>
    %c0_55 = arith.constant 0 : index
    %c0_56 = arith.constant 0 : index
    %c0_57 = arith.constant 0 : index
    %70 = vector.load %arg10[%c0_55, %c0_56, %c0_57] : memref<8x8x256xf32, #tpu.memory_space<vmem>>, vector<1x8x128xf32>
    %71 = vector.shape_cast %70 : vector<1x8x128xf32> to vector<8x128xf32>
    %72 = vector.extract_strided_slice %69 {offsets = [0, 0], sizes = [8, 128], strides = [1, 1]} : vector<8x256xf32> to vector<8x128xf32>
    %73 = arith.addf %71, %72 : vector<8x128xf32>
    %c7_58 = arith.constant 7 : index
    %c0_59 = arith.constant 0 : index
    %c128 = arith.constant 128 : index
    %74 = vector.load %arg10[%c7_58, %c0_59, %c128] : memref<8x8x256xf32, #tpu.memory_space<vmem>>, vector<1x8x128xf32>
    %75 = vector.shape_cast %74 : vector<1x8x128xf32> to vector<8x128xf32>
    %76 = vector.extract_strided_slice %69 {offsets = [0, 128], sizes = [8, 128], strides = [1, 1]} : vector<8x256xf32> to vector<8x128xf32>
    %77 = arith.addf %75, %76 : vector<8x128xf32>
    %78 = vector.extract_strided_slice %73 {offsets = [0, 0], sizes = [8, 96], strides = [1, 1]} : vector<8x128xf32> to vector<8x96xf32>
    %79 = arith.negf %78 : vector<8x96xf32>
    %80 = math.exp %79 : vector<8x96xf32>
    %cst_60 = arith.constant 1.000000e+00 : f32
    %81 = vector.broadcast %cst_60 : f32 to vector<8x96xf32>
    %82 = arith.addf %81, %80 : vector<8x96xf32>
    %83 = arith.divf %81, %82 : vector<8x96xf32>
    %84 = vector.extract_strided_slice %73 {offsets = [0, 96], sizes = [8, 32], strides = [1, 1]} : vector<8x128xf32> to vector<8x32xf32>
    %85 = math.tanh %84 : vector<8x32xf32>
    %86 = vector.extract_strided_slice %77 {offsets = [0, 0], sizes = [8, 96], strides = [1, 1]} : vector<8x128xf32> to vector<8x96xf32>
    %87 = arith.negf %86 : vector<8x96xf32>
    %88 = math.exp %87 : vector<8x96xf32>
    %cst_61 = arith.constant 1.000000e+00 : f32
    %89 = vector.broadcast %cst_61 : f32 to vector<8x96xf32>
    %90 = arith.addf %89, %88 : vector<8x96xf32>
    %91 = arith.divf %89, %90 : vector<8x96xf32>
    %92 = vector.extract_strided_slice %77 {offsets = [0, 96], sizes = [8, 32], strides = [1, 1]} : vector<8x128xf32> to vector<8x32xf32>
    %93 = math.tanh %92 : vector<8x32xf32>
    %94 = vector.extract_strided_slice %83 {offsets = [0, 32], sizes = [8, 32], strides = [1, 1]} : vector<8x96xf32> to vector<8x32xf32>
    %95 = arith.mulf %94, %67 : vector<8x32xf32>
    %96 = vector.extract_strided_slice %83 {offsets = [0, 0], sizes = [8, 32], strides = [1, 1]} : vector<8x96xf32> to vector<8x32xf32>
    %97 = arith.mulf %96, %85 : vector<8x32xf32>
    %98 = arith.addf %95, %97 : vector<8x32xf32>
    %99 = vector.extract_strided_slice %91 {offsets = [0, 32], sizes = [8, 32], strides = [1, 1]} : vector<8x96xf32> to vector<8x32xf32>
    %100 = arith.mulf %99, %67 : vector<8x32xf32>
    %101 = vector.extract_strided_slice %91 {offsets = [0, 0], sizes = [8, 32], strides = [1, 1]} : vector<8x96xf32> to vector<8x32xf32>
    %102 = arith.mulf %101, %93 : vector<8x32xf32>
    %103 = arith.addf %100, %102 : vector<8x32xf32>
    %104 = vector.extract_strided_slice %83 {offsets = [0, 64], sizes = [8, 32], strides = [1, 1]} : vector<8x96xf32> to vector<8x32xf32>
    %105 = math.tanh %98 : vector<8x32xf32>
    %106 = arith.mulf %104, %105 : vector<8x32xf32>
    %107 = vector.extract_strided_slice %91 {offsets = [0, 64], sizes = [8, 32], strides = [1, 1]} : vector<8x96xf32> to vector<8x32xf32>
    %108 = math.tanh %103 : vector<8x32xf32>
    %109 = arith.mulf %107, %108 : vector<8x32xf32>
    %c0_62 = arith.constant 0 : index
    %c0_63 = arith.constant 0 : index
    %c0_64 = arith.constant 0 : index
    %110 = vector.load %arg11[%c0_62, %c0_63, %c0_64] : memref<8x8x64xf32, #tpu.memory_space<vmem>>, vector<1x8x32xf32>
    %111 = vector.shape_cast %110 : vector<1x8x32xf32> to vector<8x32xf32>
    %112 = vector.shape_cast %106 : vector<8x32xf32> to vector<1x8x32xf32>
    tpu.vector_store %arg11[%c0_62, %c0_63, %c0_64], %112 {strides = array<i32>} : memref<8x8x64xf32, #tpu.memory_space<vmem>>, vector<1x8x32xf32>,
    %c7_65 = arith.constant 7 : index
    %c0_66 = arith.constant 0 : index
    %c32 = arith.constant 32 : index
    %113 = vector.load %arg11[%c7_65, %c0_66, %c32] : memref<8x8x64xf32, #tpu.memory_space<vmem>>, vector<1x8x32xf32>
    %114 = vector.shape_cast %113 : vector<1x8x32xf32> to vector<8x32xf32>
    %115 = vector.shape_cast %109 : vector<8x32xf32> to vector<1x8x32xf32>
    tpu.vector_store %arg11[%c7_65, %c0_66, %c32], %115 {strides = array<i32>} : memref<8x8x64xf32, #tpu.memory_space<vmem>>, vector<1x8x32xf32>,
    %116 = tpu.concatenate %106, %109 in 1 : vector<8x32xf32>, vector<8x32xf32> -> vector<8x64xf32>
    %cst_67 = arith.constant dense<0.000000e+00> : vector<8x256xf32>
    %117 = tpu.matmul %116, %66, %cst_67 {dimension_numbers = #tpu.dot_dimension_numbers<[1], [0], [0], [1], [0, 0, 1, 1], [], []>} : vector<8x64xf32>, vector<64x256xf32>, vector<8x256xf32> -> vector<8x256xf32>
    %c1_68 = arith.constant 1 : index
    %c0_69 = arith.constant 0 : index
    %c0_70 = arith.constant 0 : index
    %118 = vector.load %arg10[%c1_68, %c0_69, %c0_70] : memref<8x8x256xf32, #tpu.memory_space<vmem>>, vector<1x8x128xf32>
    %119 = vector.shape_cast %118 : vector<1x8x128xf32> to vector<8x128xf32>
    %120 = vector.extract_strided_slice %117 {offsets = [0, 0], sizes = [8, 128], strides = [1, 1]} : vector<8x256xf32> to vector<8x128xf32>
    %121 = arith.addf %119, %120 : vector<8x128xf32>
    %c6_71 = arith.constant 6 : index
    %c0_72 = arith.constant 0 : index
    %c128_73 = arith.constant 128 : index
    %122 = vector.load %arg10[%c6_71, %c0_72, %c128_73] : memref<8x8x256xf32, #tpu.memory_space<vmem>>, vector<1x8x128xf32>
    %123 = vector.shape_cast %122 : vector<1x8x128xf32> to vector<8x128xf32>
    %124 = vector.extract_strided_slice %117 {offsets = [0, 128], sizes = [8, 128], strides = [1, 1]} : vector<8x256xf32> to vector<8x128xf32>
    %125 = arith.addf %123, %124 : vector<8x128xf32>
    %126 = vector.extract_strided_slice %121 {offsets = [0, 0], sizes = [8, 96], strides = [1, 1]} : vector<8x128xf32> to vector<8x96xf32>
    %127 = arith.negf %126 : vector<8x96xf32>
    %128 = math.exp %127 : vector<8x96xf32>
    %cst_74 = arith.constant 1.000000e+00 : f32
    %129 = vector.broadcast %cst_74 : f32 to vector<8x96xf32>
    %130 = arith.addf %129, %128 : vector<8x96xf32>
    %131 = arith.divf %129, %130 : vector<8x96xf32>
    %132 = vector.extract_strided_slice %121 {offsets = [0, 96], sizes = [8, 32], strides = [1, 1]} : vector<8x128xf32> to vector<8x32xf32>
    %133 = math.tanh %132 : vector<8x32xf32>
    %134 = vector.extract_strided_slice %125 {offsets = [0, 0], sizes = [8, 96], strides = [1, 1]} : vector<8x128xf32> to vector<8x96xf32>
    %135 = arith.negf %134 : vector<8x96xf32>
    %136 = math.exp %135 : vector<8x96xf32>
    %cst_75 = arith.constant 1.000000e+00 : f32
    %137 = vector.broadcast %cst_75 : f32 to vector<8x96xf32>
    %138 = arith.addf %137, %136 : vector<8x96xf32>
    %139 = arith.divf %137, %138 : vector<8x96xf32>
    %140 = vector.extract_strided_slice %125 {offsets = [0, 96], sizes = [8, 32], strides = [1, 1]} : vector<8x128xf32> to vector<8x32xf32>
    %141 = math.tanh %140 : vector<8x32xf32>
    %142 = vector.extract_strided_slice %131 {offsets = [0, 32], sizes = [8, 32], strides = [1, 1]} : vector<8x96xf32> to vector<8x32xf32>
    %143 = arith.mulf %142, %98 : vector<8x32xf32>
    %144 = vector.extract_strided_slice %131 {offsets = [0, 0], sizes = [8, 32], strides = [1, 1]} : vector<8x96xf32> to vector<8x32xf32>
    %145 = arith.mulf %144, %133 : vector<8x32xf32>
    %146 = arith.addf %143, %145 : vector<8x32xf32>
    %147 = vector.extract_strided_slice %139 {offsets = [0, 32], sizes = [8, 32], strides = [1, 1]} : vector<8x96xf32> to vector<8x32xf32>
    %148 = arith.mulf %147, %103 : vector<8x32xf32>
    %149 = vector.extract_strided_slice %139 {offsets = [0, 0], sizes = [8, 32], strides = [1, 1]} : vector<8x96xf32> to vector<8x32xf32>
    %150 = arith.mulf %149, %141 : vector<8x32xf32>
    %151 = arith.addf %148, %150 : vector<8x32xf32>
    %152 = vector.extract_strided_slice %131 {offsets = [0, 64], sizes = [8, 32], strides = [1, 1]} : vector<8x96xf32> to vector<8x32xf32>
    %153 = math.tanh %146 : vector<8x32xf32>
    %154 = arith.mulf %152, %153 : vector<8x32xf32>
    %155 = vector.extract_strided_slice %139 {offsets = [0, 64], sizes = [8, 32], strides = [1, 1]} : vector<8x96xf32> to vector<8x32xf32>
    %156 = math.tanh %151 : vector<8x32xf32>
    %157 = arith.mulf %155, %156 : vector<8x32xf32>
    %c1_76 = arith.constant 1 : index
    %c0_77 = arith.constant 0 : index
    %c0_78 = arith.constant 0 : index
    %158 = vector.load %arg11[%c1_76, %c0_77, %c0_78] : memref<8x8x64xf32, #tpu.memory_space<vmem>>, vector<1x8x32xf32>
    %159 = vector.shape_cast %158 : vector<1x8x32xf32> to vector<8x32xf32>
    %160 = vector.shape_cast %154 : vector<8x32xf32> to vector<1x8x32xf32>
    tpu.vector_store %arg11[%c1_76, %c0_77, %c0_78], %160 {strides = array<i32>} : memref<8x8x64xf32, #tpu.memory_space<vmem>>, vector<1x8x32xf32>,
    %c6_79 = arith.constant 6 : index
    %c0_80 = arith.constant 0 : index
    %c32_81 = arith.constant 32 : index
    %161 = vector.load %arg11[%c6_79, %c0_80, %c32_81] : memref<8x8x64xf32, #tpu.memory_space<vmem>>, vector<1x8x32xf32>
    %162 = vector.shape_cast %161 : vector<1x8x32xf32> to vector<8x32xf32>
    %163 = vector.shape_cast %157 : vector<8x32xf32> to vector<1x8x32xf32>
    tpu.vector_store %arg11[%c6_79, %c0_80, %c32_81], %163 {strides = array<i32>} : memref<8x8x64xf32, #tpu.memory_space<vmem>>, vector<1x8x32xf32>,
    %164 = tpu.concatenate %154, %157 in 1 : vector<8x32xf32>, vector<8x32xf32> -> vector<8x64xf32>
    %cst_82 = arith.constant dense<0.000000e+00> : vector<8x256xf32>
    %165 = tpu.matmul %164, %66, %cst_82 {dimension_numbers = #tpu.dot_dimension_numbers<[1], [0], [0], [1], [0, 0, 1, 1], [], []>} : vector<8x64xf32>, vector<64x256xf32>, vector<8x256xf32> -> vector<8x256xf32>
    %c2_83 = arith.constant 2 : index
    %c0_84 = arith.constant 0 : index
    %c0_85 = arith.constant 0 : index
    %166 = vector.load %arg10[%c2_83, %c0_84, %c0_85] : memref<8x8x256xf32, #tpu.memory_space<vmem>>, vector<1x8x128xf32>
    %167 = vector.shape_cast %166 : vector<1x8x128xf32> to vector<8x128xf32>
    %168 = vector.extract_strided_slice %165 {offsets = [0, 0], sizes = [8, 128], strides = [1, 1]} : vector<8x256xf32> to vector<8x128xf32>
    %169 = arith.addf %167, %168 : vector<8x128xf32>
    %c5_86 = arith.constant 5 : index
    %c0_87 = arith.constant 0 : index
    %c128_88 = arith.constant 128 : index
    %170 = vector.load %arg10[%c5_86, %c0_87, %c128_88] : memref<8x8x256xf32, #tpu.memory_space<vmem>>, vector<1x8x128xf32>
    %171 = vector.shape_cast %170 : vector<1x8x128xf32> to vector<8x128xf32>
    %172 = vector.extract_strided_slice %165 {offsets = [0, 128], sizes = [8, 128], strides = [1, 1]} : vector<8x256xf32> to vector<8x128xf32>
    %173 = arith.addf %171, %172 : vector<8x128xf32>
    %174 = vector.extract_strided_slice %169 {offsets = [0, 0], sizes = [8, 96], strides = [1, 1]} : vector<8x128xf32> to vector<8x96xf32>
    %175 = arith.negf %174 : vector<8x96xf32>
    %176 = math.exp %175 : vector<8x96xf32>
    %cst_89 = arith.constant 1.000000e+00 : f32
    %177 = vector.broadcast %cst_89 : f32 to vector<8x96xf32>
    %178 = arith.addf %177, %176 : vector<8x96xf32>
    %179 = arith.divf %177, %178 : vector<8x96xf32>
    %180 = vector.extract_strided_slice %169 {offsets = [0, 96], sizes = [8, 32], strides = [1, 1]} : vector<8x128xf32> to vector<8x32xf32>
    %181 = math.tanh %180 : vector<8x32xf32>
    %182 = vector.extract_strided_slice %173 {offsets = [0, 0], sizes = [8, 96], strides = [1, 1]} : vector<8x128xf32> to vector<8x96xf32>
    %183 = arith.negf %182 : vector<8x96xf32>
    %184 = math.exp %183 : vector<8x96xf32>
    %cst_90 = arith.constant 1.000000e+00 : f32
    %185 = vector.broadcast %cst_90 : f32 to vector<8x96xf32>
    %186 = arith.addf %185, %184 : vector<8x96xf32>
    %187 = arith.divf %185, %186 : vector<8x96xf32>
    %188 = vector.extract_strided_slice %173 {offsets = [0, 96], sizes = [8, 32], strides = [1, 1]} : vector<8x128xf32> to vector<8x32xf32>
    %189 = math.tanh %188 : vector<8x32xf32>
    %190 = vector.extract_strided_slice %179 {offsets = [0, 32], sizes = [8, 32], strides = [1, 1]} : vector<8x96xf32> to vector<8x32xf32>
    %191 = arith.mulf %190, %146 : vector<8x32xf32>
    %192 = vector.extract_strided_slice %179 {offsets = [0, 0], sizes = [8, 32], strides = [1, 1]} : vector<8x96xf32> to vector<8x32xf32>
    %193 = arith.mulf %192, %181 : vector<8x32xf32>
    %194 = arith.addf %191, %193 : vector<8x32xf32>
    %195 = vector.extract_strided_slice %187 {offsets = [0, 32], sizes = [8, 32], strides = [1, 1]} : vector<8x96xf32> to vector<8x32xf32>
    %196 = arith.mulf %195, %151 : vector<8x32xf32>
    %197 = vector.extract_strided_slice %187 {offsets = [0, 0], sizes = [8, 32], strides = [1, 1]} : vector<8x96xf32> to vector<8x32xf32>
    %198 = arith.mulf %197, %189 : vector<8x32xf32>
    %199 = arith.addf %196, %198 : vector<8x32xf32>
    %200 = vector.extract_strided_slice %179 {offsets = [0, 64], sizes = [8, 32], strides = [1, 1]} : vector<8x96xf32> to vector<8x32xf32>
    %201 = math.tanh %194 : vector<8x32xf32>
    %202 = arith.mulf %200, %201 : vector<8x32xf32>
    %203 = vector.extract_strided_slice %187 {offsets = [0, 64], sizes = [8, 32], strides = [1, 1]} : vector<8x96xf32> to vector<8x32xf32>
    %204 = math.tanh %199 : vector<8x32xf32>
    %205 = arith.mulf %203, %204 : vector<8x32xf32>
    %c2_91 = arith.constant 2 : index
    %c0_92 = arith.constant 0 : index
    %c0_93 = arith.constant 0 : index
    %206 = vector.load %arg11[%c2_91, %c0_92, %c0_93] : memref<8x8x64xf32, #tpu.memory_space<vmem>>, vector<1x8x32xf32>
    %207 = vector.shape_cast %206 : vector<1x8x32xf32> to vector<8x32xf32>
    %208 = vector.shape_cast %202 : vector<8x32xf32> to vector<1x8x32xf32>
    tpu.vector_store %arg11[%c2_91, %c0_92, %c0_93], %208 {strides = array<i32>} : memref<8x8x64xf32, #tpu.memory_space<vmem>>, vector<1x8x32xf32>,
    %c5_94 = arith.constant 5 : index
    %c0_95 = arith.constant 0 : index
    %c32_96 = arith.constant 32 : index
    %209 = vector.load %arg11[%c5_94, %c0_95, %c32_96] : memref<8x8x64xf32, #tpu.memory_space<vmem>>, vector<1x8x32xf32>
    %210 = vector.shape_cast %209 : vector<1x8x32xf32> to vector<8x32xf32>
    %211 = vector.shape_cast %205 : vector<8x32xf32> to vector<1x8x32xf32>
    tpu.vector_store %arg11[%c5_94, %c0_95, %c32_96], %211 {strides = array<i32>} : memref<8x8x64xf32, #tpu.memory_space<vmem>>, vector<1x8x32xf32>,
    %212 = tpu.concatenate %202, %205 in 1 : vector<8x32xf32>, vector<8x32xf32> -> vector<8x64xf32>
    %cst_97 = arith.constant dense<0.000000e+00> : vector<8x256xf32>
    %213 = tpu.matmul %212, %66, %cst_97 {dimension_numbers = #tpu.dot_dimension_numbers<[1], [0], [0], [1], [0, 0, 1, 1], [], []>} : vector<8x64xf32>, vector<64x256xf32>, vector<8x256xf32> -> vector<8x256xf32>
    %c3_98 = arith.constant 3 : index
    %c0_99 = arith.constant 0 : index
    %c0_100 = arith.constant 0 : index
    %214 = vector.load %arg10[%c3_98, %c0_99, %c0_100] : memref<8x8x256xf32, #tpu.memory_space<vmem>>, vector<1x8x128xf32>
    %215 = vector.shape_cast %214 : vector<1x8x128xf32> to vector<8x128xf32>
    %216 = vector.extract_strided_slice %213 {offsets = [0, 0], sizes = [8, 128], strides = [1, 1]} : vector<8x256xf32> to vector<8x128xf32>
    %217 = arith.addf %215, %216 : vector<8x128xf32>
    %c4_101 = arith.constant 4 : index
    %c0_102 = arith.constant 0 : index
    %c128_103 = arith.constant 128 : index
    %218 = vector.load %arg10[%c4_101, %c0_102, %c128_103] : memref<8x8x256xf32, #tpu.memory_space<vmem>>, vector<1x8x128xf32>
    %219 = vector.shape_cast %218 : vector<1x8x128xf32> to vector<8x128xf32>
    %220 = vector.extract_strided_slice %213 {offsets = [0, 128], sizes = [8, 128], strides = [1, 1]} : vector<8x256xf32> to vector<8x128xf32>
    %221 = arith.addf %219, %220 : vector<8x128xf32>
    %222 = vector.extract_strided_slice %217 {offsets = [0, 0], sizes = [8, 96], strides = [1, 1]} : vector<8x128xf32> to vector<8x96xf32>
    %223 = arith.negf %222 : vector<8x96xf32>
    %224 = math.exp %223 : vector<8x96xf32>
    %cst_104 = arith.constant 1.000000e+00 : f32
    %225 = vector.broadcast %cst_104 : f32 to vector<8x96xf32>
    %226 = arith.addf %225, %224 : vector<8x96xf32>
    %227 = arith.divf %225, %226 : vector<8x96xf32>
    %228 = vector.extract_strided_slice %217 {offsets = [0, 96], sizes = [8, 32], strides = [1, 1]} : vector<8x128xf32> to vector<8x32xf32>
    %229 = math.tanh %228 : vector<8x32xf32>
    %230 = vector.extract_strided_slice %221 {offsets = [0, 0], sizes = [8, 96], strides = [1, 1]} : vector<8x128xf32> to vector<8x96xf32>
    %231 = arith.negf %230 : vector<8x96xf32>
    %232 = math.exp %231 : vector<8x96xf32>
    %cst_105 = arith.constant 1.000000e+00 : f32
    %233 = vector.broadcast %cst_105 : f32 to vector<8x96xf32>
    %234 = arith.addf %233, %232 : vector<8x96xf32>
    %235 = arith.divf %233, %234 : vector<8x96xf32>
    %236 = vector.extract_strided_slice %221 {offsets = [0, 96], sizes = [8, 32], strides = [1, 1]} : vector<8x128xf32> to vector<8x32xf32>
    %237 = math.tanh %236 : vector<8x32xf32>
    %238 = vector.extract_strided_slice %227 {offsets = [0, 32], sizes = [8, 32], strides = [1, 1]} : vector<8x96xf32> to vector<8x32xf32>
    %239 = arith.mulf %238, %194 : vector<8x32xf32>
    %240 = vector.extract_strided_slice %227 {offsets = [0, 0], sizes = [8, 32], strides = [1, 1]} : vector<8x96xf32> to vector<8x32xf32>
    %241 = arith.mulf %240, %229 : vector<8x32xf32>
    %242 = arith.addf %239, %241 : vector<8x32xf32>
    %243 = vector.extract_strided_slice %235 {offsets = [0, 32], sizes = [8, 32], strides = [1, 1]} : vector<8x96xf32> to vector<8x32xf32>
    %244 = arith.mulf %243, %199 : vector<8x32xf32>
    %245 = vector.extract_strided_slice %235 {offsets = [0, 0], sizes = [8, 32], strides = [1, 1]} : vector<8x96xf32> to vector<8x32xf32>
    %246 = arith.mulf %245, %237 : vector<8x32xf32>
    %247 = arith.addf %244, %246 : vector<8x32xf32>
    %248 = vector.extract_strided_slice %227 {offsets = [0, 64], sizes = [8, 32], strides = [1, 1]} : vector<8x96xf32> to vector<8x32xf32>
    %249 = math.tanh %242 : vector<8x32xf32>
    %250 = arith.mulf %248, %249 : vector<8x32xf32>
    %251 = vector.extract_strided_slice %235 {offsets = [0, 64], sizes = [8, 32], strides = [1, 1]} : vector<8x96xf32> to vector<8x32xf32>
    %252 = math.tanh %247 : vector<8x32xf32>
    %253 = arith.mulf %251, %252 : vector<8x32xf32>
    %c3_106 = arith.constant 3 : index
    %c0_107 = arith.constant 0 : index
    %c0_108 = arith.constant 0 : index
    %254 = vector.load %arg11[%c3_106, %c0_107, %c0_108] : memref<8x8x64xf32, #tpu.memory_space<vmem>>, vector<1x8x32xf32>
    %255 = vector.shape_cast %254 : vector<1x8x32xf32> to vector<8x32xf32>
    %256 = vector.shape_cast %250 : vector<8x32xf32> to vector<1x8x32xf32>
    tpu.vector_store %arg11[%c3_106, %c0_107, %c0_108], %256 {strides = array<i32>} : memref<8x8x64xf32, #tpu.memory_space<vmem>>, vector<1x8x32xf32>,
    %c4_109 = arith.constant 4 : index
    %c0_110 = arith.constant 0 : index
    %c32_111 = arith.constant 32 : index
    %257 = vector.load %arg11[%c4_109, %c0_110, %c32_111] : memref<8x8x64xf32, #tpu.memory_space<vmem>>, vector<1x8x32xf32>
    %258 = vector.shape_cast %257 : vector<1x8x32xf32> to vector<8x32xf32>
    %259 = vector.shape_cast %253 : vector<8x32xf32> to vector<1x8x32xf32>
    tpu.vector_store %arg11[%c4_109, %c0_110, %c32_111], %259 {strides = array<i32>} : memref<8x8x64xf32, #tpu.memory_space<vmem>>, vector<1x8x32xf32>,
    %260 = tpu.concatenate %250, %253 in 1 : vector<8x32xf32>, vector<8x32xf32> -> vector<8x64xf32>
    %cst_112 = arith.constant dense<0.000000e+00> : vector<8x256xf32>
    %261 = tpu.matmul %260, %66, %cst_112 {dimension_numbers = #tpu.dot_dimension_numbers<[1], [0], [0], [1], [0, 0, 1, 1], [], []>} : vector<8x64xf32>, vector<64x256xf32>, vector<8x256xf32> -> vector<8x256xf32>
    %c4_113 = arith.constant 4 : index
    %c0_114 = arith.constant 0 : index
    %c0_115 = arith.constant 0 : index
    %262 = vector.load %arg10[%c4_113, %c0_114, %c0_115] : memref<8x8x256xf32, #tpu.memory_space<vmem>>, vector<1x8x128xf32>
    %263 = vector.shape_cast %262 : vector<1x8x128xf32> to vector<8x128xf32>
    %264 = vector.extract_strided_slice %261 {offsets = [0, 0], sizes = [8, 128], strides = [1, 1]} : vector<8x256xf32> to vector<8x128xf32>
    %265 = arith.addf %263, %264 : vector<8x128xf32>
    %c3_116 = arith.constant 3 : index
    %c0_117 = arith.constant 0 : index
    %c128_118 = arith.constant 128 : index
    %266 = vector.load %arg10[%c3_116, %c0_117, %c128_118] : memref<8x8x256xf32, #tpu.memory_space<vmem>>, vector<1x8x128xf32>
    %267 = vector.shape_cast %266 : vector<1x8x128xf32> to vector<8x128xf32>
    %268 = vector.extract_strided_slice %261 {offsets = [0, 128], sizes = [8, 128], strides = [1, 1]} : vector<8x256xf32> to vector<8x128xf32>
    %269 = arith.addf %267, %268 : vector<8x128xf32>
    %270 = vector.extract_strided_slice %265 {offsets = [0, 0], sizes = [8, 96], strides = [1, 1]} : vector<8x128xf32> to vector<8x96xf32>
    %271 = arith.negf %270 : vector<8x96xf32>
    %272 = math.exp %271 : vector<8x96xf32>
    %cst_119 = arith.constant 1.000000e+00 : f32
    %273 = vector.broadcast %cst_119 : f32 to vector<8x96xf32>
    %274 = arith.addf %273, %272 : vector<8x96xf32>
    %275 = arith.divf %273, %274 : vector<8x96xf32>
    %276 = vector.extract_strided_slice %265 {offsets = [0, 96], sizes = [8, 32], strides = [1, 1]} : vector<8x128xf32> to vector<8x32xf32>
    %277 = math.tanh %276 : vector<8x32xf32>
    %278 = vector.extract_strided_slice %269 {offsets = [0, 0], sizes = [8, 96], strides = [1, 1]} : vector<8x128xf32> to vector<8x96xf32>
    %279 = arith.negf %278 : vector<8x96xf32>
    %280 = math.exp %279 : vector<8x96xf32>
    %cst_120 = arith.constant 1.000000e+00 : f32
    %281 = vector.broadcast %cst_120 : f32 to vector<8x96xf32>
    %282 = arith.addf %281, %280 : vector<8x96xf32>
    %283 = arith.divf %281, %282 : vector<8x96xf32>
    %284 = vector.extract_strided_slice %269 {offsets = [0, 96], sizes = [8, 32], strides = [1, 1]} : vector<8x128xf32> to vector<8x32xf32>
    %285 = math.tanh %284 : vector<8x32xf32>
    %286 = vector.extract_strided_slice %275 {offsets = [0, 32], sizes = [8, 32], strides = [1, 1]} : vector<8x96xf32> to vector<8x32xf32>
    %287 = arith.mulf %286, %242 : vector<8x32xf32>
    %288 = vector.extract_strided_slice %275 {offsets = [0, 0], sizes = [8, 32], strides = [1, 1]} : vector<8x96xf32> to vector<8x32xf32>
    %289 = arith.mulf %288, %277 : vector<8x32xf32>
    %290 = arith.addf %287, %289 : vector<8x32xf32>
    %291 = vector.extract_strided_slice %283 {offsets = [0, 32], sizes = [8, 32], strides = [1, 1]} : vector<8x96xf32> to vector<8x32xf32>
    %292 = arith.mulf %291, %247 : vector<8x32xf32>
    %293 = vector.extract_strided_slice %283 {offsets = [0, 0], sizes = [8, 32], strides = [1, 1]} : vector<8x96xf32> to vector<8x32xf32>
    %294 = arith.mulf %293, %285 : vector<8x32xf32>
    %295 = arith.addf %292, %294 : vector<8x32xf32>
    %296 = vector.extract_strided_slice %275 {offsets = [0, 64], sizes = [8, 32], strides = [1, 1]} : vector<8x96xf32> to vector<8x32xf32>
    %297 = math.tanh %290 : vector<8x32xf32>
    %298 = arith.mulf %296, %297 : vector<8x32xf32>
    %299 = vector.extract_strided_slice %283 {offsets = [0, 64], sizes = [8, 32], strides = [1, 1]} : vector<8x96xf32> to vector<8x32xf32>
    %300 = math.tanh %295 : vector<8x32xf32>
    %301 = arith.mulf %299, %300 : vector<8x32xf32>
    %c4_121 = arith.constant 4 : index
    %c0_122 = arith.constant 0 : index
    %c0_123 = arith.constant 0 : index
    %302 = vector.load %arg11[%c4_121, %c0_122, %c0_123] : memref<8x8x64xf32, #tpu.memory_space<vmem>>, vector<1x8x32xf32>
    %303 = vector.shape_cast %302 : vector<1x8x32xf32> to vector<8x32xf32>
    %304 = vector.shape_cast %298 : vector<8x32xf32> to vector<1x8x32xf32>
    tpu.vector_store %arg11[%c4_121, %c0_122, %c0_123], %304 {strides = array<i32>} : memref<8x8x64xf32, #tpu.memory_space<vmem>>, vector<1x8x32xf32>,
    %c3_124 = arith.constant 3 : index
    %c0_125 = arith.constant 0 : index
    %c32_126 = arith.constant 32 : index
    %305 = vector.load %arg11[%c3_124, %c0_125, %c32_126] : memref<8x8x64xf32, #tpu.memory_space<vmem>>, vector<1x8x32xf32>
    %306 = vector.shape_cast %305 : vector<1x8x32xf32> to vector<8x32xf32>
    %307 = vector.shape_cast %301 : vector<8x32xf32> to vector<1x8x32xf32>
    tpu.vector_store %arg11[%c3_124, %c0_125, %c32_126], %307 {strides = array<i32>} : memref<8x8x64xf32, #tpu.memory_space<vmem>>, vector<1x8x32xf32>,
    %308 = tpu.concatenate %298, %301 in 1 : vector<8x32xf32>, vector<8x32xf32> -> vector<8x64xf32>
    %cst_127 = arith.constant dense<0.000000e+00> : vector<8x256xf32>
    %309 = tpu.matmul %308, %66, %cst_127 {dimension_numbers = #tpu.dot_dimension_numbers<[1], [0], [0], [1], [0, 0, 1, 1], [], []>} : vector<8x64xf32>, vector<64x256xf32>, vector<8x256xf32> -> vector<8x256xf32>
    %c5_128 = arith.constant 5 : index
    %c0_129 = arith.constant 0 : index
    %c0_130 = arith.constant 0 : index
    %310 = vector.load %arg10[%c5_128, %c0_129, %c0_130] : memref<8x8x256xf32, #tpu.memory_space<vmem>>, vector<1x8x128xf32>
    %311 = vector.shape_cast %310 : vector<1x8x128xf32> to vector<8x128xf32>
    %312 = vector.extract_strided_slice %309 {offsets = [0, 0], sizes = [8, 128], strides = [1, 1]} : vector<8x256xf32> to vector<8x128xf32>
    %313 = arith.addf %311, %312 : vector<8x128xf32>
    %c2_131 = arith.constant 2 : index
    %c0_132 = arith.constant 0 : index
    %c128_133 = arith.constant 128 : index
    %314 = vector.load %arg10[%c2_131, %c0_132, %c128_133] : memref<8x8x256xf32, #tpu.memory_space<vmem>>, vector<1x8x128xf32>
    %315 = vector.shape_cast %314 : vector<1x8x128xf32> to vector<8x128xf32>
    %316 = vector.extract_strided_slice %309 {offsets = [0, 128], sizes = [8, 128], strides = [1, 1]} : vector<8x256xf32> to vector<8x128xf32>
    %317 = arith.addf %315, %316 : vector<8x128xf32>
    %318 = vector.extract_strided_slice %313 {offsets = [0, 0], sizes = [8, 96], strides = [1, 1]} : vector<8x128xf32> to vector<8x96xf32>
    %319 = arith.negf %318 : vector<8x96xf32>
    %320 = math.exp %319 : vector<8x96xf32>
    %cst_134 = arith.constant 1.000000e+00 : f32
    %321 = vector.broadcast %cst_134 : f32 to vector<8x96xf32>
    %322 = arith.addf %321, %320 : vector<8x96xf32>
    %323 = arith.divf %321, %322 : vector<8x96xf32>
    %324 = vector.extract_strided_slice %313 {offsets = [0, 96], sizes = [8, 32], strides = [1, 1]} : vector<8x128xf32> to vector<8x32xf32>
    %325 = math.tanh %324 : vector<8x32xf32>
    %326 = vector.extract_strided_slice %317 {offsets = [0, 0], sizes = [8, 96], strides = [1, 1]} : vector<8x128xf32> to vector<8x96xf32>
    %327 = arith.negf %326 : vector<8x96xf32>
    %328 = math.exp %327 : vector<8x96xf32>
    %cst_135 = arith.constant 1.000000e+00 : f32
    %329 = vector.broadcast %cst_135 : f32 to vector<8x96xf32>
    %330 = arith.addf %329, %328 : vector<8x96xf32>
    %331 = arith.divf %329, %330 : vector<8x96xf32>
    %332 = vector.extract_strided_slice %317 {offsets = [0, 96], sizes = [8, 32], strides = [1, 1]} : vector<8x128xf32> to vector<8x32xf32>
    %333 = math.tanh %332 : vector<8x32xf32>
    %334 = vector.extract_strided_slice %323 {offsets = [0, 32], sizes = [8, 32], strides = [1, 1]} : vector<8x96xf32> to vector<8x32xf32>
    %335 = arith.mulf %334, %290 : vector<8x32xf32>
    %336 = vector.extract_strided_slice %323 {offsets = [0, 0], sizes = [8, 32], strides = [1, 1]} : vector<8x96xf32> to vector<8x32xf32>
    %337 = arith.mulf %336, %325 : vector<8x32xf32>
    %338 = arith.addf %335, %337 : vector<8x32xf32>
    %339 = vector.extract_strided_slice %331 {offsets = [0, 32], sizes = [8, 32], strides = [1, 1]} : vector<8x96xf32> to vector<8x32xf32>
    %340 = arith.mulf %339, %295 : vector<8x32xf32>
    %341 = vector.extract_strided_slice %331 {offsets = [0, 0], sizes = [8, 32], strides = [1, 1]} : vector<8x96xf32> to vector<8x32xf32>
    %342 = arith.mulf %341, %333 : vector<8x32xf32>
    %343 = arith.addf %340, %342 : vector<8x32xf32>
    %344 = vector.extract_strided_slice %323 {offsets = [0, 64], sizes = [8, 32], strides = [1, 1]} : vector<8x96xf32> to vector<8x32xf32>
    %345 = math.tanh %338 : vector<8x32xf32>
    %346 = arith.mulf %344, %345 : vector<8x32xf32>
    %347 = vector.extract_strided_slice %331 {offsets = [0, 64], sizes = [8, 32], strides = [1, 1]} : vector<8x96xf32> to vector<8x32xf32>
    %348 = math.tanh %343 : vector<8x32xf32>
    %349 = arith.mulf %347, %348 : vector<8x32xf32>
    %c5_136 = arith.constant 5 : index
    %c0_137 = arith.constant 0 : index
    %c0_138 = arith.constant 0 : index
    %350 = vector.load %arg11[%c5_136, %c0_137, %c0_138] : memref<8x8x64xf32, #tpu.memory_space<vmem>>, vector<1x8x32xf32>
    %351 = vector.shape_cast %350 : vector<1x8x32xf32> to vector<8x32xf32>
    %352 = vector.shape_cast %346 : vector<8x32xf32> to vector<1x8x32xf32>
    tpu.vector_store %arg11[%c5_136, %c0_137, %c0_138], %352 {strides = array<i32>} : memref<8x8x64xf32, #tpu.memory_space<vmem>>, vector<1x8x32xf32>,
    %c2_139 = arith.constant 2 : index
    %c0_140 = arith.constant 0 : index
    %c32_141 = arith.constant 32 : index
    %353 = vector.load %arg11[%c2_139, %c0_140, %c32_141] : memref<8x8x64xf32, #tpu.memory_space<vmem>>, vector<1x8x32xf32>
    %354 = vector.shape_cast %353 : vector<1x8x32xf32> to vector<8x32xf32>
    %355 = vector.shape_cast %349 : vector<8x32xf32> to vector<1x8x32xf32>
    tpu.vector_store %arg11[%c2_139, %c0_140, %c32_141], %355 {strides = array<i32>} : memref<8x8x64xf32, #tpu.memory_space<vmem>>, vector<1x8x32xf32>,
    %356 = tpu.concatenate %346, %349 in 1 : vector<8x32xf32>, vector<8x32xf32> -> vector<8x64xf32>
    %cst_142 = arith.constant dense<0.000000e+00> : vector<8x256xf32>
    %357 = tpu.matmul %356, %66, %cst_142 {dimension_numbers = #tpu.dot_dimension_numbers<[1], [0], [0], [1], [0, 0, 1, 1], [], []>} : vector<8x64xf32>, vector<64x256xf32>, vector<8x256xf32> -> vector<8x256xf32>
    %c6_143 = arith.constant 6 : index
    %c0_144 = arith.constant 0 : index
    %c0_145 = arith.constant 0 : index
    %358 = vector.load %arg10[%c6_143, %c0_144, %c0_145] : memref<8x8x256xf32, #tpu.memory_space<vmem>>, vector<1x8x128xf32>
    %359 = vector.shape_cast %358 : vector<1x8x128xf32> to vector<8x128xf32>
    %360 = vector.extract_strided_slice %357 {offsets = [0, 0], sizes = [8, 128], strides = [1, 1]} : vector<8x256xf32> to vector<8x128xf32>
    %361 = arith.addf %359, %360 : vector<8x128xf32>
    %c1_146 = arith.constant 1 : index
    %c0_147 = arith.constant 0 : index
    %c128_148 = arith.constant 128 : index
    %362 = vector.load %arg10[%c1_146, %c0_147, %c128_148] : memref<8x8x256xf32, #tpu.memory_space<vmem>>, vector<1x8x128xf32>
    %363 = vector.shape_cast %362 : vector<1x8x128xf32> to vector<8x128xf32>
    %364 = vector.extract_strided_slice %357 {offsets = [0, 128], sizes = [8, 128], strides = [1, 1]} : vector<8x256xf32> to vector<8x128xf32>
    %365 = arith.addf %363, %364 : vector<8x128xf32>
    %366 = vector.extract_strided_slice %361 {offsets = [0, 0], sizes = [8, 96], strides = [1, 1]} : vector<8x128xf32> to vector<8x96xf32>
    %367 = arith.negf %366 : vector<8x96xf32>
    %368 = math.exp %367 : vector<8x96xf32>
    %cst_149 = arith.constant 1.000000e+00 : f32
    %369 = vector.broadcast %cst_149 : f32 to vector<8x96xf32>
    %370 = arith.addf %369, %368 : vector<8x96xf32>
    %371 = arith.divf %369, %370 : vector<8x96xf32>
    %372 = vector.extract_strided_slice %361 {offsets = [0, 96], sizes = [8, 32], strides = [1, 1]} : vector<8x128xf32> to vector<8x32xf32>
    %373 = math.tanh %372 : vector<8x32xf32>
    %374 = vector.extract_strided_slice %365 {offsets = [0, 0], sizes = [8, 96], strides = [1, 1]} : vector<8x128xf32> to vector<8x96xf32>
    %375 = arith.negf %374 : vector<8x96xf32>
    %376 = math.exp %375 : vector<8x96xf32>
    %cst_150 = arith.constant 1.000000e+00 : f32
    %377 = vector.broadcast %cst_150 : f32 to vector<8x96xf32>
    %378 = arith.addf %377, %376 : vector<8x96xf32>
    %379 = arith.divf %377, %378 : vector<8x96xf32>
    %380 = vector.extract_strided_slice %365 {offsets = [0, 96], sizes = [8, 32], strides = [1, 1]} : vector<8x128xf32> to vector<8x32xf32>
    %381 = math.tanh %380 : vector<8x32xf32>
    %382 = vector.extract_strided_slice %371 {offsets = [0, 32], sizes = [8, 32], strides = [1, 1]} : vector<8x96xf32> to vector<8x32xf32>
    %383 = arith.mulf %382, %338 : vector<8x32xf32>
    %384 = vector.extract_strided_slice %371 {offsets = [0, 0], sizes = [8, 32], strides = [1, 1]} : vector<8x96xf32> to vector<8x32xf32>
    %385 = arith.mulf %384, %373 : vector<8x32xf32>
    %386 = arith.addf %383, %385 : vector<8x32xf32>
    %387 = vector.extract_strided_slice %379 {offsets = [0, 32], sizes = [8, 32], strides = [1, 1]} : vector<8x96xf32> to vector<8x32xf32>
    %388 = arith.mulf %387, %343 : vector<8x32xf32>
    %389 = vector.extract_strided_slice %379 {offsets = [0, 0], sizes = [8, 32], strides = [1, 1]} : vector<8x96xf32> to vector<8x32xf32>
    %390 = arith.mulf %389, %381 : vector<8x32xf32>
    %391 = arith.addf %388, %390 : vector<8x32xf32>
    %392 = vector.extract_strided_slice %371 {offsets = [0, 64], sizes = [8, 32], strides = [1, 1]} : vector<8x96xf32> to vector<8x32xf32>
    %393 = math.tanh %386 : vector<8x32xf32>
    %394 = arith.mulf %392, %393 : vector<8x32xf32>
    %395 = vector.extract_strided_slice %379 {offsets = [0, 64], sizes = [8, 32], strides = [1, 1]} : vector<8x96xf32> to vector<8x32xf32>
    %396 = math.tanh %391 : vector<8x32xf32>
    %397 = arith.mulf %395, %396 : vector<8x32xf32>
    %c6_151 = arith.constant 6 : index
    %c0_152 = arith.constant 0 : index
    %c0_153 = arith.constant 0 : index
    %398 = vector.load %arg11[%c6_151, %c0_152, %c0_153] : memref<8x8x64xf32, #tpu.memory_space<vmem>>, vector<1x8x32xf32>
    %399 = vector.shape_cast %398 : vector<1x8x32xf32> to vector<8x32xf32>
    %400 = vector.shape_cast %394 : vector<8x32xf32> to vector<1x8x32xf32>
    tpu.vector_store %arg11[%c6_151, %c0_152, %c0_153], %400 {strides = array<i32>} : memref<8x8x64xf32, #tpu.memory_space<vmem>>, vector<1x8x32xf32>,
    %c1_154 = arith.constant 1 : index
    %c0_155 = arith.constant 0 : index
    %c32_156 = arith.constant 32 : index
    %401 = vector.load %arg11[%c1_154, %c0_155, %c32_156] : memref<8x8x64xf32, #tpu.memory_space<vmem>>, vector<1x8x32xf32>
    %402 = vector.shape_cast %401 : vector<1x8x32xf32> to vector<8x32xf32>
    %403 = vector.shape_cast %397 : vector<8x32xf32> to vector<1x8x32xf32>
    tpu.vector_store %arg11[%c1_154, %c0_155, %c32_156], %403 {strides = array<i32>} : memref<8x8x64xf32, #tpu.memory_space<vmem>>, vector<1x8x32xf32>,
    %404 = tpu.concatenate %394, %397 in 1 : vector<8x32xf32>, vector<8x32xf32> -> vector<8x64xf32>
    %cst_157 = arith.constant dense<0.000000e+00> : vector<8x256xf32>
    %405 = tpu.matmul %404, %66, %cst_157 {dimension_numbers = #tpu.dot_dimension_numbers<[1], [0], [0], [1], [0, 0, 1, 1], [], []>} : vector<8x64xf32>, vector<64x256xf32>, vector<8x256xf32> -> vector<8x256xf32>
    %c7_158 = arith.constant 7 : index
    %c0_159 = arith.constant 0 : index
    %c0_160 = arith.constant 0 : index
    %406 = vector.load %arg10[%c7_158, %c0_159, %c0_160] : memref<8x8x256xf32, #tpu.memory_space<vmem>>, vector<1x8x128xf32>
    %407 = vector.shape_cast %406 : vector<1x8x128xf32> to vector<8x128xf32>
    %408 = vector.extract_strided_slice %405 {offsets = [0, 0], sizes = [8, 128], strides = [1, 1]} : vector<8x256xf32> to vector<8x128xf32>
    %409 = arith.addf %407, %408 : vector<8x128xf32>
    %c0_161 = arith.constant 0 : index
    %c0_162 = arith.constant 0 : index
    %c128_163 = arith.constant 128 : index
    %410 = vector.load %arg10[%c0_161, %c0_162, %c128_163] : memref<8x8x256xf32, #tpu.memory_space<vmem>>, vector<1x8x128xf32>
    %411 = vector.shape_cast %410 : vector<1x8x128xf32> to vector<8x128xf32>
    %412 = vector.extract_strided_slice %405 {offsets = [0, 128], sizes = [8, 128], strides = [1, 1]} : vector<8x256xf32> to vector<8x128xf32>
    %413 = arith.addf %411, %412 : vector<8x128xf32>
    %414 = vector.extract_strided_slice %409 {offsets = [0, 0], sizes = [8, 96], strides = [1, 1]} : vector<8x128xf32> to vector<8x96xf32>
    %415 = arith.negf %414 : vector<8x96xf32>
    %416 = math.exp %415 : vector<8x96xf32>
    %cst_164 = arith.constant 1.000000e+00 : f32
    %417 = vector.broadcast %cst_164 : f32 to vector<8x96xf32>
    %418 = arith.addf %417, %416 : vector<8x96xf32>
    %419 = arith.divf %417, %418 : vector<8x96xf32>
    %420 = vector.extract_strided_slice %409 {offsets = [0, 96], sizes = [8, 32], strides = [1, 1]} : vector<8x128xf32> to vector<8x32xf32>
    %421 = math.tanh %420 : vector<8x32xf32>
    %422 = vector.extract_strided_slice %413 {offsets = [0, 0], sizes = [8, 96], strides = [1, 1]} : vector<8x128xf32> to vector<8x96xf32>
    %423 = arith.negf %422 : vector<8x96xf32>
    %424 = math.exp %423 : vector<8x96xf32>
    %cst_165 = arith.constant 1.000000e+00 : f32
    %425 = vector.broadcast %cst_165 : f32 to vector<8x96xf32>
    %426 = arith.addf %425, %424 : vector<8x96xf32>
    %427 = arith.divf %425, %426 : vector<8x96xf32>
    %428 = vector.extract_strided_slice %413 {offsets = [0, 96], sizes = [8, 32], strides = [1, 1]} : vector<8x128xf32> to vector<8x32xf32>
    %429 = math.tanh %428 : vector<8x32xf32>
    %430 = vector.extract_strided_slice %419 {offsets = [0, 32], sizes = [8, 32], strides = [1, 1]} : vector<8x96xf32> to vector<8x32xf32>
    %431 = arith.mulf %430, %386 : vector<8x32xf32>
    %432 = vector.extract_strided_slice %419 {offsets = [0, 0], sizes = [8, 32], strides = [1, 1]} : vector<8x96xf32> to vector<8x32xf32>
    %433 = arith.mulf %432, %421 : vector<8x32xf32>
    %434 = arith.addf %431, %433 : vector<8x32xf32>
    %435 = vector.extract_strided_slice %427 {offsets = [0, 32], sizes = [8, 32], strides = [1, 1]} : vector<8x96xf32> to vector<8x32xf32>
    %436 = arith.mulf %435, %391 : vector<8x32xf32>
    %437 = vector.extract_strided_slice %427 {offsets = [0, 0], sizes = [8, 32], strides = [1, 1]} : vector<8x96xf32> to vector<8x32xf32>
    %438 = arith.mulf %437, %429 : vector<8x32xf32>
    %439 = arith.addf %436, %438 : vector<8x32xf32>
    %440 = vector.extract_strided_slice %419 {offsets = [0, 64], sizes = [8, 32], strides = [1, 1]} : vector<8x96xf32> to vector<8x32xf32>
    %441 = math.tanh %434 : vector<8x32xf32>
    %442 = arith.mulf %440, %441 : vector<8x32xf32>
    %443 = vector.extract_strided_slice %427 {offsets = [0, 64], sizes = [8, 32], strides = [1, 1]} : vector<8x96xf32> to vector<8x32xf32>
    %444 = math.tanh %439 : vector<8x32xf32>
    %445 = arith.mulf %443, %444 : vector<8x32xf32>
    %c7_166 = arith.constant 7 : index
    %c0_167 = arith.constant 0 : index
    %c0_168 = arith.constant 0 : index
    %446 = vector.load %arg11[%c7_166, %c0_167, %c0_168] : memref<8x8x64xf32, #tpu.memory_space<vmem>>, vector<1x8x32xf32>
    %447 = vector.shape_cast %446 : vector<1x8x32xf32> to vector<8x32xf32>
    %448 = vector.shape_cast %442 : vector<8x32xf32> to vector<1x8x32xf32>
    tpu.vector_store %arg11[%c7_166, %c0_167, %c0_168], %448 {strides = array<i32>} : memref<8x8x64xf32, #tpu.memory_space<vmem>>, vector<1x8x32xf32>,
    %c0_169 = arith.constant 0 : index
    %c0_170 = arith.constant 0 : index
    %c32_171 = arith.constant 32 : index
    %449 = vector.load %arg11[%c0_169, %c0_170, %c32_171] : memref<8x8x64xf32, #tpu.memory_space<vmem>>, vector<1x8x32xf32>
    %450 = vector.shape_cast %449 : vector<1x8x32xf32> to vector<8x32xf32>
    %451 = vector.shape_cast %445 : vector<8x32xf32> to vector<1x8x32xf32>
    tpu.vector_store %arg11[%c0_169, %c0_170, %c32_171], %451 {strides = array<i32>} : memref<8x8x64xf32, #tpu.memory_space<vmem>>, vector<1x8x32xf32>,
    %c0_172 = arith.constant 0 : index
    %c0_173 = arith.constant 0 : index
    %452 = vector.load %arg5[%c0_172, %c0_173] : memref<64x128xf32, #tpu.memory_space<vmem>>, vector<64x128xf32>
    %c0_174 = arith.constant 0 : index
    %c0_175 = arith.constant 0 : index
    %453 = vector.load %arg6[%c0_174, %c0_175] : memref<1x128xf32, #tpu.memory_space<vmem>>, vector<1x128xf32>
    %c0_176 = arith.constant 0 : index
    %c0_177 = arith.constant 0 : index
    %454 = vector.load %arg7[%c0_176, %c0_177] : memref<128x32xf32, #tpu.memory_space<vmem>>, vector<128x32xf32>
    %c0_178 = arith.constant 0 : index
    %c0_179 = arith.constant 0 : index
    %455 = vector.load %arg8[%c0_178, %c0_179] : memref<1x32xf32, #tpu.memory_space<vmem>>, vector<1x32xf32>
    %c0_180 = arith.constant 0 : index
    %c0_181 = arith.constant 0 : index
    %c0_182 = arith.constant 0 : index
    %456 = vector.load %arg11[%c0_180, %c0_181, %c0_182] : memref<8x8x64xf32, #tpu.memory_space<vmem>>, vector<1x8x64xf32>
    %457 = vector.shape_cast %456 : vector<1x8x64xf32> to vector<8x64xf32>
    %cst_183 = arith.constant dense<0.000000e+00> : vector<8x128xf32>
    %458 = tpu.matmul %457, %452, %cst_183 {dimension_numbers = #tpu.dot_dimension_numbers<[1], [0], [0], [1], [0, 0, 1, 1], [], []>} : vector<8x64xf32>, vector<64x128xf32>, vector<8x128xf32> -> vector<8x128xf32>
    %459 = vector.broadcast %453 : vector<1x128xf32> to vector<8x128xf32>
    %460 = arith.addf %458, %459 : vector<8x128xf32>
    %cst_184 = arith.constant 0.000000e+00 : f32
    %461 = vector.broadcast %cst_184 : f32 to vector<8x128xf32>
    %462 = arith.maximumf %460, %461 : vector<8x128xf32>
    %cst_185 = arith.constant dense<0.000000e+00> : vector<8x32xf32>
    %463 = tpu.matmul %462, %454, %cst_185 {dimension_numbers = #tpu.dot_dimension_numbers<[1], [0], [0], [1], [0, 0, 1, 1], [], []>} : vector<8x128xf32>, vector<128x32xf32>, vector<8x32xf32> -> vector<8x32xf32>
    %464 = vector.broadcast %455 : vector<1x32xf32> to vector<8x32xf32>
    %465 = arith.addf %463, %464 : vector<8x32xf32>
    %cst_186 = arith.constant 5.000000e-01 : f32
    %466 = vector.broadcast %cst_186 : f32 to vector<8x32xf32>
    %467 = arith.mulf %466, %465 : vector<8x32xf32>
    %c0_187 = arith.constant 0 : index
    %c0_188 = arith.constant 0 : index
    %c0_189 = arith.constant 0 : index
    %468 = vector.load %arg1[%c0_187, %c0_188, %c0_189] : memref<8x8x32xf32, #tpu.memory_space<vmem>>, vector<1x8x32xf32>
    %469 = vector.shape_cast %468 : vector<1x8x32xf32> to vector<8x32xf32>
    %cst_190 = arith.constant 5.000000e-01 : f32
    %470 = vector.broadcast %cst_190 : f32 to vector<8x32xf32>
    %471 = arith.mulf %470, %469 : vector<8x32xf32>
    %472 = arith.addf %467, %471 : vector<8x32xf32>
    %c0_191 = arith.constant 0 : index
    %c0_192 = arith.constant 0 : index
    %c0_193 = arith.constant 0 : index
    %473 = vector.load %arg9[%c0_191, %c0_192, %c0_193] : memref<8x8x32xf32, #tpu.memory_space<vmem>>, vector<1x8x32xf32>
    %474 = vector.shape_cast %473 : vector<1x8x32xf32> to vector<8x32xf32>
    %475 = vector.shape_cast %472 : vector<8x32xf32> to vector<1x8x32xf32>
    tpu.vector_store %arg9[%c0_191, %c0_192, %c0_193], %475 {strides = array<i32>} : memref<8x8x32xf32, #tpu.memory_space<vmem>>, vector<1x8x32xf32>,
    %c1_194 = arith.constant 1 : index
    %c0_195 = arith.constant 0 : index
    %c0_196 = arith.constant 0 : index
    %476 = vector.load %arg11[%c1_194, %c0_195, %c0_196] : memref<8x8x64xf32, #tpu.memory_space<vmem>>, vector<1x8x64xf32>
    %477 = vector.shape_cast %476 : vector<1x8x64xf32> to vector<8x64xf32>
    %cst_197 = arith.constant dense<0.000000e+00> : vector<8x128xf32>
    %478 = tpu.matmul %477, %452, %cst_197 {dimension_numbers = #tpu.dot_dimension_numbers<[1], [0], [0], [1], [0, 0, 1, 1], [], []>} : vector<8x64xf32>, vector<64x128xf32>, vector<8x128xf32> -> vector<8x128xf32>
    %479 = vector.broadcast %453 : vector<1x128xf32> to vector<8x128xf32>
    %480 = arith.addf %478, %479 : vector<8x128xf32>
    %cst_198 = arith.constant 0.000000e+00 : f32
    %481 = vector.broadcast %cst_198 : f32 to vector<8x128xf32>
    %482 = arith.maximumf %480, %481 : vector<8x128xf32>
    %cst_199 = arith.constant dense<0.000000e+00> : vector<8x32xf32>
    %483 = tpu.matmul %482, %454, %cst_199 {dimension_numbers = #tpu.dot_dimension_numbers<[1], [0], [0], [1], [0, 0, 1, 1], [], []>} : vector<8x128xf32>, vector<128x32xf32>, vector<8x32xf32> -> vector<8x32xf32>
    %484 = vector.broadcast %455 : vector<1x32xf32> to vector<8x32xf32>
    %485 = arith.addf %483, %484 : vector<8x32xf32>
    %cst_200 = arith.constant 5.000000e-01 : f32
    %486 = vector.broadcast %cst_200 : f32 to vector<8x32xf32>
    %487 = arith.mulf %486, %485 : vector<8x32xf32>
    %c1_201 = arith.constant 1 : index
    %c0_202 = arith.constant 0 : index
    %c0_203 = arith.constant 0 : index
    %488 = vector.load %arg1[%c1_201, %c0_202, %c0_203] : memref<8x8x32xf32, #tpu.memory_space<vmem>>, vector<1x8x32xf32>
    %489 = vector.shape_cast %488 : vector<1x8x32xf32> to vector<8x32xf32>
    %cst_204 = arith.constant 5.000000e-01 : f32
    %490 = vector.broadcast %cst_204 : f32 to vector<8x32xf32>
    %491 = arith.mulf %490, %489 : vector<8x32xf32>
    %492 = arith.addf %487, %491 : vector<8x32xf32>
    %c1_205 = arith.constant 1 : index
    %c0_206 = arith.constant 0 : index
    %c0_207 = arith.constant 0 : index
    %493 = vector.load %arg9[%c1_205, %c0_206, %c0_207] : memref<8x8x32xf32, #tpu.memory_space<vmem>>, vector<1x8x32xf32>
    %494 = vector.shape_cast %493 : vector<1x8x32xf32> to vector<8x32xf32>
    %495 = vector.shape_cast %492 : vector<8x32xf32> to vector<1x8x32xf32>
    tpu.vector_store %arg9[%c1_205, %c0_206, %c0_207], %495 {strides = array<i32>} : memref<8x8x32xf32, #tpu.memory_space<vmem>>, vector<1x8x32xf32>,
    %c2_208 = arith.constant 2 : index
    %c0_209 = arith.constant 0 : index
    %c0_210 = arith.constant 0 : index
    %496 = vector.load %arg11[%c2_208, %c0_209, %c0_210] : memref<8x8x64xf32, #tpu.memory_space<vmem>>, vector<1x8x64xf32>
    %497 = vector.shape_cast %496 : vector<1x8x64xf32> to vector<8x64xf32>
    %cst_211 = arith.constant dense<0.000000e+00> : vector<8x128xf32>
    %498 = tpu.matmul %497, %452, %cst_211 {dimension_numbers = #tpu.dot_dimension_numbers<[1], [0], [0], [1], [0, 0, 1, 1], [], []>} : vector<8x64xf32>, vector<64x128xf32>, vector<8x128xf32> -> vector<8x128xf32>
    %499 = vector.broadcast %453 : vector<1x128xf32> to vector<8x128xf32>
    %500 = arith.addf %498, %499 : vector<8x128xf32>
    %cst_212 = arith.constant 0.000000e+00 : f32
    %501 = vector.broadcast %cst_212 : f32 to vector<8x128xf32>
    %502 = arith.maximumf %500, %501 : vector<8x128xf32>
    %cst_213 = arith.constant dense<0.000000e+00> : vector<8x32xf32>
    %503 = tpu.matmul %502, %454, %cst_213 {dimension_numbers = #tpu.dot_dimension_numbers<[1], [0], [0], [1], [0, 0, 1, 1], [], []>} : vector<8x128xf32>, vector<128x32xf32>, vector<8x32xf32> -> vector<8x32xf32>
    %504 = vector.broadcast %455 : vector<1x32xf32> to vector<8x32xf32>
    %505 = arith.addf %503, %504 : vector<8x32xf32>
    %cst_214 = arith.constant 5.000000e-01 : f32
    %506 = vector.broadcast %cst_214 : f32 to vector<8x32xf32>
    %507 = arith.mulf %506, %505 : vector<8x32xf32>
    %c2_215 = arith.constant 2 : index
    %c0_216 = arith.constant 0 : index
    %c0_217 = arith.constant 0 : index
    %508 = vector.load %arg1[%c2_215, %c0_216, %c0_217] : memref<8x8x32xf32, #tpu.memory_space<vmem>>, vector<1x8x32xf32>
    %509 = vector.shape_cast %508 : vector<1x8x32xf32> to vector<8x32xf32>
    %cst_218 = arith.constant 5.000000e-01 : f32
    %510 = vector.broadcast %cst_218 : f32 to vector<8x32xf32>
    %511 = arith.mulf %510, %509 : vector<8x32xf32>
    %512 = arith.addf %507, %511 : vector<8x32xf32>
    %c2_219 = arith.constant 2 : index
    %c0_220 = arith.constant 0 : index
    %c0_221 = arith.constant 0 : index
    %513 = vector.load %arg9[%c2_219, %c0_220, %c0_221] : memref<8x8x32xf32, #tpu.memory_space<vmem>>, vector<1x8x32xf32>
    %514 = vector.shape_cast %513 : vector<1x8x32xf32> to vector<8x32xf32>
    %515 = vector.shape_cast %512 : vector<8x32xf32> to vector<1x8x32xf32>
    tpu.vector_store %arg9[%c2_219, %c0_220, %c0_221], %515 {strides = array<i32>} : memref<8x8x32xf32, #tpu.memory_space<vmem>>, vector<1x8x32xf32>,
    %c3_222 = arith.constant 3 : index
    %c0_223 = arith.constant 0 : index
    %c0_224 = arith.constant 0 : index
    %516 = vector.load %arg11[%c3_222, %c0_223, %c0_224] : memref<8x8x64xf32, #tpu.memory_space<vmem>>, vector<1x8x64xf32>
    %517 = vector.shape_cast %516 : vector<1x8x64xf32> to vector<8x64xf32>
    %cst_225 = arith.constant dense<0.000000e+00> : vector<8x128xf32>
    %518 = tpu.matmul %517, %452, %cst_225 {dimension_numbers = #tpu.dot_dimension_numbers<[1], [0], [0], [1], [0, 0, 1, 1], [], []>} : vector<8x64xf32>, vector<64x128xf32>, vector<8x128xf32> -> vector<8x128xf32>
    %519 = vector.broadcast %453 : vector<1x128xf32> to vector<8x128xf32>
    %520 = arith.addf %518, %519 : vector<8x128xf32>
    %cst_226 = arith.constant 0.000000e+00 : f32
    %521 = vector.broadcast %cst_226 : f32 to vector<8x128xf32>
    %522 = arith.maximumf %520, %521 : vector<8x128xf32>
    %cst_227 = arith.constant dense<0.000000e+00> : vector<8x32xf32>
    %523 = tpu.matmul %522, %454, %cst_227 {dimension_numbers = #tpu.dot_dimension_numbers<[1], [0], [0], [1], [0, 0, 1, 1], [], []>} : vector<8x128xf32>, vector<128x32xf32>, vector<8x32xf32> -> vector<8x32xf32>
    %524 = vector.broadcast %455 : vector<1x32xf32> to vector<8x32xf32>
    %525 = arith.addf %523, %524 : vector<8x32xf32>
    %cst_228 = arith.constant 5.000000e-01 : f32
    %526 = vector.broadcast %cst_228 : f32 to vector<8x32xf32>
    %527 = arith.mulf %526, %525 : vector<8x32xf32>
    %c3_229 = arith.constant 3 : index
    %c0_230 = arith.constant 0 : index
    %c0_231 = arith.constant 0 : index
    %528 = vector.load %arg1[%c3_229, %c0_230, %c0_231] : memref<8x8x32xf32, #tpu.memory_space<vmem>>, vector<1x8x32xf32>
    %529 = vector.shape_cast %528 : vector<1x8x32xf32> to vector<8x32xf32>
    %cst_232 = arith.constant 5.000000e-01 : f32
    %530 = vector.broadcast %cst_232 : f32 to vector<8x32xf32>
    %531 = arith.mulf %530, %529 : vector<8x32xf32>
    %532 = arith.addf %527, %531 : vector<8x32xf32>
    %c3_233 = arith.constant 3 : index
    %c0_234 = arith.constant 0 : index
    %c0_235 = arith.constant 0 : index
    %533 = vector.load %arg9[%c3_233, %c0_234, %c0_235] : memref<8x8x32xf32, #tpu.memory_space<vmem>>, vector<1x8x32xf32>
    %534 = vector.shape_cast %533 : vector<1x8x32xf32> to vector<8x32xf32>
    %535 = vector.shape_cast %532 : vector<8x32xf32> to vector<1x8x32xf32>
    tpu.vector_store %arg9[%c3_233, %c0_234, %c0_235], %535 {strides = array<i32>} : memref<8x8x32xf32, #tpu.memory_space<vmem>>, vector<1x8x32xf32>,
    %c4_236 = arith.constant 4 : index
    %c0_237 = arith.constant 0 : index
    %c0_238 = arith.constant 0 : index
    %536 = vector.load %arg11[%c4_236, %c0_237, %c0_238] : memref<8x8x64xf32, #tpu.memory_space<vmem>>, vector<1x8x64xf32>
    %537 = vector.shape_cast %536 : vector<1x8x64xf32> to vector<8x64xf32>
    %cst_239 = arith.constant dense<0.000000e+00> : vector<8x128xf32>
    %538 = tpu.matmul %537, %452, %cst_239 {dimension_numbers = #tpu.dot_dimension_numbers<[1], [0], [0], [1], [0, 0, 1, 1], [], []>} : vector<8x64xf32>, vector<64x128xf32>, vector<8x128xf32> -> vector<8x128xf32>
    %539 = vector.broadcast %453 : vector<1x128xf32> to vector<8x128xf32>
    %540 = arith.addf %538, %539 : vector<8x128xf32>
    %cst_240 = arith.constant 0.000000e+00 : f32
    %541 = vector.broadcast %cst_240 : f32 to vector<8x128xf32>
    %542 = arith.maximumf %540, %541 : vector<8x128xf32>
    %cst_241 = arith.constant dense<0.000000e+00> : vector<8x32xf32>
    %543 = tpu.matmul %542, %454, %cst_241 {dimension_numbers = #tpu.dot_dimension_numbers<[1], [0], [0], [1], [0, 0, 1, 1], [], []>} : vector<8x128xf32>, vector<128x32xf32>, vector<8x32xf32> -> vector<8x32xf32>
    %544 = vector.broadcast %455 : vector<1x32xf32> to vector<8x32xf32>
    %545 = arith.addf %543, %544 : vector<8x32xf32>
    %cst_242 = arith.constant 5.000000e-01 : f32
    %546 = vector.broadcast %cst_242 : f32 to vector<8x32xf32>
    %547 = arith.mulf %546, %545 : vector<8x32xf32>
    %c4_243 = arith.constant 4 : index
    %c0_244 = arith.constant 0 : index
    %c0_245 = arith.constant 0 : index
    %548 = vector.load %arg1[%c4_243, %c0_244, %c0_245] : memref<8x8x32xf32, #tpu.memory_space<vmem>>, vector<1x8x32xf32>
    %549 = vector.shape_cast %548 : vector<1x8x32xf32> to vector<8x32xf32>
    %cst_246 = arith.constant 5.000000e-01 : f32
    %550 = vector.broadcast %cst_246 : f32 to vector<8x32xf32>
    %551 = arith.mulf %550, %549 : vector<8x32xf32>
    %552 = arith.addf %547, %551 : vector<8x32xf32>
    %c4_247 = arith.constant 4 : index
    %c0_248 = arith.constant 0 : index
    %c0_249 = arith.constant 0 : index
    %553 = vector.load %arg9[%c4_247, %c0_248, %c0_249] : memref<8x8x32xf32, #tpu.memory_space<vmem>>, vector<1x8x32xf32>
    %554 = vector.shape_cast %553 : vector<1x8x32xf32> to vector<8x32xf32>
    %555 = vector.shape_cast %552 : vector<8x32xf32> to vector<1x8x32xf32>
    tpu.vector_store %arg9[%c4_247, %c0_248, %c0_249], %555 {strides = array<i32>} : memref<8x8x32xf32, #tpu.memory_space<vmem>>, vector<1x8x32xf32>,
    %c5_250 = arith.constant 5 : index
    %c0_251 = arith.constant 0 : index
    %c0_252 = arith.constant 0 : index
    %556 = vector.load %arg11[%c5_250, %c0_251, %c0_252] : memref<8x8x64xf32, #tpu.memory_space<vmem>>, vector<1x8x64xf32>
    %557 = vector.shape_cast %556 : vector<1x8x64xf32> to vector<8x64xf32>
    %cst_253 = arith.constant dense<0.000000e+00> : vector<8x128xf32>
    %558 = tpu.matmul %557, %452, %cst_253 {dimension_numbers = #tpu.dot_dimension_numbers<[1], [0], [0], [1], [0, 0, 1, 1], [], []>} : vector<8x64xf32>, vector<64x128xf32>, vector<8x128xf32> -> vector<8x128xf32>
    %559 = vector.broadcast %453 : vector<1x128xf32> to vector<8x128xf32>
    %560 = arith.addf %558, %559 : vector<8x128xf32>
    %cst_254 = arith.constant 0.000000e+00 : f32
    %561 = vector.broadcast %cst_254 : f32 to vector<8x128xf32>
    %562 = arith.maximumf %560, %561 : vector<8x128xf32>
    %cst_255 = arith.constant dense<0.000000e+00> : vector<8x32xf32>
    %563 = tpu.matmul %562, %454, %cst_255 {dimension_numbers = #tpu.dot_dimension_numbers<[1], [0], [0], [1], [0, 0, 1, 1], [], []>} : vector<8x128xf32>, vector<128x32xf32>, vector<8x32xf32> -> vector<8x32xf32>
    %564 = vector.broadcast %455 : vector<1x32xf32> to vector<8x32xf32>
    %565 = arith.addf %563, %564 : vector<8x32xf32>
    %cst_256 = arith.constant 5.000000e-01 : f32
    %566 = vector.broadcast %cst_256 : f32 to vector<8x32xf32>
    %567 = arith.mulf %566, %565 : vector<8x32xf32>
    %c5_257 = arith.constant 5 : index
    %c0_258 = arith.constant 0 : index
    %c0_259 = arith.constant 0 : index
    %568 = vector.load %arg1[%c5_257, %c0_258, %c0_259] : memref<8x8x32xf32, #tpu.memory_space<vmem>>, vector<1x8x32xf32>
    %569 = vector.shape_cast %568 : vector<1x8x32xf32> to vector<8x32xf32>
    %cst_260 = arith.constant 5.000000e-01 : f32
    %570 = vector.broadcast %cst_260 : f32 to vector<8x32xf32>
    %571 = arith.mulf %570, %569 : vector<8x32xf32>
    %572 = arith.addf %567, %571 : vector<8x32xf32>
    %c5_261 = arith.constant 5 : index
    %c0_262 = arith.constant 0 : index
    %c0_263 = arith.constant 0 : index
    %573 = vector.load %arg9[%c5_261, %c0_262, %c0_263] : memref<8x8x32xf32, #tpu.memory_space<vmem>>, vector<1x8x32xf32>
    %574 = vector.shape_cast %573 : vector<1x8x32xf32> to vector<8x32xf32>
    %575 = vector.shape_cast %572 : vector<8x32xf32> to vector<1x8x32xf32>
    tpu.vector_store %arg9[%c5_261, %c0_262, %c0_263], %575 {strides = array<i32>} : memref<8x8x32xf32, #tpu.memory_space<vmem>>, vector<1x8x32xf32>,
    %c6_264 = arith.constant 6 : index
    %c0_265 = arith.constant 0 : index
    %c0_266 = arith.constant 0 : index
    %576 = vector.load %arg11[%c6_264, %c0_265, %c0_266] : memref<8x8x64xf32, #tpu.memory_space<vmem>>, vector<1x8x64xf32>
    %577 = vector.shape_cast %576 : vector<1x8x64xf32> to vector<8x64xf32>
    %cst_267 = arith.constant dense<0.000000e+00> : vector<8x128xf32>
    %578 = tpu.matmul %577, %452, %cst_267 {dimension_numbers = #tpu.dot_dimension_numbers<[1], [0], [0], [1], [0, 0, 1, 1], [], []>} : vector<8x64xf32>, vector<64x128xf32>, vector<8x128xf32> -> vector<8x128xf32>
    %579 = vector.broadcast %453 : vector<1x128xf32> to vector<8x128xf32>
    %580 = arith.addf %578, %579 : vector<8x128xf32>
    %cst_268 = arith.constant 0.000000e+00 : f32
    %581 = vector.broadcast %cst_268 : f32 to vector<8x128xf32>
    %582 = arith.maximumf %580, %581 : vector<8x128xf32>
    %cst_269 = arith.constant dense<0.000000e+00> : vector<8x32xf32>
    %583 = tpu.matmul %582, %454, %cst_269 {dimension_numbers = #tpu.dot_dimension_numbers<[1], [0], [0], [1], [0, 0, 1, 1], [], []>} : vector<8x128xf32>, vector<128x32xf32>, vector<8x32xf32> -> vector<8x32xf32>
    %584 = vector.broadcast %455 : vector<1x32xf32> to vector<8x32xf32>
    %585 = arith.addf %583, %584 : vector<8x32xf32>
    %cst_270 = arith.constant 5.000000e-01 : f32
    %586 = vector.broadcast %cst_270 : f32 to vector<8x32xf32>
    %587 = arith.mulf %586, %585 : vector<8x32xf32>
    %c6_271 = arith.constant 6 : index
    %c0_272 = arith.constant 0 : index
    %c0_273 = arith.constant 0 : index
    %588 = vector.load %arg1[%c6_271, %c0_272, %c0_273] : memref<8x8x32xf32, #tpu.memory_space<vmem>>, vector<1x8x32xf32>
    %589 = vector.shape_cast %588 : vector<1x8x32xf32> to vector<8x32xf32>
    %cst_274 = arith.constant 5.000000e-01 : f32
    %590 = vector.broadcast %cst_274 : f32 to vector<8x32xf32>
    %591 = arith.mulf %590, %589 : vector<8x32xf32>
    %592 = arith.addf %587, %591 : vector<8x32xf32>
    %c6_275 = arith.constant 6 : index
    %c0_276 = arith.constant 0 : index
    %c0_277 = arith.constant 0 : index
    %593 = vector.load %arg9[%c6_275, %c0_276, %c0_277] : memref<8x8x32xf32, #tpu.memory_space<vmem>>, vector<1x8x32xf32>
    %594 = vector.shape_cast %593 : vector<1x8x32xf32> to vector<8x32xf32>
    %595 = vector.shape_cast %592 : vector<8x32xf32> to vector<1x8x32xf32>
    tpu.vector_store %arg9[%c6_275, %c0_276, %c0_277], %595 {strides = array<i32>} : memref<8x8x32xf32, #tpu.memory_space<vmem>>, vector<1x8x32xf32>,
    %c7_278 = arith.constant 7 : index
    %c0_279 = arith.constant 0 : index
    %c0_280 = arith.constant 0 : index
    %596 = vector.load %arg11[%c7_278, %c0_279, %c0_280] : memref<8x8x64xf32, #tpu.memory_space<vmem>>, vector<1x8x64xf32>
    %597 = vector.shape_cast %596 : vector<1x8x64xf32> to vector<8x64xf32>
    %cst_281 = arith.constant dense<0.000000e+00> : vector<8x128xf32>
    %598 = tpu.matmul %597, %452, %cst_281 {dimension_numbers = #tpu.dot_dimension_numbers<[1], [0], [0], [1], [0, 0, 1, 1], [], []>} : vector<8x64xf32>, vector<64x128xf32>, vector<8x128xf32> -> vector<8x128xf32>
    %599 = vector.broadcast %453 : vector<1x128xf32> to vector<8x128xf32>
    %600 = arith.addf %598, %599 : vector<8x128xf32>
    %cst_282 = arith.constant 0.000000e+00 : f32
    %601 = vector.broadcast %cst_282 : f32 to vector<8x128xf32>
    %602 = arith.maximumf %600, %601 : vector<8x128xf32>
    %cst_283 = arith.constant dense<0.000000e+00> : vector<8x32xf32>
    %603 = tpu.matmul %602, %454, %cst_283 {dimension_numbers = #tpu.dot_dimension_numbers<[1], [0], [0], [1], [0, 0, 1, 1], [], []>} : vector<8x128xf32>, vector<128x32xf32>, vector<8x32xf32> -> vector<8x32xf32>
    %604 = vector.broadcast %455 : vector<1x32xf32> to vector<8x32xf32>
    %605 = arith.addf %603, %604 : vector<8x32xf32>
    %cst_284 = arith.constant 5.000000e-01 : f32
    %606 = vector.broadcast %cst_284 : f32 to vector<8x32xf32>
    %607 = arith.mulf %606, %605 : vector<8x32xf32>
    %c7_285 = arith.constant 7 : index
    %c0_286 = arith.constant 0 : index
    %c0_287 = arith.constant 0 : index
    %608 = vector.load %arg1[%c7_285, %c0_286, %c0_287] : memref<8x8x32xf32, #tpu.memory_space<vmem>>, vector<1x8x32xf32>
    %609 = vector.shape_cast %608 : vector<1x8x32xf32> to vector<8x32xf32>
    %cst_288 = arith.constant 5.000000e-01 : f32
    %610 = vector.broadcast %cst_288 : f32 to vector<8x32xf32>
    %611 = arith.mulf %610, %609 : vector<8x32xf32>
    %612 = arith.addf %607, %611 : vector<8x32xf32>
    %c7_289 = arith.constant 7 : index
    %c0_290 = arith.constant 0 : index
    %c0_291 = arith.constant 0 : index
    %613 = vector.load %arg9[%c7_289, %c0_290, %c0_291] : memref<8x8x32xf32, #tpu.memory_space<vmem>>, vector<1x8x32xf32>
    %614 = vector.shape_cast %613 : vector<1x8x32xf32> to vector<8x32xf32>
    %615 = vector.shape_cast %612 : vector<8x32xf32> to vector<1x8x32xf32>
    tpu.vector_store %arg9[%c7_289, %c0_290, %c0_291], %615 {strides = array<i32>} : memref<8x8x32xf32, #tpu.memory_space<vmem>>, vector<1x8x32xf32>,
    return
  }
  func.func @transform_0(%arg0: i32) -> (i32, i32, i32) {
    %c0_i32 = arith.constant 0 : i32
    %c0_i32_0 = arith.constant 0 : i32
    %c0_i32_1 = arith.constant 0 : i32
    return %c0_i32, %arg0, %c0_i32_0 : i32, i32, i32
  }
  func.func @transform_1(%arg0: i32) -> (i32, i32) {
    %c0_i32 = arith.constant 0 : i32
    %c0_i32_0 = arith.constant 0 : i32
    %c0_i32_1 = arith.constant 0 : i32
    return %c0_i32, %c0_i32_0 : i32, i32
  }
  func.func @transform_2(%arg0: i32) -> (i32, i32) {
    %c0_i32 = arith.constant 0 : i32
    %c0_i32_0 = arith.constant 0 : i32
    %c0_i32_1 = arith.constant 0 : i32
    return %c0_i32, %c0_i32_0 : i32, i32
  }
  func.func @transform_3(%arg0: i32) -> (i32, i32) {
    %c0_i32 = arith.constant 0 : i32
    %c0_i32_0 = arith.constant 0 : i32
    %c0_i32_1 = arith.constant 0 : i32
    return %c0_i32, %c0_i32_0 : i32, i32
  }
  func.func @transform_4(%arg0: i32) -> (i32, i32) {
    %c0_i32 = arith.constant 0 : i32
    %c0_i32_0 = arith.constant 0 : i32
    %c0_i32_1 = arith.constant 0 : i32
    return %c0_i32, %c0_i32_0 : i32, i32
  }
  func.func @transform_5(%arg0: i32) -> (i32, i32) {
    %c0_i32 = arith.constant 0 : i32
    %c0_i32_0 = arith.constant 0 : i32
    %c0_i32_1 = arith.constant 0 : i32
    return %c0_i32, %c0_i32_0 : i32, i32
  }
  func.func @transform_6(%arg0: i32) -> (i32, i32) {
    %c0_i32 = arith.constant 0 : i32
    %c0_i32_0 = arith.constant 0 : i32
    %c0_i32_1 = arith.constant 0 : i32
    return %c0_i32, %c0_i32_0 : i32, i32
  }
  func.func @transform_7(%arg0: i32) -> (i32, i32) {
    %c0_i32 = arith.constant 0 : i32
    %c0_i32_0 = arith.constant 0 : i32
    %c0_i32_1 = arith.constant 0 : i32
    return %c0_i32, %c0_i32_0 : i32, i32
  }
  func.func @transform_8(%arg0: i32) -> (i32, i32, i32) {
    %c0_i32 = arith.constant 0 : i32
    %c0_i32_0 = arith.constant 0 : i32
    %c0_i32_1 = arith.constant 0 : i32
    return %c0_i32, %arg0, %c0_i32_0 : i32, i32, i32
  }
}

</mosaic_0001>

<llo_original>
// kernel: residual_lstm.1
$region0: #{residual_lstm.1}
  #allocation0 [shape = 'u32[]', space=smem, size = 0x4, offset = 0x4, fixed_abs, tag = 'smem constant byte address 0x4 - core index']
  #allocation1 [shape = 'u32[144,128]{1,0:T(1,128)}', space=vmem, size = 0x12000, scoped, tag = 'internal scratch']
  #allocation2 [shape = 'f32[8,8,256]{2,1,0:T(8,128)}', space=vmem, size = 0x10000, scoped, tag = 'scratch operand']
  #allocation3 [shape = 'f32[8,8,64]{2,1,0:T(8,128)}', space=vmem, size = 0x8000, scoped, tag = 'scratch operand']
  %s0 = inlined_call_operand.vmem [shape: f32[8,8,32], index: 0, kind: input, shape index: {}]
  %s1 = inlined_call_operand.vmem [shape: f32[32,256], index: 1, kind: input, shape index: {}]
  %s2 = inlined_call_operand.vmem [shape: f32[1,256], index: 2, kind: input, shape index: {}]
  %s3 = inlined_call_operand.vmem [shape: f32[64,256], index: 3, kind: input, shape index: {}]
  %s4 = inlined_call_operand.hbm [shape: f32[64,128], index: 4, kind: input, shape index: {}]
  %s5 = inlined_call_operand.vmem [shape: f32[1,128], index: 5, kind: input, shape index: {}]
  %s6 = inlined_call_operand.vmem [shape: f32[128,32], index: 6, kind: input, shape index: {}]
  %s7 = inlined_call_operand.vmem [shape: f32[1,32], index: 7, kind: input, shape index: {}]
  %s8 = inlined_call_operand.vmem [shape: f32[8,8,32], index: 8, kind: output, shape index: {}]
  %s9 = sld [smem:[#allocation0]]
  $region46: #{residual_lstm.1} parent=0
    _
  %s11 = ssub.s32 1, %s9
  %s12 = scalar_select 0, %s11, %s9
  $region1: #{residual_lstm.1} parent=0
    #allocation4 [shape = 'u8[32768]{0}', space=vmem, size = 0x8000, scoped, tag = 'input window, operand 4, single buffered']
    #allocation5 [shape = 's32[1]{0}', space=sflag, size = 0x4, scoped, tag = 'scoped memory for residual_lstm.1']
    %13 = vsyncpa [#allocation5], 0
    // Predicated region
    $region2: #{residual_lstm.1} parent=1 // pred_check
      _
    $region3: #{residual_lstm.1} parent=1 // pred_check_branch
      %15 = sbr.rel (0) target = $region5
    $region4: #{residual_lstm.1} parent=1 // pred_region
      _
    $region5: #{residual_lstm.1} parent=1 // pred_fallthru
      _
    // Predicated region
    $region6: #{residual_lstm.1} parent=1 // pred_check
      _
    $region7: #{residual_lstm.1} parent=1 // pred_check_branch
      %17 = sbr.rel (0) target = $region9
    $region8: #{residual_lstm.1} parent=1 // pred_region
      _
    $region9: #{residual_lstm.1} parent=1 // pred_fallthru
      _
    // Predicated region
    $region10: #{residual_lstm.1} parent=1 // pred_check
      _
    $region11: #{residual_lstm.1} parent=1 // pred_check_branch
      %19 = sbr.rel (0) target = $region13
    $region12: #{residual_lstm.1} parent=1 // pred_region
      _
    $region13: #{residual_lstm.1} parent=1 // pred_fallthru
      _
    // Predicated region
    $region14: #{residual_lstm.1} parent=1 // pred_check
      _
    $region15: #{residual_lstm.1} parent=1 // pred_check_branch
      %21 = sbr.rel (0) target = $region17
    $region16: #{residual_lstm.1} parent=1 // pred_region
      _
    $region17: #{residual_lstm.1} parent=1 // pred_fallthru
      _
    // Predicated region
    $region18: #{residual_lstm.1} parent=1 // pred_check
      _
    $region19: #{residual_lstm.1} parent=1 // pred_check_branch
      %23 = sbr.rel (0) target = $region21
    $region20: #{residual_lstm.1} parent=1 // pred_region
      %s25 = ssub.s32 1024, 1024
      %26 = vsyncadd [#allocation5], %s25
      %s27 = sshll.u32 [#allocation4], 4
      %s28 = int_to_ptr.vmem [resolvable:$true] %s27
      %33 = dma.hbm_to_vmem [thread:$0]  %s4, 1024, %s28, [#allocation5], 128, 128, 8
    $region21: #{residual_lstm.1} parent=1 // pred_fallthru
      _
    // Predicated region
    $region22: #{residual_lstm.1} parent=1 // pred_check
      _
    $region23: #{residual_lstm.1} parent=1 // pred_check_branch
      %35 = sbr.rel (0) target = $region25
    $region24: #{residual_lstm.1} parent=1 // pred_region
      _
    $region25: #{residual_lstm.1} parent=1 // pred_fallthru
      _
    // Predicated region
    $region26: #{residual_lstm.1} parent=1 // pred_check
      _
    $region27: #{residual_lstm.1} parent=1 // pred_check_branch
      %37 = sbr.rel (0) target = $region29
    $region28: #{residual_lstm.1} parent=1 // pred_region
      _
    $region29: #{residual_lstm.1} parent=1 // pred_fallthru
      _
    // Predicated region
    $region30: #{residual_lstm.1} parent=1 // pred_check
      _
    $region31: #{residual_lstm.1} parent=1 // pred_check_branch
      %39 = sbr.rel (0) target = $region33
    $region32: #{residual_lstm.1} parent=1 // pred_region
      _
    $region33: #{residual_lstm.1} parent=1 // pred_fallthru
      _
    // Predicated region
    $region34: #{residual_lstm.1} parent=1 // pred_check
      _
    $region35: #{residual_lstm.1} parent=1 // pred_check_branch
      %41 = sbr.rel (0) target = $region37
    $region36: #{residual_lstm.1} parent=1 // pred_region
      %42 = dma.done [#allocation5], 1024
    $region37: #{residual_lstm.1} parent=1 // pred_fallthru
      _
    %v43 = vld [vmem:[%s1] sm:$0xff]
    %v44 = vld [vmem:[%s1 + $0x8] sm:$0xff]
    %v45 = vld [vmem:[%s1 + $0x10] sm:$0xff]
    %v46 = vld [vmem:[%s1 + $0x18] sm:$0xff]
    %v47 = vld [vmem:[%s1 + $0x20] sm:$0xff]
    %v48 = vld [vmem:[%s1 + $0x28] sm:$0xff]
    %v49 = vld [vmem:[%s1 + $0x30] sm:$0xff]
    %v50 = vld [vmem:[%s1 + $0x38] sm:$0xff]
    %v51 = vld [vmem:[%s2] sm:$0x3]
    %v52 = vld [vmem:[%s0] sm:$0xff]
    %v54 = vlaneseq
    %v55 = vshrl.u32 %v54, 7
    %v56 = vsub.s32 0, %v55
    %v57 = vrot.slane %v51, %v56
    %v58 = vlaneseq
    %v59 = vshrl.u32 %v58, 7
    %v60 = vsub.s32 1, %v59
    %v61 = vrot.slane %v51, %v60
    %vm64 = vcmask 261120
    %v66 = vsel %vm64, %v52, 0
    %68 = vmatprep.subr.mxu0 0.0
    %69 = vmatpush1.msra.mxu0 0.0
    %70 = vmatprep.subr.mxu0 0.0
    %71 = vmatpush1.msra.mxu0 0.0
    %72 = vmatprep.subr.mxu0 0.0
    %73 = vmatpush1.msra.mxu0 0.0
    %74 = vmatprep.subr.mxu0 0.0
    %75 = vmatpush1.msra.mxu0 0.0
    %76 = vmatprep.subr.mxu0 0.0
    %77 = vmatpush1.msra.mxu0 0.0
    %78 = vmatprep.subr.mxu0 0.0
    %79 = vmatpush1.msra.mxu0 0.0
    %80 = vmatprep.subr.mxu0 0.0
    %81 = vmatpush1.msra.mxu0 0.0
    %82 = vmatprep.subr.mxu0 0.0
    %83 = vmatpush1.msra.mxu0 0.0
    %84 = vmatprep.subr.mxu0 0.0
    %85 = vmatpush1.msra.mxu0 0.0
    %86 = vmatprep.subr.mxu0 0.0
    %87 = vmatpush1.msra.mxu0 0.0
    %88 = vmatprep.subr.mxu0 0.0
    %89 = vmatpush1.msra.mxu0 0.0
    %90 = vmatprep.subr.mxu0 0.0
    %91 = vmatpush1.msra.mxu0 0.0
    %92 = vmatprep.subr.mxu0 %v50
    %93 = vmatpush1.msra.mxu0 %v49
    %94 = vmatprep.subr.mxu0 %v48
    %95 = vmatpush1.msra.mxu0 %v47
    %96 = vmatprep.subr.mxu0 %v46
    %97 = vmatpush1.msra.mxu0 %v45
    %98 = vmatprep.subr.mxu0 %v44
    %99 = vmatpush1.msra.mxu0 %v43
    %100 = vmatprep.subr.mxu0 0.0
    %101 = vmatpush2.msra.mxu0 0.0
    %102 = vmatprep.subr.mxu0 0.0
    %103 = vmatpush2.msra.mxu0 0.0
    %104 = vmatprep.subr.mxu0 0.0
    %105 = vmatpush2.msra.mxu0 0.0
    %106 = vmatprep.subr.mxu0 0.0
    %107 = vmatpush2.msra.mxu0 0.0
    %108 = vmatprep.subr.mxu0 0.0
    %109 = vmatpush2.msra.mxu0 0.0
    %110 = vmatprep.subr.mxu0 0.0
    %111 = vmatpush2.msra.mxu0 0.0
    %112 = vmatprep.subr.mxu0 0.0
    %113 = vmatpush2.msra.mxu0 0.0
    %114 = vmatprep.subr.mxu0 0.0
    %115 = vmatpush2.msra.mxu0 0.0
    %116 = vmatprep.subr.mxu0 0.0
    %117 = vmatpush2.msra.mxu0 0.0
    %118 = vmatprep.subr.mxu0 0.0
    %119 = vmatpush2.msra.mxu0 0.0
    %120 = vmatprep.subr.mxu0 0.0
    %121 = vmatpush2.msra.mxu0 0.0
    %122 = vmatprep.subr.mxu0 0.0
    %123 = vmatpush2.msra.mxu0 0.0
    %124 = vmatprep.subr.mxu0 0.0
    %125 = vmatpush2.msra.mxu0 0.0
    %126 = vmatprep.subr.mxu0 0.0
    %127 = vmatpush2.msra.mxu0 0.0
    %128 = vmatprep.subr.mxu0 0.0
    %129 = vmatpush2.msra.mxu0 0.0
    %130 = vmatprep.subr.mxu0 0.0
    %131 = vmatpush2.msra.mxu0 0.0
    %132 = vmatprep.mubr.f32.mxu0 0.0
    %133 = vmatmul.mubr.f32.gmra.mxu0 %v66
    %v134 = vpop.f32.mrf.mxu0
    %v135 = vadd.f32 %v57, %v134
    %v136 = vpop.f32.mrf.mxu0
    %v137 = vadd.f32 %v61, %v136
    %138 = vdwg.mxu0
    %139 = vst [vmem:[#allocation2] sm:$0xff] %v135
    %140 = vst [vmem:[#allocation2 + $0x8] sm:$0xff] %v137
    %s141 = scalar_lea.vmem %s0, 8
    %v142 = vld [vmem:[%s141] sm:$0xff]
    %v144 = vsel %vm64, %v142, 0
    %146 = vmatprep.subr.mxu0 0.0
    %147 = vmatpush1.msra.mxu0 0.0
    %148 = vmatprep.subr.mxu0 0.0
    %149 = vmatpush1.msra.mxu0 0.0
    %150 = vmatprep.subr.mxu0 0.0
    %151 = vmatpush1.msra.mxu0 0.0
    %152 = vmatprep.subr.mxu0 0.0
    %153 = vmatpush1.msra.mxu0 0.0
    %154 = vmatprep.subr.mxu0 0.0
    %155 = vmatpush1.msra.mxu0 0.0
    %156 = vmatprep.subr.mxu0 0.0
    %157 = vmatpush1.msra.mxu0 0.0
    %158 = vmatprep.subr.mxu0 0.0
    %159 = vmatpush1.msra.mxu0 0.0
    %160 = vmatprep.subr.mxu0 0.0
    %161 = vmatpush1.msra.mxu0 0.0
    %162 = vmatprep.subr.mxu0 0.0
    %163 = vmatpush1.msra.mxu0 0.0
    %164 = vmatprep.subr.mxu0 0.0
    %165 = vmatpush1.msra.mxu0 0.0
    %166 = vmatprep.subr.mxu0 0.0
    %167 = vmatpush1.msra.mxu0 0.0
    %168 = vmatprep.subr.mxu0 0.0
    %169 = vmatpush1.msra.mxu0 0.0
    %170 = vmatprep.subr.mxu0 %v50
    %171 = vmatpush1.msra.mxu0 %v49
    %172 = vmatprep.subr.mxu0 %v48
    %173 = vmatpush1.msra.mxu0 %v47
    %174 = vmatprep.subr.mxu0 %v46
    %175 = vmatpush1.msra.mxu0 %v45
    %176 = vmatprep.subr.mxu0 %v44
    %177 = vmatpush1.msra.mxu0 %v43
    %178 = vmatprep.subr.mxu0 0.0
    %179 = vmatpush2.msra.mxu0 0.0
    %180 = vmatprep.subr.mxu0 0.0
    %181 = vmatpush2.msra.mxu0 0.0
    %182 = vmatprep.subr.mxu0 0.0
    %183 = vmatpush2.msra.mxu0 0.0
    %184 = vmatprep.subr.mxu0 0.0
    %185 = vmatpush2.msra.mxu0 0.0
    %186 = vmatprep.subr.mxu0 0.0
    %187 = vmatpush2.msra.mxu0 0.0
    %188 = vmatprep.subr.mxu0 0.0
    %189 = vmatpush2.msra.mxu0 0.0
    %190 = vmatprep.subr.mxu0 0.0
    %191 = vmatpush2.msra.mxu0 0.0
    %192 = vmatprep.subr.mxu0 0.0
    %193 = vmatpush2.msra.mxu0 0.0
    %194 = vmatprep.subr.mxu0 0.0
    %195 = vmatpush2.msra.mxu0 0.0
    %196 = vmatprep.subr.mxu0 0.0
    %197 = vmatpush2.msra.mxu0 0.0
    %198 = vmatprep.subr.mxu0 0.0
    %199 = vmatpush2.msra.mxu0 0.0
    %200 = vmatprep.subr.mxu0 0.0
    %201 = vmatpush2.msra.mxu0 0.0
    %202 = vmatprep.subr.mxu0 0.0
    %203 = vmatpush2.msra.mxu0 0.0
    %204 = vmatprep.subr.mxu0 0.0
    %205 = vmatpush2.msra.mxu0 0.0
    %206 = vmatprep.subr.mxu0 0.0
    %207 = vmatpush2.msra.mxu0 0.0
    %208 = vmatprep.subr.mxu0 0.0
    %209 = vmatpush2.msra.mxu0 0.0
    %210 = vmatprep.mubr.f32.mxu0 0.0
    %211 = vmatmul.mubr.f32.gmra.mxu0 %v144
    %v212 = vpop.f32.mrf.mxu0
    %v213 = vadd.f32 %v57, %v212
    %v214 = vpop.f32.mrf.mxu0
    %v215 = vadd.f32 %v61, %v214
    %216 = vdwg.mxu0
    %s217 = scalar_lea.vmem [#allocation2], 16
    %218 = vst [vmem:[%s217] sm:$0xff] %v213
    %219 = vst [vmem:[%s217 + $0x8] sm:$0xff] %v215
    %s220 = scalar_lea.vmem %s0, 16
    %v221 = vld [vmem:[%s220] sm:$0xff]
    %v223 = vsel %vm64, %v221, 0
    %225 = vmatprep.subr.mxu0 0.0
    %226 = vmatpush1.msra.mxu0 0.0
    %227 = vmatprep.subr.mxu0 0.0
    %228 = vmatpush1.msra.mxu0 0.0
    %229 = vmatprep.subr.mxu0 0.0
    %230 = vmatpush1.msra.mxu0 0.0
    %231 = vmatprep.subr.mxu0 0.0
    %232 = vmatpush1.msra.mxu0 0.0
    %233 = vmatprep.subr.mxu0 0.0
    %234 = vmatpush1.msra.mxu0 0.0
    %235 = vmatprep.subr.mxu0 0.0
    %236 = vmatpush1.msra.mxu0 0.0
    %237 = vmatprep.subr.mxu0 0.0
    %238 = vmatpush1.msra.mxu0 0.0
    %239 = vmatprep.subr.mxu0 0.0
    %240 = vmatpush1.msra.mxu0 0.0
    %241 = vmatprep.subr.mxu0 0.0
    %242 = vmatpush1.msra.mxu0 0.0
    %243 = vmatprep.subr.mxu0 0.0
    %244 = vmatpush1.msra.mxu0 0.0
    %245 = vmatprep.subr.mxu0 0.0
    %246 = vmatpush1.msra.mxu0 0.0
    %247 = vmatprep.subr.mxu0 0.0
    %248 = vmatpush1.msra.mxu0 0.0
    %249 = vmatprep.subr.mxu0 %v50
    %250 = vmatpush1.msra.mxu0 %v49
    %251 = vmatprep.subr.mxu0 %v48
    %252 = vmatpush1.msra.mxu0 %v47
    %253 = vmatprep.subr.mxu0 %v46
    %254 = vmatpush1.msra.mxu0 %v45
    %255 = vmatprep.subr.mxu0 %v44
    %256 = vmatpush1.msra.mxu0 %v43
    %257 = vmatprep.subr.mxu0 0.0
    %258 = vmatpush2.msra.mxu0 0.0
    %259 = vmatprep.subr.mxu0 0.0
    %260 = vmatpush2.msra.mxu0 0.0
    %261 = vmatprep.subr.mxu0 0.0
    %262 = vmatpush2.msra.mxu0 0.0
    %263 = vmatprep.subr.mxu0 0.0
    %264 = vmatpush2.msra.mxu0 0.0
    %265 = vmatprep.subr.mxu0 0.0
    %266 = vmatpush2.msra.mxu0 0.0
    %267 = vmatprep.subr.mxu0 0.0
    %268 = vmatpush2.msra.mxu0 0.0
    %269 = vmatprep.subr.mxu0 0.0
    %270 = vmatpush2.msra.mxu0 0.0
    %271 = vmatprep.subr.mxu0 0.0
    %272 = vmatpush2.msra.mxu0 0.0
    %273 = vmatprep.subr.mxu0 0.0
    %274 = vmatpush2.msra.mxu0 0.0
    %275 = vmatprep.subr.mxu0 0.0
    %276 = vmatpush2.msra.mxu0 0.0
    %277 = vmatprep.subr.mxu0 0.0
    %278 = vmatpush2.msra.mxu0 0.0
    %279 = vmatprep.subr.mxu0 0.0
    %280 = vmatpush2.msra.mxu0 0.0
    %281 = vmatprep.subr.mxu0 0.0
    %282 = vmatpush2.msra.mxu0 0.0
    %283 = vmatprep.subr.mxu0 0.0
    %284 = vmatpush2.msra.mxu0 0.0
    %285 = vmatprep.subr.mxu0 0.0
    %286 = vmatpush2.msra.mxu0 0.0
    %287 = vmatprep.subr.mxu0 0.0
    %288 = vmatpush2.msra.mxu0 0.0
    %289 = vmatprep.mubr.f32.mxu0 0.0
    %290 = vmatmul.mubr.f32.gmra.mxu0 %v223
    %v291 = vpop.f32.mrf.mxu0
    %v292 = vadd.f32 %v57, %v291
    %v293 = vpop.f32.mrf.mxu0
    %v294 = vadd.f32 %v61, %v293
    %295 = vdwg.mxu0
    %s296 = scalar_lea.vmem [#allocation2], 32
    %297 = vst [vmem:[%s296] sm:$0xff] %v292
    %298 = vst [vmem:[%s296 + $0x8] sm:$0xff] %v294
    %s299 = scalar_lea.vmem %s0, 24
    %v300 = vld [vmem:[%s299] sm:$0xff]
    %v302 = vsel %vm64, %v300, 0
    %304 = vmatprep.subr.mxu0 0.0
    %305 = vmatpush1.msra.mxu0 0.0
    %306 = vmatprep.subr.mxu0 0.0
    %307 = vmatpush1.msra.mxu0 0.0
    %308 = vmatprep.subr.mxu0 0.0
    %309 = vmatpush1.msra.mxu0 0.0
    %310 = vmatprep.subr.mxu0 0.0
    %311 = vmatpush1.msra.mxu0 0.0
    %312 = vmatprep.subr.mxu0 0.0
    %313 = vmatpush1.msra.mxu0 0.0
    %314 = vmatprep.subr.mxu0 0.0
    %315 = vmatpush1.msra.mxu0 0.0
    %316 = vmatprep.subr.mxu0 0.0
    %317 = vmatpush1.msra.mxu0 0.0
    %318 = vmatprep.subr.mxu0 0.0
    %319 = vmatpush1.msra.mxu0 0.0
    %320 = vmatprep.subr.mxu0 0.0
    %321 = vmatpush1.msra.mxu0 0.0
    %322 = vmatprep.subr.mxu0 0.0
    %323 = vmatpush1.msra.mxu0 0.0
    %324 = vmatprep.subr.mxu0 0.0
    %325 = vmatpush1.msra.mxu0 0.0
    %326 = vmatprep.subr.mxu0 0.0
    %327 = vmatpush1.msra.mxu0 0.0
    %328 = vmatprep.subr.mxu0 %v50
    %329 = vmatpush1.msra.mxu0 %v49
    %330 = vmatprep.subr.mxu0 %v48
    %331 = vmatpush1.msra.mxu0 %v47
    %332 = vmatprep.subr.mxu0 %v46
    %333 = vmatpush1.msra.mxu0 %v45
    %334 = vmatprep.subr.mxu0 %v44
    %335 = vmatpush1.msra.mxu0 %v43
    %336 = vmatprep.subr.mxu0 0.0
    %337 = vmatpush2.msra.mxu0 0.0
    %338 = vmatprep.subr.mxu0 0.0
    %339 = vmatpush2.msra.mxu0 0.0
    %340 = vmatprep.subr.mxu0 0.0
    %341 = vmatpush2.msra.mxu0 0.0
    %342 = vmatprep.subr.mxu0 0.0
    %343 = vmatpush2.msra.mxu0 0.0
    %344 = vmatprep.subr.mxu0 0.0
    %345 = vmatpush2.msra.mxu0 0.0
    %346 = vmatprep.subr.mxu0 0.0
    %347 = vmatpush2.msra.mxu0 0.0
    %348 = vmatprep.subr.mxu0 0.0
    %349 = vmatpush2.msra.mxu0 0.0
    %350 = vmatprep.subr.mxu0 0.0
    %351 = vmatpush2.msra.mxu0 0.0
    %352 = vmatprep.subr.mxu0 0.0
    %353 = vmatpush2.msra.mxu0 0.0
    %354 = vmatprep.subr.mxu0 0.0
    %355 = vmatpush2.msra.mxu0 0.0
    %356 = vmatprep.subr.mxu0 0.0
    %357 = vmatpush2.msra.mxu0 0.0
    %358 = vmatprep.subr.mxu0 0.0
    %359 = vmatpush2.msra.mxu0 0.0
    %360 = vmatprep.subr.mxu0 0.0
    %361 = vmatpush2.msra.mxu0 0.0
    %362 = vmatprep.subr.mxu0 0.0
    %363 = vmatpush2.msra.mxu0 0.0
    %364 = vmatprep.subr.mxu0 0.0
    %365 = vmatpush2.msra.mxu0 0.0
    %366 = vmatprep.subr.mxu0 0.0
    %367 = vmatpush2.msra.mxu0 0.0
    %368 = vmatprep.mubr.f32.mxu0 0.0
    %369 = vmatmul.mubr.f32.gmra.mxu0 %v302
    %v370 = vpop.f32.mrf.mxu0
    %v371 = vadd.f32 %v57, %v370
    %v372 = vpop.f32.mrf.mxu0
    %v373 = vadd.f32 %v61, %v372
    %374 = vdwg.mxu0
    %s375 = scalar_lea.vmem [#allocation2], 48
    %376 = vst [vmem:[%s375] sm:$0xff] %v371
    %377 = vst [vmem:[%s375 + $0x8] sm:$0xff] %v373
    %s378 = scalar_lea.vmem %s0, 32
    %v379 = vld [vmem:[%s378] sm:$0xff]
    %v381 = vsel %vm64, %v379, 0
    %383 = vmatprep.subr.mxu0 0.0
    %384 = vmatpush1.msra.mxu0 0.0
    %385 = vmatprep.subr.mxu0 0.0
    %386 = vmatpush1.msra.mxu0 0.0
    %387 = vmatprep.subr.mxu0 0.0
    %388 = vmatpush1.msra.mxu0 0.0
    %389 = vmatprep.subr.mxu0 0.0
    %390 = vmatpush1.msra.mxu0 0.0
    %391 = vmatprep.subr.mxu0 0.0
    %392 = vmatpush1.msra.mxu0 0.0
    %393 = vmatprep.subr.mxu0 0.0
    %394 = vmatpush1.msra.mxu0 0.0
    %395 = vmatprep.subr.mxu0 0.0
    %396 = vmatpush1.msra.mxu0 0.0
    %397 = vmatprep.subr.mxu0 0.0
    %398 = vmatpush1.msra.mxu0 0.0
    %399 = vmatprep.subr.mxu0 0.0
    %400 = vmatpush1.msra.mxu0 0.0
    %401 = vmatprep.subr.mxu0 0.0
    %402 = vmatpush1.msra.mxu0 0.0
    %403 = vmatprep.subr.mxu0 0.0
    %404 = vmatpush1.msra.mxu0 0.0
    %405 = vmatprep.subr.mxu0 0.0
    %406 = vmatpush1.msra.mxu0 0.0
    %407 = vmatprep.subr.mxu0 %v50
    %408 = vmatpush1.msra.mxu0 %v49
    %409 = vmatprep.subr.mxu0 %v48
    %410 = vmatpush1.msra.mxu0 %v47
    %411 = vmatprep.subr.mxu0 %v46
    %412 = vmatpush1.msra.mxu0 %v45
    %413 = vmatprep.subr.mxu0 %v44
    %414 = vmatpush1.msra.mxu0 %v43
    %415 = vmatprep.subr.mxu0 0.0
    %416 = vmatpush2.msra.mxu0 0.0
    %417 = vmatprep.subr.mxu0 0.0
    %418 = vmatpush2.msra.mxu0 0.0
    %419 = vmatprep.subr.mxu0 0.0
    %420 = vmatpush2.msra.mxu0 0.0
    %421 = vmatprep.subr.mxu0 0.0
    %422 = vmatpush2.msra.mxu0 0.0
    %423 = vmatprep.subr.mxu0 0.0
    %424 = vmatpush2.msra.mxu0 0.0
    %425 = vmatprep.subr.mxu0 0.0
    %426 = vmatpush2.msra.mxu0 0.0
    %427 = vmatprep.subr.mxu0 0.0
    %428 = vmatpush2.msra.mxu0 0.0
    %429 = vmatprep.subr.mxu0 0.0
    %430 = vmatpush2.msra.mxu0 0.0
    %431 = vmatprep.subr.mxu0 0.0
    %432 = vmatpush2.msra.mxu0 0.0
    %433 = vmatprep.subr.mxu0 0.0
    %434 = vmatpush2.msra.mxu0 0.0
    %435 = vmatprep.subr.mxu0 0.0
    %436 = vmatpush2.msra.mxu0 0.0
    %437 = vmatprep.subr.mxu0 0.0
    %438 = vmatpush2.msra.mxu0 0.0
    %439 = vmatprep.subr.mxu0 0.0
    %440 = vmatpush2.msra.mxu0 0.0
    %441 = vmatprep.subr.mxu0 0.0
    %442 = vmatpush2.msra.mxu0 0.0
    %443 = vmatprep.subr.mxu0 0.0
    %444 = vmatpush2.msra.mxu0 0.0
    %445 = vmatprep.subr.mxu0 0.0
    %446 = vmatpush2.msra.mxu0 0.0
    %447 = vmatprep.mubr.f32.mxu0 0.0
    %448 = vmatmul.mubr.f32.gmra.mxu0 %v381
    %v449 = vpop.f32.mrf.mxu0
    %v450 = vadd.f32 %v57, %v449
    %v451 = vpop.f32.mrf.mxu0
    %v452 = vadd.f32 %v61, %v451
    %453 = vdwg.mxu0
    %s454 = scalar_lea.vmem [#allocation2], 64
    %455 = vst [vmem:[%s454] sm:$0xff] %v450
    %456 = vst [vmem:[%s454 + $0x8] sm:$0xff] %v452
    %s457 = scalar_lea.vmem %s0, 40
    %v458 = vld [vmem:[%s457] sm:$0xff]
    %v460 = vsel %vm64, %v458, 0
    %462 = vmatprep.subr.mxu0 0.0
    %463 = vmatpush1.msra.mxu0 0.0
    %464 = vmatprep.subr.mxu0 0.0
    %465 = vmatpush1.msra.mxu0 0.0
    %466 = vmatprep.subr.mxu0 0.0
    %467 = vmatpush1.msra.mxu0 0.0
    %468 = vmatprep.subr.mxu0 0.0
    %469 = vmatpush1.msra.mxu0 0.0
    %470 = vmatprep.subr.mxu0 0.0
    %471 = vmatpush1.msra.mxu0 0.0
    %472 = vmatprep.subr.mxu0 0.0
    %473 = vmatpush1.msra.mxu0 0.0
    %474 = vmatprep.subr.mxu0 0.0
    %475 = vmatpush1.msra.mxu0 0.0
    %476 = vmatprep.subr.mxu0 0.0
    %477 = vmatpush1.msra.mxu0 0.0
    %478 = vmatprep.subr.mxu0 0.0
    %479 = vmatpush1.msra.mxu0 0.0
    %480 = vmatprep.subr.mxu0 0.0
    %481 = vmatpush1.msra.mxu0 0.0
    %482 = vmatprep.subr.mxu0 0.0
    %483 = vmatpush1.msra.mxu0 0.0
    %484 = vmatprep.subr.mxu0 0.0
    %485 = vmatpush1.msra.mxu0 0.0
    %486 = vmatprep.subr.mxu0 %v50
    %487 = vmatpush1.msra.mxu0 %v49
    %488 = vmatprep.subr.mxu0 %v48
    %489 = vmatpush1.msra.mxu0 %v47
    %490 = vmatprep.subr.mxu0 %v46
    %491 = vmatpush1.msra.mxu0 %v45
    %492 = vmatprep.subr.mxu0 %v44
    %493 = vmatpush1.msra.mxu0 %v43
    %494 = vmatprep.subr.mxu0 0.0
    %495 = vmatpush2.msra.mxu0 0.0
    %496 = vmatprep.subr.mxu0 0.0
    %497 = vmatpush2.msra.mxu0 0.0
    %498 = vmatprep.subr.mxu0 0.0
    %499 = vmatpush2.msra.mxu0 0.0
    %500 = vmatprep.subr.mxu0 0.0
    %501 = vmatpush2.msra.mxu0 0.0
    %502 = vmatprep.subr.mxu0 0.0
    %503 = vmatpush2.msra.mxu0 0.0
    %504 = vmatprep.subr.mxu0 0.0
    %505 = vmatpush2.msra.mxu0 0.0
    %506 = vmatprep.subr.mxu0 0.0
    %507 = vmatpush2.msra.mxu0 0.0
    %508 = vmatprep.subr.mxu0 0.0
    %509 = vmatpush2.msra.mxu0 0.0
    %510 = vmatprep.subr.mxu0 0.0
    %511 = vmatpush2.msra.mxu0 0.0
    %512 = vmatprep.subr.mxu0 0.0
    %513 = vmatpush2.msra.mxu0 0.0
    %514 = vmatprep.subr.mxu0 0.0
    %515 = vmatpush2.msra.mxu0 0.0
    %516 = vmatprep.subr.mxu0 0.0
    %517 = vmatpush2.msra.mxu0 0.0
    %518 = vmatprep.subr.mxu0 0.0
    %519 = vmatpush2.msra.mxu0 0.0
    %520 = vmatprep.subr.mxu0 0.0
    %521 = vmatpush2.msra.mxu0 0.0
    %522 = vmatprep.subr.mxu0 0.0
    %523 = vmatpush2.msra.mxu0 0.0
    %524 = vmatprep.subr.mxu0 0.0
    %525 = vmatpush2.msra.mxu0 0.0
    %526 = vmatprep.mubr.f32.mxu0 0.0
    %527 = vmatmul.mubr.f32.gmra.mxu0 %v460
    %v528 = vpop.f32.mrf.mxu0
    %v529 = vadd.f32 %v57, %v528
    %v530 = vpop.f32.mrf.mxu0
    %v531 = vadd.f32 %v61, %v530
    %532 = vdwg.mxu0
    %s533 = scalar_lea.vmem [#allocation2], 80
    %534 = vst [vmem:[%s533] sm:$0xff] %v529
    %535 = vst [vmem:[%s533 + $0x8] sm:$0xff] %v531
    %s536 = scalar_lea.vmem %s0, 48
    %v537 = vld [vmem:[%s536] sm:$0xff]
    %v539 = vsel %vm64, %v537, 0
    %541 = vmatprep.subr.mxu0 0.0
    %542 = vmatpush1.msra.mxu0 0.0
    %543 = vmatprep.subr.mxu0 0.0
    %544 = vmatpush1.msra.mxu0 0.0
    %545 = vmatprep.subr.mxu0 0.0
    %546 = vmatpush1.msra.mxu0 0.0
    %547 = vmatprep.subr.mxu0 0.0
    %548 = vmatpush1.msra.mxu0 0.0
    %549 = vmatprep.subr.mxu0 0.0
    %550 = vmatpush1.msra.mxu0 0.0
    %551 = vmatprep.subr.mxu0 0.0
    %552 = vmatpush1.msra.mxu0 0.0
    %553 = vmatprep.subr.mxu0 0.0
    %554 = vmatpush1.msra.mxu0 0.0
    %555 = vmatprep.subr.mxu0 0.0
    %556 = vmatpush1.msra.mxu0 0.0
    %557 = vmatprep.subr.mxu0 0.0
    %558 = vmatpush1.msra.mxu0 0.0
    %559 = vmatprep.subr.mxu0 0.0
    %560 = vmatpush1.msra.mxu0 0.0
    %561 = vmatprep.subr.mxu0 0.0
    %562 = vmatpush1.msra.mxu0 0.0
    %563 = vmatprep.subr.mxu0 0.0
    %564 = vmatpush1.msra.mxu0 0.0
    %565 = vmatprep.subr.mxu0 %v50
    %566 = vmatpush1.msra.mxu0 %v49
    %567 = vmatprep.subr.mxu0 %v48
    %568 = vmatpush1.msra.mxu0 %v47
    %569 = vmatprep.subr.mxu0 %v46
    %570 = vmatpush1.msra.mxu0 %v45
    %571 = vmatprep.subr.mxu0 %v44
    %572 = vmatpush1.msra.mxu0 %v43
    %573 = vmatprep.subr.mxu0 0.0
    %574 = vmatpush2.msra.mxu0 0.0
    %575 = vmatprep.subr.mxu0 0.0
    %576 = vmatpush2.msra.mxu0 0.0
    %577 = vmatprep.subr.mxu0 0.0
    %578 = vmatpush2.msra.mxu0 0.0
    %579 = vmatprep.subr.mxu0 0.0
    %580 = vmatpush2.msra.mxu0 0.0
    %581 = vmatprep.subr.mxu0 0.0
    %582 = vmatpush2.msra.mxu0 0.0
    %583 = vmatprep.subr.mxu0 0.0
    %584 = vmatpush2.msra.mxu0 0.0
    %585 = vmatprep.subr.mxu0 0.0
    %586 = vmatpush2.msra.mxu0 0.0
    %587 = vmatprep.subr.mxu0 0.0
    %588 = vmatpush2.msra.mxu0 0.0
    %589 = vmatprep.subr.mxu0 0.0
    %590 = vmatpush2.msra.mxu0 0.0
    %591 = vmatprep.subr.mxu0 0.0
    %592 = vmatpush2.msra.mxu0 0.0
    %593 = vmatprep.subr.mxu0 0.0
    %594 = vmatpush2.msra.mxu0 0.0
    %595 = vmatprep.subr.mxu0 0.0
    %596 = vmatpush2.msra.mxu0 0.0
    %597 = vmatprep.subr.mxu0 0.0
    %598 = vmatpush2.msra.mxu0 0.0
    %599 = vmatprep.subr.mxu0 0.0
    %600 = vmatpush2.msra.mxu0 0.0
    %601 = vmatprep.subr.mxu0 0.0
    %602 = vmatpush2.msra.mxu0 0.0
    %603 = vmatprep.subr.mxu0 0.0
    %604 = vmatpush2.msra.mxu0 0.0
    %605 = vmatprep.mubr.f32.mxu0 0.0
    %606 = vmatmul.mubr.f32.gmra.mxu0 %v539
    %v607 = vpop.f32.mrf.mxu0
    %v608 = vadd.f32 %v57, %v607
    %v609 = vpop.f32.mrf.mxu0
    %v610 = vadd.f32 %v61, %v609
    %611 = vdwg.mxu0
    %s612 = scalar_lea.vmem [#allocation2], 96
    %613 = vst [vmem:[%s612] sm:$0xff] %v608
    %614 = vst [vmem:[%s612 + $0x8] sm:$0xff] %v610
    %s615 = scalar_lea.vmem %s0, 56
    %v616 = vld [vmem:[%s615] sm:$0xff]
    %v618 = vsel %vm64, %v616, 0
    %620 = vmatprep.subr.mxu0 0.0
    %621 = vmatpush1.msra.mxu0 0.0
    %622 = vmatprep.subr.mxu0 0.0
    %623 = vmatpush1.msra.mxu0 0.0
    %624 = vmatprep.subr.mxu0 0.0
    %625 = vmatpush1.msra.mxu0 0.0
    %626 = vmatprep.subr.mxu0 0.0
    %627 = vmatpush1.msra.mxu0 0.0
    %628 = vmatprep.subr.mxu0 0.0
    %629 = vmatpush1.msra.mxu0 0.0
    %630 = vmatprep.subr.mxu0 0.0
    %631 = vmatpush1.msra.mxu0 0.0
    %632 = vmatprep.subr.mxu0 0.0
    %633 = vmatpush1.msra.mxu0 0.0
    %634 = vmatprep.subr.mxu0 0.0
    %635 = vmatpush1.msra.mxu0 0.0
    %636 = vmatprep.subr.mxu0 0.0
    %637 = vmatpush1.msra.mxu0 0.0
    %638 = vmatprep.subr.mxu0 0.0
    %639 = vmatpush1.msra.mxu0 0.0
    %640 = vmatprep.subr.mxu0 0.0
    %641 = vmatpush1.msra.mxu0 0.0
    %642 = vmatprep.subr.mxu0 0.0
    %643 = vmatpush1.msra.mxu0 0.0
    %644 = vmatprep.subr.mxu0 %v50
    %645 = vmatpush1.msra.mxu0 %v49
    %646 = vmatprep.subr.mxu0 %v48
    %647 = vmatpush1.msra.mxu0 %v47
    %648 = vmatprep.subr.mxu0 %v46
    %649 = vmatpush1.msra.mxu0 %v45
    %650 = vmatprep.subr.mxu0 %v44
    %651 = vmatpush1.msra.mxu0 %v43
    %652 = vmatprep.subr.mxu0 0.0
    %653 = vmatpush2.msra.mxu0 0.0
    %654 = vmatprep.subr.mxu0 0.0
    %655 = vmatpush2.msra.mxu0 0.0
    %656 = vmatprep.subr.mxu0 0.0
    %657 = vmatpush2.msra.mxu0 0.0
    %658 = vmatprep.subr.mxu0 0.0
    %659 = vmatpush2.msra.mxu0 0.0
    %660 = vmatprep.subr.mxu0 0.0
    %661 = vmatpush2.msra.mxu0 0.0
    %662 = vmatprep.subr.mxu0 0.0
    %663 = vmatpush2.msra.mxu0 0.0
    %664 = vmatprep.subr.mxu0 0.0
    %665 = vmatpush2.msra.mxu0 0.0
    %666 = vmatprep.subr.mxu0 0.0
    %667 = vmatpush2.msra.mxu0 0.0
    %668 = vmatprep.subr.mxu0 0.0
    %669 = vmatpush2.msra.mxu0 0.0
    %670 = vmatprep.subr.mxu0 0.0
    %671 = vmatpush2.msra.mxu0 0.0
    %672 = vmatprep.subr.mxu0 0.0
    %673 = vmatpush2.msra.mxu0 0.0
    %674 = vmatprep.subr.mxu0 0.0
    %675 = vmatpush2.msra.mxu0 0.0
    %676 = vmatprep.subr.mxu0 0.0
    %677 = vmatpush2.msra.mxu0 0.0
    %678 = vmatprep.subr.mxu0 0.0
    %679 = vmatpush2.msra.mxu0 0.0
    %680 = vmatprep.subr.mxu0 0.0
    %681 = vmatpush2.msra.mxu0 0.0
    %682 = vmatprep.subr.mxu0 0.0
    %683 = vmatpush2.msra.mxu0 0.0
    %684 = vmatprep.mubr.f32.mxu0 0.0
    %685 = vmatmul.mubr.f32.gmra.mxu0 %v618
    %v686 = vpop.f32.mrf.mxu0
    %v687 = vadd.f32 %v57, %v686
    %v688 = vpop.f32.mrf.mxu0
    %v689 = vadd.f32 %v61, %v688
    %690 = vdwg.mxu0
    %s691 = scalar_lea.vmem [#allocation2], 112
    %692 = vst [vmem:[%s691] sm:$0xff] %v687
    %693 = vst [vmem:[%s691 + $0x8] sm:$0xff] %v689
    %v694 = vld [vmem:[%s3] sm:$0xff]
    %v695 = vld [vmem:[%s3 + $0x8] sm:$0xff]
    %v696 = vld [vmem:[%s3 + $0x10] sm:$0xff]
    %v697 = vld [vmem:[%s3 + $0x18] sm:$0xff]
    %v698 = vld [vmem:[%s3 + $0x20] sm:$0xff]
    %v699 = vld [vmem:[%s3 + $0x28] sm:$0xff]
    %v700 = vld [vmem:[%s3 + $0x30] sm:$0xff]
    %v701 = vld [vmem:[%s3 + $0x38] sm:$0xff]
    %v702 = vld [vmem:[%s3 + $0x40] sm:$0xff]
    %v703 = vld [vmem:[%s3 + $0x48] sm:$0xff]
    %v704 = vld [vmem:[%s3 + $0x50] sm:$0xff]
    %v705 = vld [vmem:[%s3 + $0x58] sm:$0xff]
    %v706 = vld [vmem:[%s3 + $0x60] sm:$0xff]
    %v707 = vld [vmem:[%s3 + $0x68] sm:$0xff]
    %v708 = vld [vmem:[%s3 + $0x70] sm:$0xff]
    %v709 = vld [vmem:[%s3 + $0x78] sm:$0xff]
    %vm710 = vcmask 523264
    %v712 = vsel %vm710, 0.0, 0
    %714 = vmatprep.subr.mxu0 0.0
    %715 = vmatpush1.msra.mxu0 0.0
    %716 = vmatprep.subr.mxu0 0.0
    %717 = vmatpush1.msra.mxu0 0.0
    %718 = vmatprep.subr.mxu0 0.0
    %719 = vmatpush1.msra.mxu0 0.0
    %720 = vmatprep.subr.mxu0 0.0
    %721 = vmatpush1.msra.mxu0 0.0
    %722 = vmatprep.subr.mxu0 0.0
    %723 = vmatpush1.msra.mxu0 0.0
    %724 = vmatprep.subr.mxu0 0.0
    %725 = vmatpush1.msra.mxu0 0.0
    %726 = vmatprep.subr.mxu0 0.0
    %727 = vmatpush1.msra.mxu0 0.0
    %728 = vmatprep.subr.mxu0 0.0
    %729 = vmatpush1.msra.mxu0 0.0
    %730 = vmatprep.subr.mxu0 %v709
    %731 = vmatpush1.msra.mxu0 %v708
    %732 = vmatprep.subr.mxu0 %v707
    %733 = vmatpush1.msra.mxu0 %v706
    %734 = vmatprep.subr.mxu0 %v705
    %735 = vmatpush1.msra.mxu0 %v704
    %736 = vmatprep.subr.mxu0 %v703
    %737 = vmatpush1.msra.mxu0 %v702
    %738 = vmatprep.subr.mxu0 %v701
    %739 = vmatpush1.msra.mxu0 %v700
    %740 = vmatprep.subr.mxu0 %v699
    %741 = vmatpush1.msra.mxu0 %v698
    %742 = vmatprep.subr.mxu0 %v697
    %743 = vmatpush1.msra.mxu0 %v696
    %744 = vmatprep.subr.mxu0 %v695
    %745 = vmatpush1.msra.mxu0 %v694
    %746 = vmatprep.subr.mxu0 0.0
    %747 = vmatpush2.msra.mxu0 0.0
    %748 = vmatprep.subr.mxu0 0.0
    %749 = vmatpush2.msra.mxu0 0.0
    %750 = vmatprep.subr.mxu0 0.0
    %751 = vmatpush2.msra.mxu0 0.0
    %752 = vmatprep.subr.mxu0 0.0
    %753 = vmatpush2.msra.mxu0 0.0
    %754 = vmatprep.subr.mxu0 0.0
    %755 = vmatpush2.msra.mxu0 0.0
    %756 = vmatprep.subr.mxu0 0.0
    %757 = vmatpush2.msra.mxu0 0.0
    %758 = vmatprep.subr.mxu0 0.0
    %759 = vmatpush2.msra.mxu0 0.0
    %760 = vmatprep.subr.mxu0 0.0
    %761 = vmatpush2.msra.mxu0 0.0
    %762 = vmatprep.subr.mxu0 0.0
    %763 = vmatpush2.msra.mxu0 0.0
    %764 = vmatprep.subr.mxu0 0.0
    %765 = vmatpush2.msra.mxu0 0.0
    %766 = vmatprep.subr.mxu0 0.0
    %767 = vmatpush2.msra.mxu0 0.0
    %768 = vmatprep.subr.mxu0 0.0
    %769 = vmatpush2.msra.mxu0 0.0
    %770 = vmatprep.subr.mxu0 0.0
    %771 = vmatpush2.msra.mxu0 0.0
    %772 = vmatprep.subr.mxu0 0.0
    %773 = vmatpush2.msra.mxu0 0.0
    %774 = vmatprep.subr.mxu0 0.0
    %775 = vmatpush2.msra.mxu0 0.0
    %776 = vmatprep.subr.mxu0 0.0
    %777 = vmatpush2.msra.mxu0 0.0
    %778 = vmatprep.mubr.f32.mxu0 0.0
    %779 = vmatmul.mubr.f32.gmra.mxu0 %v712
    %v780 = vpop.f32.mrf.mxu0
    %v781 = vadd.f32 0.0, %v780
    %v782 = vpop.f32.mrf.mxu0
    %v783 = vadd.f32 0.0, %v782
    %784 = vdwg.mxu0
    %v785 = vld [vmem:[#allocation2] sm:$0xff]
    %v786 = vadd.f32 %v785, %v781
    %v787 = vld [vmem:[%s691 + $0x8] sm:$0xff]
    %v788 = vadd.f32 %v787, %v783
    %v789 = vxor.u32 %v786, 2147483648
    %v790 = vmul.f32 %v789, 1.442695
    %v791 = vpow.pop %v790
    %v792 = vadd.f32 %v791, 1.0
    %v793 = vrcp.pop %v792
    %v794 = vmul.f32 1.0, %v793
    %v795 = vtanh.pop %v786
    %v796 = vxor.u32 %v788, 2147483648
    %v797 = vmul.f32 %v796, 1.442695
    %v798 = vpow.pop %v797
    %v799 = vadd.f32 %v798, 1.0
    %v800 = vrcp.pop %v799
    %v801 = vmul.f32 1.0, %v800
    %v802 = vtanh.pop %v788
    %v803 = vmul.f32 %v794, 0.0
    %805 = vrot.lane.b32.xlu0 %v795, 32
    %v806 = vpop.permute.xlu0 %805
    %v808 = vmul.f32 %v794, %v806
    %810 = vrot.lane.b32.xlu0 %v808, 32
    %v811 = vpop.permute.xlu0 %810
    %v813 = vadd.f32 %v803, %v811
    %v814 = vmul.f32 %v801, 0.0
    %816 = vrot.lane.b32.xlu0 %v802, 32
    %v817 = vpop.permute.xlu0 %816
    %v819 = vmul.f32 %v801, %v817
    %821 = vrot.lane.b32.xlu0 %v819, 32
    %v822 = vpop.permute.xlu0 %821
    %v824 = vadd.f32 %v814, %v822
    %v825 = vtanh.pop %v813
    %827 = vrot.lane.b32.xlu0 %v825, 32
    %v828 = vpop.permute.xlu0 %827
    %v830 = vmul.f32 %v794, %v828
    %v831 = vtanh.pop %v824
    %833 = vrot.lane.b32.xlu0 %v831, 32
    %v834 = vpop.permute.xlu0 %833
    %v836 = vmul.f32 %v801, %v834
    %838 = vrot.lane.b32.xlu0 %v830, 64
    %v839 = vpop.permute.xlu0 %838
    %841 = vst.msk [vmem:[#allocation3] sm:$0xff] %vm64, %v839
    %843 = vrot.lane.b32.xlu0 %v836, 96
    %v844 = vpop.permute.xlu0 %843
    %s846 = scalar_lea.vmem [#allocation3], 56
    %vm847 = vcmask 523520
    %848 = vst.msk [vmem:[%s846] sm:$0xff] %vm847, %v844
    %v849 = vsel %vm64, %v839, %v844
    %v851 = vsel %vm710, %v849, 0
    %853 = vmatprep.subr.mxu0 0.0
    %854 = vmatpush1.msra.mxu0 0.0
    %855 = vmatprep.subr.mxu0 0.0
    %856 = vmatpush1.msra.mxu0 0.0
    %857 = vmatprep.subr.mxu0 0.0
    %858 = vmatpush1.msra.mxu0 0.0
    %859 = vmatprep.subr.mxu0 0.0
    %860 = vmatpush1.msra.mxu0 0.0
    %861 = vmatprep.subr.mxu0 0.0
    %862 = vmatpush1.msra.mxu0 0.0
    %863 = vmatprep.subr.mxu0 0.0
    %864 = vmatpush1.msra.mxu0 0.0
    %865 = vmatprep.subr.mxu0 0.0
    %866 = vmatpush1.msra.mxu0 0.0
    %867 = vmatprep.subr.mxu0 0.0
    %868 = vmatpush1.msra.mxu0 0.0
    %869 = vmatprep.subr.mxu0 %v709
    %870 = vmatpush1.msra.mxu0 %v708
    %871 = vmatprep.subr.mxu0 %v707
    %872 = vmatpush1.msra.mxu0 %v706
    %873 = vmatprep.subr.mxu0 %v705
    %874 = vmatpush1.msra.mxu0 %v704
    %875 = vmatprep.subr.mxu0 %v703
    %876 = vmatpush1.msra.mxu0 %v702
    %877 = vmatprep.subr.mxu0 %v701
    %878 = vmatpush1.msra.mxu0 %v700
    %879 = vmatprep.subr.mxu0 %v699
    %880 = vmatpush1.msra.mxu0 %v698
    %881 = vmatprep.subr.mxu0 %v697
    %882 = vmatpush1.msra.mxu0 %v696
    %883 = vmatprep.subr.mxu0 %v695
    %884 = vmatpush1.msra.mxu0 %v694
    %885 = vmatprep.subr.mxu0 0.0
    %886 = vmatpush2.msra.mxu0 0.0
    %887 = vmatprep.subr.mxu0 0.0
    %888 = vmatpush2.msra.mxu0 0.0
    %889 = vmatprep.subr.mxu0 0.0
    %890 = vmatpush2.msra.mxu0 0.0
    %891 = vmatprep.subr.mxu0 0.0
    %892 = vmatpush2.msra.mxu0 0.0
    %893 = vmatprep.subr.mxu0 0.0
    %894 = vmatpush2.msra.mxu0 0.0
    %895 = vmatprep.subr.mxu0 0.0
    %896 = vmatpush2.msra.mxu0 0.0
    %897 = vmatprep.subr.mxu0 0.0
    %898 = vmatpush2.msra.mxu0 0.0
    %899 = vmatprep.subr.mxu0 0.0
    %900 = vmatpush2.msra.mxu0 0.0
    %901 = vmatprep.subr.mxu0 0.0
    %902 = vmatpush2.msra.mxu0 0.0
    %903 = vmatprep.subr.mxu0 0.0
    %904 = vmatpush2.msra.mxu0 0.0
    %905 = vmatprep.subr.mxu0 0.0
    %906 = vmatpush2.msra.mxu0 0.0
    %907 = vmatprep.subr.mxu0 0.0
    %908 = vmatpush2.msra.mxu0 0.0
    %909 = vmatprep.subr.mxu0 0.0
    %910 = vmatpush2.msra.mxu0 0.0
    %911 = vmatprep.subr.mxu0 0.0
    %912 = vmatpush2.msra.mxu0 0.0
    %913 = vmatprep.subr.mxu0 0.0
    %914 = vmatpush2.msra.mxu0 0.0
    %915 = vmatprep.subr.mxu0 0.0
    %916 = vmatpush2.msra.mxu0 0.0
    %917 = vmatprep.mubr.f32.mxu0 0.0
    %918 = vmatmul.mubr.f32.gmra.mxu0 %v851
    %v919 = vpop.f32.mrf.mxu0
    %v920 = vadd.f32 0.0, %v919
    %v921 = vpop.f32.mrf.mxu0
    %v922 = vadd.f32 0.0, %v921
    %923 = vdwg.mxu0
    %v924 = vld [vmem:[%s217] sm:$0xff]
    %v925 = vadd.f32 %v924, %v920
    %v926 = vld [vmem:[%s612 + $0x8] sm:$0xff]
    %v927 = vadd.f32 %v926, %v922
    %v928 = vxor.u32 %v925, 2147483648
    %v929 = vmul.f32 %v928, 1.442695
    %v930 = vpow.pop %v929
    %v931 = vadd.f32 %v930, 1.0
    %v932 = vrcp.pop %v931
    %v933 = vmul.f32 1.0, %v932
    %v934 = vtanh.pop %v925
    %v935 = vxor.u32 %v927, 2147483648
    %v936 = vmul.f32 %v935, 1.442695
    %v937 = vpow.pop %v936
    %v938 = vadd.f32 %v937, 1.0
    %v939 = vrcp.pop %v938
    %v940 = vmul.f32 1.0, %v939
    %v941 = vtanh.pop %v927
    %v942 = vmul.f32 %v933, %v813
    %944 = vrot.lane.b32.xlu0 %v934, 32
    %v945 = vpop.permute.xlu0 %944
    %v947 = vmul.f32 %v933, %v945
    %949 = vrot.lane.b32.xlu0 %v947, 32
    %v950 = vpop.permute.xlu0 %949
    %v952 = vadd.f32 %v942, %v950
    %v953 = vmul.f32 %v940, %v824
    %955 = vrot.lane.b32.xlu0 %v941, 32
    %v956 = vpop.permute.xlu0 %955
    %v958 = vmul.f32 %v940, %v956
    %960 = vrot.lane.b32.xlu0 %v958, 32
    %v961 = vpop.permute.xlu0 %960
    %v963 = vadd.f32 %v953, %v961
    %v964 = vtanh.pop %v952
    %966 = vrot.lane.b32.xlu0 %v964, 32
    %v967 = vpop.permute.xlu0 %966
    %v969 = vmul.f32 %v933, %v967
    %v970 = vtanh.pop %v963
    %972 = vrot.lane.b32.xlu0 %v970, 32
    %v973 = vpop.permute.xlu0 %972
    %v975 = vmul.f32 %v940, %v973
    %977 = vrot.lane.b32.xlu0 %v969, 64
    %v978 = vpop.permute.xlu0 %977
    %s980 = scalar_lea.vmem [#allocation3], 8
    %981 = vst.msk [vmem:[%s980] sm:$0xff] %vm64, %v978
    %983 = vrot.lane.b32.xlu0 %v975, 96
    %v984 = vpop.permute.xlu0 %983
    %s986 = scalar_lea.vmem [#allocation3], 48
    %987 = vst.msk [vmem:[%s986] sm:$0xff] %vm847, %v984
    %v988 = vsel %vm64, %v978, %v984
    %v990 = vsel %vm710, %v988, 0
    %992 = vmatprep.subr.mxu0 0.0
    %993 = vmatpush1.msra.mxu0 0.0
    %994 = vmatprep.subr.mxu0 0.0
    %995 = vmatpush1.msra.mxu0 0.0
    %996 = vmatprep.subr.mxu0 0.0
    %997 = vmatpush1.msra.mxu0 0.0
    %998 = vmatprep.subr.mxu0 0.0
    %999 = vmatpush1.msra.mxu0 0.0
    %1000 = vmatprep.subr.mxu0 0.0
    %1001 = vmatpush1.msra.mxu0 0.0
    %1002 = vmatprep.subr.mxu0 0.0
    %1003 = vmatpush1.msra.mxu0 0.0
    %1004 = vmatprep.subr.mxu0 0.0
    %1005 = vmatpush1.msra.mxu0 0.0
    %1006 = vmatprep.subr.mxu0 0.0
    %1007 = vmatpush1.msra.mxu0 0.0
    %1008 = vmatprep.subr.mxu0 %v709
    %1009 = vmatpush1.msra.mxu0 %v708
    %1010 = vmatprep.subr.mxu0 %v707
    %1011 = vmatpush1.msra.mxu0 %v706
    %1012 = vmatprep.subr.mxu0 %v705
    %1013 = vmatpush1.msra.mxu0 %v704
    %1014 = vmatprep.subr.mxu0 %v703
    %1015 = vmatpush1.msra.mxu0 %v702
    %1016 = vmatprep.subr.mxu0 %v701
    %1017 = vmatpush1.msra.mxu0 %v700
    %1018 = vmatprep.subr.mxu0 %v699
    %1019 = vmatpush1.msra.mxu0 %v698
    %1020 = vmatprep.subr.mxu0 %v697
    %1021 = vmatpush1.msra.mxu0 %v696
    %1022 = vmatprep.subr.mxu0 %v695
    %1023 = vmatpush1.msra.mxu0 %v694
    %1024 = vmatprep.subr.mxu0 0.0
    %1025 = vmatpush2.msra.mxu0 0.0
    %1026 = vmatprep.subr.mxu0 0.0
    %1027 = vmatpush2.msra.mxu0 0.0
    %1028 = vmatprep.subr.mxu0 0.0
    %1029 = vmatpush2.msra.mxu0 0.0
    %1030 = vmatprep.subr.mxu0 0.0
    %1031 = vmatpush2.msra.mxu0 0.0
    %1032 = vmatprep.subr.mxu0 0.0
    %1033 = vmatpush2.msra.mxu0 0.0
    %1034 = vmatprep.subr.mxu0 0.0
    %1035 = vmatpush2.msra.mxu0 0.0
    %1036 = vmatprep.subr.mxu0 0.0
    %1037 = vmatpush2.msra.mxu0 0.0
    %1038 = vmatprep.subr.mxu0 0.0
    %1039 = vmatpush2.msra.mxu0 0.0
    %1040 = vmatprep.subr.mxu0 0.0
    %1041 = vmatpush2.msra.mxu0 0.0
    %1042 = vmatprep.subr.mxu0 0.0
    %1043 = vmatpush2.msra.mxu0 0.0
    %1044 = vmatprep.subr.mxu0 0.0
    %1045 = vmatpush2.msra.mxu0 0.0
    %1046 = vmatprep.subr.mxu0 0.0
    %1047 = vmatpush2.msra.mxu0 0.0
    %1048 = vmatprep.subr.mxu0 0.0
    %1049 = vmatpush2.msra.mxu0 0.0
    %1050 = vmatprep.subr.mxu0 0.0
    %1051 = vmatpush2.msra.mxu0 0.0
    %1052 = vmatprep.subr.mxu0 0.0
    %1053 = vmatpush2.msra.mxu0 0.0
    %1054 = vmatprep.subr.mxu0 0.0
    %1055 = vmatpush2.msra.mxu0 0.0
    %1056 = vmatprep.mubr.f32.mxu0 0.0
    %1057 = vmatmul.mubr.f32.gmra.mxu0 %v990
    %v1058 = vpop.f32.mrf.mxu0
    %v1059 = vadd.f32 0.0, %v1058
    %v1060 = vpop.f32.mrf.mxu0
    %v1061 = vadd.f32 0.0, %v1060
    %1062 = vdwg.mxu0
    %v1063 = vld [vmem:[%s296] sm:$0xff]
    %v1064 = vadd.f32 %v1063, %v1059
    %v1065 = vld [vmem:[%s533 + $0x8] sm:$0xff]
    %v1066 = vadd.f32 %v1065, %v1061
    %v1067 = vxor.u32 %v1064, 2147483648
    %v1068 = vmul.f32 %v1067, 1.442695
    %v1069 = vpow.pop %v1068
    %v1070 = vadd.f32 %v1069, 1.0
    %v1071 = vrcp.pop %v1070
    %v1072 = vmul.f32 1.0, %v1071
    %v1073 = vtanh.pop %v1064
    %v1074 = vxor.u32 %v1066, 2147483648
    %v1075 = vmul.f32 %v1074, 1.442695
    %v1076 = vpow.pop %v1075
    %v1077 = vadd.f32 %v1076, 1.0
    %v1078 = vrcp.pop %v1077
    %v1079 = vmul.f32 1.0, %v1078
    %v1080 = vtanh.pop %v1066
    %v1081 = vmul.f32 %v1072, %v952
    %1083 = vrot.lane.b32.xlu0 %v1073, 32
    %v1084 = vpop.permute.xlu0 %1083
    %v1086 = vmul.f32 %v1072, %v1084
    %1088 = vrot.lane.b32.xlu0 %v1086, 32
    %v1089 = vpop.permute.xlu0 %1088
    %v1091 = vadd.f32 %v1081, %v1089
    %v1092 = vmul.f32 %v1079, %v963
    %1094 = vrot.lane.b32.xlu0 %v1080, 32
    %v1095 = vpop.permute.xlu0 %1094
    %v1097 = vmul.f32 %v1079, %v1095
    %1099 = vrot.lane.b32.xlu0 %v1097, 32
    %v1100 = vpop.permute.xlu0 %1099
    %v1102 = vadd.f32 %v1092, %v1100
    %v1103 = vtanh.pop %v1091
    %1105 = vrot.lane.b32.xlu0 %v1103, 32
    %v1106 = vpop.permute.xlu0 %1105
    %v1108 = vmul.f32 %v1072, %v1106
    %v1109 = vtanh.pop %v1102
    %1111 = vrot.lane.b32.xlu0 %v1109, 32
    %v1112 = vpop.permute.xlu0 %1111
    %v1114 = vmul.f32 %v1079, %v1112
    %1116 = vrot.lane.b32.xlu0 %v1108, 64
    %v1117 = vpop.permute.xlu0 %1116
    %s1119 = scalar_lea.vmem [#allocation3], 16
    %1120 = vst.msk [vmem:[%s1119] sm:$0xff] %vm64, %v1117
    %1122 = vrot.lane.b32.xlu0 %v1114, 96
    %v1123 = vpop.permute.xlu0 %1122
    %s1125 = scalar_lea.vmem [#allocation3], 40
    %1126 = vst.msk [vmem:[%s1125] sm:$0xff] %vm847, %v1123
    %v1127 = vsel %vm64, %v1117, %v1123
    %v1129 = vsel %vm710, %v1127, 0
    %1131 = vmatprep.subr.mxu0 0.0
    %1132 = vmatpush1.msra.mxu0 0.0
    %1133 = vmatprep.subr.mxu0 0.0
    %1134 = vmatpush1.msra.mxu0 0.0
    %1135 = vmatprep.subr.mxu0 0.0
    %1136 = vmatpush1.msra.mxu0 0.0
    %1137 = vmatprep.subr.mxu0 0.0
    %1138 = vmatpush1.msra.mxu0 0.0
    %1139 = vmatprep.subr.mxu0 0.0
    %1140 = vmatpush1.msra.mxu0 0.0
    %1141 = vmatprep.subr.mxu0 0.0
    %1142 = vmatpush1.msra.mxu0 0.0
    %1143 = vmatprep.subr.mxu0 0.0
    %1144 = vmatpush1.msra.mxu0 0.0
    %1145 = vmatprep.subr.mxu0 0.0
    %1146 = vmatpush1.msra.mxu0 0.0
    %1147 = vmatprep.subr.mxu0 %v709
    %1148 = vmatpush1.msra.mxu0 %v708
    %1149 = vmatprep.subr.mxu0 %v707
    %1150 = vmatpush1.msra.mxu0 %v706
    %1151 = vmatprep.subr.mxu0 %v705
    %1152 = vmatpush1.msra.mxu0 %v704
    %1153 = vmatprep.subr.mxu0 %v703
    %1154 = vmatpush1.msra.mxu0 %v702
    %1155 = vmatprep.subr.mxu0 %v701
    %1156 = vmatpush1.msra.mxu0 %v700
    %1157 = vmatprep.subr.mxu0 %v699
    %1158 = vmatpush1.msra.mxu0 %v698
    %1159 = vmatprep.subr.mxu0 %v697
    %1160 = vmatpush1.msra.mxu0 %v696
    %1161 = vmatprep.subr.mxu0 %v695
    %1162 = vmatpush1.msra.mxu0 %v694
    %1163 = vmatprep.subr.mxu0 0.0
    %1164 = vmatpush2.msra.mxu0 0.0
    %1165 = vmatprep.subr.mxu0 0.0
    %1166 = vmatpush2.msra.mxu0 0.0
    %1167 = vmatprep.subr.mxu0 0.0
    %1168 = vmatpush2.msra.mxu0 0.0
    %1169 = vmatprep.subr.mxu0 0.0
    %1170 = vmatpush2.msra.mxu0 0.0
    %1171 = vmatprep.subr.mxu0 0.0
    %1172 = vmatpush2.msra.mxu0 0.0
    %1173 = vmatprep.subr.mxu0 0.0
    %1174 = vmatpush2.msra.mxu0 0.0
    %1175 = vmatprep.subr.mxu0 0.0
    %1176 = vmatpush2.msra.mxu0 0.0
    %1177 = vmatprep.subr.mxu0 0.0
    %1178 = vmatpush2.msra.mxu0 0.0
    %1179 = vmatprep.subr.mxu0 0.0
    %1180 = vmatpush2.msra.mxu0 0.0
    %1181 = vmatprep.subr.mxu0 0.0
    %1182 = vmatpush2.msra.mxu0 0.0
    %1183 = vmatprep.subr.mxu0 0.0
    %1184 = vmatpush2.msra.mxu0 0.0
    %1185 = vmatprep.subr.mxu0 0.0
    %1186 = vmatpush2.msra.mxu0 0.0
    %1187 = vmatprep.subr.mxu0 0.0
    %1188 = vmatpush2.msra.mxu0 0.0
    %1189 = vmatprep.subr.mxu0 0.0
    %1190 = vmatpush2.msra.mxu0 0.0
    %1191 = vmatprep.subr.mxu0 0.0
    %1192 = vmatpush2.msra.mxu0 0.0
    %1193 = vmatprep.subr.mxu0 0.0
    %1194 = vmatpush2.msra.mxu0 0.0
    %1195 = vmatprep.mubr.f32.mxu0 0.0
    %1196 = vmatmul.mubr.f32.gmra.mxu0 %v1129
    %v1197 = vpop.f32.mrf.mxu0
    %v1198 = vadd.f32 0.0, %v1197
    %v1199 = vpop.f32.mrf.mxu0
    %v1200 = vadd.f32 0.0, %v1199
    %1201 = vdwg.mxu0
    %v1202 = vld [vmem:[%s375] sm:$0xff]
    %v1203 = vadd.f32 %v1202, %v1198
    %v1204 = vld [vmem:[%s454 + $0x8] sm:$0xff]
    %v1205 = vadd.f32 %v1204, %v1200
    %v1206 = vxor.u32 %v1203, 2147483648
    %v1207 = vmul.f32 %v1206, 1.442695
    %v1208 = vpow.pop %v1207
    %v1209 = vadd.f32 %v1208, 1.0
    %v1210 = vrcp.pop %v1209
    %v1211 = vmul.f32 1.0, %v1210
    %v1212 = vtanh.pop %v1203
    %v1213 = vxor.u32 %v1205, 2147483648
    %v1214 = vmul.f32 %v1213, 1.442695
    %v1215 = vpow.pop %v1214
    %v1216 = vadd.f32 %v1215, 1.0
    %v1217 = vrcp.pop %v1216
    %v1218 = vmul.f32 1.0, %v1217
    %v1219 = vtanh.pop %v1205
    %v1220 = vmul.f32 %v1211, %v1091
    %1222 = vrot.lane.b32.xlu0 %v1212, 32
    %v1223 = vpop.permute.xlu0 %1222
    %v1225 = vmul.f32 %v1211, %v1223
    %1227 = vrot.lane.b32.xlu0 %v1225, 32
    %v1228 = vpop.permute.xlu0 %1227
    %v1230 = vadd.f32 %v1220, %v1228
    %v1231 = vmul.f32 %v1218, %v1102
    %1233 = vrot.lane.b32.xlu0 %v1219, 32
    %v1234 = vpop.permute.xlu0 %1233
    %v1236 = vmul.f32 %v1218, %v1234
    %1238 = vrot.lane.b32.xlu0 %v1236, 32
    %v1239 = vpop.permute.xlu0 %1238
    %v1241 = vadd.f32 %v1231, %v1239
    %v1242 = vtanh.pop %v1230
    %1244 = vrot.lane.b32.xlu0 %v1242, 32
    %v1245 = vpop.permute.xlu0 %1244
    %v1247 = vmul.f32 %v1211, %v1245
    %v1248 = vtanh.pop %v1241
    %1250 = vrot.lane.b32.xlu0 %v1248, 32
    %v1251 = vpop.permute.xlu0 %1250
    %v1253 = vmul.f32 %v1218, %v1251
    %1255 = vrot.lane.b32.xlu0 %v1247, 64
    %v1256 = vpop.permute.xlu0 %1255
    %s1258 = scalar_lea.vmem [#allocation3], 24
    %1259 = vst.msk [vmem:[%s1258] sm:$0xff] %vm64, %v1256
    %1261 = vrot.lane.b32.xlu0 %v1253, 96
    %v1262 = vpop.permute.xlu0 %1261
    %s1264 = scalar_lea.vmem [#allocation3], 32
    %1265 = vst.msk [vmem:[%s1264] sm:$0xff] %vm847, %v1262
    %v1266 = vsel %vm64, %v1256, %v1262
    %v1268 = vsel %vm710, %v1266, 0
    %1270 = vmatprep.subr.mxu0 0.0
    %1271 = vmatpush1.msra.mxu0 0.0
    %1272 = vmatprep.subr.mxu0 0.0
    %1273 = vmatpush1.msra.mxu0 0.0
    %1274 = vmatprep.subr.mxu0 0.0
    %1275 = vmatpush1.msra.mxu0 0.0
    %1276 = vmatprep.subr.mxu0 0.0
    %1277 = vmatpush1.msra.mxu0 0.0
    %1278 = vmatprep.subr.mxu0 0.0
    %1279 = vmatpush1.msra.mxu0 0.0
    %1280 = vmatprep.subr.mxu0 0.0
    %1281 = vmatpush1.msra.mxu0 0.0
    %1282 = vmatprep.subr.mxu0 0.0
    %1283 = vmatpush1.msra.mxu0 0.0
    %1284 = vmatprep.subr.mxu0 0.0
    %1285 = vmatpush1.msra.mxu0 0.0
    %1286 = vmatprep.subr.mxu0 %v709
    %1287 = vmatpush1.msra.mxu0 %v708
    %1288 = vmatprep.subr.mxu0 %v707
    %1289 = vmatpush1.msra.mxu0 %v706
    %1290 = vmatprep.subr.mxu0 %v705
    %1291 = vmatpush1.msra.mxu0 %v704
    %1292 = vmatprep.subr.mxu0 %v703
    %1293 = vmatpush1.msra.mxu0 %v702
    %1294 = vmatprep.subr.mxu0 %v701
    %1295 = vmatpush1.msra.mxu0 %v700
    %1296 = vmatprep.subr.mxu0 %v699
    %1297 = vmatpush1.msra.mxu0 %v698
    %1298 = vmatprep.subr.mxu0 %v697
    %1299 = vmatpush1.msra.mxu0 %v696
    %1300 = vmatprep.subr.mxu0 %v695
    %1301 = vmatpush1.msra.mxu0 %v694
    %1302 = vmatprep.subr.mxu0 0.0
    %1303 = vmatpush2.msra.mxu0 0.0
    %1304 = vmatprep.subr.mxu0 0.0
    %1305 = vmatpush2.msra.mxu0 0.0
    %1306 = vmatprep.subr.mxu0 0.0
    %1307 = vmatpush2.msra.mxu0 0.0
    %1308 = vmatprep.subr.mxu0 0.0
    %1309 = vmatpush2.msra.mxu0 0.0
    %1310 = vmatprep.subr.mxu0 0.0
    %1311 = vmatpush2.msra.mxu0 0.0
    %1312 = vmatprep.subr.mxu0 0.0
    %1313 = vmatpush2.msra.mxu0 0.0
    %1314 = vmatprep.subr.mxu0 0.0
    %1315 = vmatpush2.msra.mxu0 0.0
    %1316 = vmatprep.subr.mxu0 0.0
    %1317 = vmatpush2.msra.mxu0 0.0
    %1318 = vmatprep.subr.mxu0 0.0
    %1319 = vmatpush2.msra.mxu0 0.0
    %1320 = vmatprep.subr.mxu0 0.0
    %1321 = vmatpush2.msra.mxu0 0.0
    %1322 = vmatprep.subr.mxu0 0.0
    %1323 = vmatpush2.msra.mxu0 0.0
    %1324 = vmatprep.subr.mxu0 0.0
    %1325 = vmatpush2.msra.mxu0 0.0
    %1326 = vmatprep.subr.mxu0 0.0
    %1327 = vmatpush2.msra.mxu0 0.0
    %1328 = vmatprep.subr.mxu0 0.0
    %1329 = vmatpush2.msra.mxu0 0.0
    %1330 = vmatprep.subr.mxu0 0.0
    %1331 = vmatpush2.msra.mxu0 0.0
    %1332 = vmatprep.subr.mxu0 0.0
    %1333 = vmatpush2.msra.mxu0 0.0
    %1334 = vmatprep.mubr.f32.mxu0 0.0
    %1335 = vmatmul.mubr.f32.gmra.mxu0 %v1268
    %v1336 = vpop.f32.mrf.mxu0
    %v1337 = vadd.f32 0.0, %v1336
    %v1338 = vpop.f32.mrf.mxu0
    %v1339 = vadd.f32 0.0, %v1338
    %1340 = vdwg.mxu0
    %v1341 = vld [vmem:[%s454] sm:$0xff]
    %v1342 = vadd.f32 %v1341, %v1337
    %v1343 = vld [vmem:[%s375 + $0x8] sm:$0xff]
    %v1344 = vadd.f32 %v1343, %v1339
    %v1345 = vxor.u32 %v1342, 2147483648
    %v1346 = vmul.f32 %v1345, 1.442695
    %v1347 = vpow.pop %v1346
    %v1348 = vadd.f32 %v1347, 1.0
    %v1349 = vrcp.pop %v1348
    %v1350 = vmul.f32 1.0, %v1349
    %v1351 = vtanh.pop %v1342
    %v1352 = vxor.u32 %v1344, 2147483648
    %v1353 = vmul.f32 %v1352, 1.442695
    %v1354 = vpow.pop %v1353
    %v1355 = vadd.f32 %v1354, 1.0
    %v1356 = vrcp.pop %v1355
    %v1357 = vmul.f32 1.0, %v1356
    %v1358 = vtanh.pop %v1344
    %v1359 = vmul.f32 %v1350, %v1230
    %1361 = vrot.lane.b32.xlu0 %v1351, 32
    %v1362 = vpop.permute.xlu0 %1361
    %v1364 = vmul.f32 %v1350, %v1362
    %1366 = vrot.lane.b32.xlu0 %v1364, 32
    %v1367 = vpop.permute.xlu0 %1366
    %v1369 = vadd.f32 %v1359, %v1367
    %v1370 = vmul.f32 %v1357, %v1241
    %1372 = vrot.lane.b32.xlu0 %v1358, 32
    %v1373 = vpop.permute.xlu0 %1372
    %v1375 = vmul.f32 %v1357, %v1373
    %1377 = vrot.lane.b32.xlu0 %v1375, 32
    %v1378 = vpop.permute.xlu0 %1377
    %v1380 = vadd.f32 %v1370, %v1378
    %v1381 = vtanh.pop %v1369
    %1383 = vrot.lane.b32.xlu0 %v1381, 32
    %v1384 = vpop.permute.xlu0 %1383
    %v1386 = vmul.f32 %v1350, %v1384
    %v1387 = vtanh.pop %v1380
    %1389 = vrot.lane.b32.xlu0 %v1387, 32
    %v1390 = vpop.permute.xlu0 %1389
    %v1392 = vmul.f32 %v1357, %v1390
    %1394 = vrot.lane.b32.xlu0 %v1386, 64
    %v1395 = vpop.permute.xlu0 %1394
    %1397 = vst.msk [vmem:[%s1264] sm:$0xff] %vm64, %v1395
    %1399 = vrot.lane.b32.xlu0 %v1392, 96
    %v1400 = vpop.permute.xlu0 %1399
    %1402 = vst.msk [vmem:[%s1258] sm:$0xff] %vm847, %v1400
    %v1403 = vsel %vm64, %v1395, %v1400
    %v1405 = vsel %vm710, %v1403, 0
    %1407 = vmatprep.subr.mxu0 0.0
    %1408 = vmatpush1.msra.mxu0 0.0
    %1409 = vmatprep.subr.mxu0 0.0
    %1410 = vmatpush1.msra.mxu0 0.0
    %1411 = vmatprep.subr.mxu0 0.0
    %1412 = vmatpush1.msra.mxu0 0.0
    %1413 = vmatprep.subr.mxu0 0.0
    %1414 = vmatpush1.msra.mxu0 0.0
    %1415 = vmatprep.subr.mxu0 0.0
    %1416 = vmatpush1.msra.mxu0 0.0
    %1417 = vmatprep.subr.mxu0 0.0
    %1418 = vmatpush1.msra.mxu0 0.0
    %1419 = vmatprep.subr.mxu0 0.0
    %1420 = vmatpush1.msra.mxu0 0.0
    %1421 = vmatprep.subr.mxu0 0.0
    %1422 = vmatpush1.msra.mxu0 0.0
    %1423 = vmatprep.subr.mxu0 %v709
    %1424 = vmatpush1.msra.mxu0 %v708
    %1425 = vmatprep.subr.mxu0 %v707
    %1426 = vmatpush1.msra.mxu0 %v706
    %1427 = vmatprep.subr.mxu0 %v705
    %1428 = vmatpush1.msra.mxu0 %v704
    %1429 = vmatprep.subr.mxu0 %v703
    %1430 = vmatpush1.msra.mxu0 %v702
    %1431 = vmatprep.subr.mxu0 %v701
    %1432 = vmatpush1.msra.mxu0 %v700
    %1433 = vmatprep.subr.mxu0 %v699
    %1434 = vmatpush1.msra.mxu0 %v698
    %1435 = vmatprep.subr.mxu0 %v697
    %1436 = vmatpush1.msra.mxu0 %v696
    %1437 = vmatprep.subr.mxu0 %v695
    %1438 = vmatpush1.msra.mxu0 %v694
    %1439 = vmatprep.subr.mxu0 0.0
    %1440 = vmatpush2.msra.mxu0 0.0
    %1441 = vmatprep.subr.mxu0 0.0
    %1442 = vmatpush2.msra.mxu0 0.0
    %1443 = vmatprep.subr.mxu0 0.0
    %1444 = vmatpush2.msra.mxu0 0.0
    %1445 = vmatprep.subr.mxu0 0.0
    %1446 = vmatpush2.msra.mxu0 0.0
    %1447 = vmatprep.subr.mxu0 0.0
    %1448 = vmatpush2.msra.mxu0 0.0
    %1449 = vmatprep.subr.mxu0 0.0
    %1450 = vmatpush2.msra.mxu0 0.0
    %1451 = vmatprep.subr.mxu0 0.0
    %1452 = vmatpush2.msra.mxu0 0.0
    %1453 = vmatprep.subr.mxu0 0.0
    %1454 = vmatpush2.msra.mxu0 0.0
    %1455 = vmatprep.subr.mxu0 0.0
    %1456 = vmatpush2.msra.mxu0 0.0
    %1457 = vmatprep.subr.mxu0 0.0
    %1458 = vmatpush2.msra.mxu0 0.0
    %1459 = vmatprep.subr.mxu0 0.0
    %1460 = vmatpush2.msra.mxu0 0.0
    %1461 = vmatprep.subr.mxu0 0.0
    %1462 = vmatpush2.msra.mxu0 0.0
    %1463 = vmatprep.subr.mxu0 0.0
    %1464 = vmatpush2.msra.mxu0 0.0
    %1465 = vmatprep.subr.mxu0 0.0
    %1466 = vmatpush2.msra.mxu0 0.0
    %1467 = vmatprep.subr.mxu0 0.0
    %1468 = vmatpush2.msra.mxu0 0.0
    %1469 = vmatprep.subr.mxu0 0.0
    %1470 = vmatpush2.msra.mxu0 0.0
    %1471 = vmatprep.mubr.f32.mxu0 0.0
    %1472 = vmatmul.mubr.f32.gmra.mxu0 %v1405
    %v1473 = vpop.f32.mrf.mxu0
    %v1474 = vadd.f32 0.0, %v1473
    %v1475 = vpop.f32.mrf.mxu0
    %v1476 = vadd.f32 0.0, %v1475
    %1477 = vdwg.mxu0
    %v1478 = vld [vmem:[%s533] sm:$0xff]
    %v1479 = vadd.f32 %v1478, %v1474
    %v1480 = vld [vmem:[%s296 + $0x8] sm:$0xff]
    %v1481 = vadd.f32 %v1480, %v1476
    %v1482 = vxor.u32 %v1479, 2147483648
    %v1483 = vmul.f32 %v1482, 1.442695
    %v1484 = vpow.pop %v1483
    %v1485 = vadd.f32 %v1484, 1.0
    %v1486 = vrcp.pop %v1485
    %v1487 = vmul.f32 1.0, %v1486
    %v1488 = vtanh.pop %v1479
    %v1489 = vxor.u32 %v1481, 2147483648
    %v1490 = vmul.f32 %v1489, 1.442695
    %v1491 = vpow.pop %v1490
    %v1492 = vadd.f32 %v1491, 1.0
    %v1493 = vrcp.pop %v1492
    %v1494 = vmul.f32 1.0, %v1493
    %v1495 = vtanh.pop %v1481
    %v1496 = vmul.f32 %v1487, %v1369
    %1498 = vrot.lane.b32.xlu0 %v1488, 32
    %v1499 = vpop.permute.xlu0 %1498
    %v1501 = vmul.f32 %v1487, %v1499
    %1503 = vrot.lane.b32.xlu0 %v1501, 32
    %v1504 = vpop.permute.xlu0 %1503
    %v1506 = vadd.f32 %v1496, %v1504
    %v1507 = vmul.f32 %v1494, %v1380
    %1509 = vrot.lane.b32.xlu0 %v1495, 32
    %v1510 = vpop.permute.xlu0 %1509
    %v1512 = vmul.f32 %v1494, %v1510
    %1514 = vrot.lane.b32.xlu0 %v1512, 32
    %v1515 = vpop.permute.xlu0 %1514
    %v1517 = vadd.f32 %v1507, %v1515
    %v1518 = vtanh.pop %v1506
    %1520 = vrot.lane.b32.xlu0 %v1518, 32
    %v1521 = vpop.permute.xlu0 %1520
    %v1523 = vmul.f32 %v1487, %v1521
    %v1524 = vtanh.pop %v1517
    %1526 = vrot.lane.b32.xlu0 %v1524, 32
    %v1527 = vpop.permute.xlu0 %1526
    %v1529 = vmul.f32 %v1494, %v1527
    %1531 = vrot.lane.b32.xlu0 %v1523, 64
    %v1532 = vpop.permute.xlu0 %1531
    %1534 = vst.msk [vmem:[%s1125] sm:$0xff] %vm64, %v1532
    %1536 = vrot.lane.b32.xlu0 %v1529, 96
    %v1537 = vpop.permute.xlu0 %1536
    %1539 = vst.msk [vmem:[%s1119] sm:$0xff] %vm847, %v1537
    %v1540 = vsel %vm64, %v1532, %v1537
    %v1542 = vsel %vm710, %v1540, 0
    %1544 = vmatprep.subr.mxu0 0.0
    %1545 = vmatpush1.msra.mxu0 0.0
    %1546 = vmatprep.subr.mxu0 0.0
    %1547 = vmatpush1.msra.mxu0 0.0
    %1548 = vmatprep.subr.mxu0 0.0
    %1549 = vmatpush1.msra.mxu0 0.0
    %1550 = vmatprep.subr.mxu0 0.0
    %1551 = vmatpush1.msra.mxu0 0.0
    %1552 = vmatprep.subr.mxu0 0.0
    %1553 = vmatpush1.msra.mxu0 0.0
    %1554 = vmatprep.subr.mxu0 0.0
    %1555 = vmatpush1.msra.mxu0 0.0
    %1556 = vmatprep.subr.mxu0 0.0
    %1557 = vmatpush1.msra.mxu0 0.0
    %1558 = vmatprep.subr.mxu0 0.0
    %1559 = vmatpush1.msra.mxu0 0.0
    %1560 = vmatprep.subr.mxu0 %v709
    %1561 = vmatpush1.msra.mxu0 %v708
    %1562 = vmatprep.subr.mxu0 %v707
    %1563 = vmatpush1.msra.mxu0 %v706
    %1564 = vmatprep.subr.mxu0 %v705
    %1565 = vmatpush1.msra.mxu0 %v704
    %1566 = vmatprep.subr.mxu0 %v703
    %1567 = vmatpush1.msra.mxu0 %v702
    %1568 = vmatprep.subr.mxu0 %v701
    %1569 = vmatpush1.msra.mxu0 %v700
    %1570 = vmatprep.subr.mxu0 %v699
    %1571 = vmatpush1.msra.mxu0 %v698
    %1572 = vmatprep.subr.mxu0 %v697
    %1573 = vmatpush1.msra.mxu0 %v696
    %1574 = vmatprep.subr.mxu0 %v695
    %1575 = vmatpush1.msra.mxu0 %v694
    %1576 = vmatprep.subr.mxu0 0.0
    %1577 = vmatpush2.msra.mxu0 0.0
    %1578 = vmatprep.subr.mxu0 0.0
    %1579 = vmatpush2.msra.mxu0 0.0
    %1580 = vmatprep.subr.mxu0 0.0
    %1581 = vmatpush2.msra.mxu0 0.0
    %1582 = vmatprep.subr.mxu0 0.0
    %1583 = vmatpush2.msra.mxu0 0.0
    %1584 = vmatprep.subr.mxu0 0.0
    %1585 = vmatpush2.msra.mxu0 0.0
    %1586 = vmatprep.subr.mxu0 0.0
    %1587 = vmatpush2.msra.mxu0 0.0
    %1588 = vmatprep.subr.mxu0 0.0
    %1589 = vmatpush2.msra.mxu0 0.0
    %1590 = vmatprep.subr.mxu0 0.0
    %1591 = vmatpush2.msra.mxu0 0.0
    %1592 = vmatprep.subr.mxu0 0.0
    %1593 = vmatpush2.msra.mxu0 0.0
    %1594 = vmatprep.subr.mxu0 0.0
    %1595 = vmatpush2.msra.mxu0 0.0
    %1596 = vmatprep.subr.mxu0 0.0
    %1597 = vmatpush2.msra.mxu0 0.0
    %1598 = vmatprep.subr.mxu0 0.0
    %1599 = vmatpush2.msra.mxu0 0.0
    %1600 = vmatprep.subr.mxu0 0.0
    %1601 = vmatpush2.msra.mxu0 0.0
    %1602 = vmatprep.subr.mxu0 0.0
    %1603 = vmatpush2.msra.mxu0 0.0
    %1604 = vmatprep.subr.mxu0 0.0
    %1605 = vmatpush2.msra.mxu0 0.0
    %1606 = vmatprep.subr.mxu0 0.0
    %1607 = vmatpush2.msra.mxu0 0.0
    %1608 = vmatprep.mubr.f32.mxu0 0.0
    %1609 = vmatmul.mubr.f32.gmra.mxu0 %v1542
    %v1610 = vpop.f32.mrf.mxu0
    %v1611 = vadd.f32 0.0, %v1610
    %v1612 = vpop.f32.mrf.mxu0
    %v1613 = vadd.f32 0.0, %v1612
    %1614 = vdwg.mxu0
    %v1615 = vld [vmem:[%s612] sm:$0xff]
    %v1616 = vadd.f32 %v1615, %v1611
    %v1617 = vld [vmem:[%s217 + $0x8] sm:$0xff]
    %v1618 = vadd.f32 %v1617, %v1613
    %v1619 = vxor.u32 %v1616, 2147483648
    %v1620 = vmul.f32 %v1619, 1.442695
    %v1621 = vpow.pop %v1620
    %v1622 = vadd.f32 %v1621, 1.0
    %v1623 = vrcp.pop %v1622
    %v1624 = vmul.f32 1.0, %v1623
    %v1625 = vtanh.pop %v1616
    %v1626 = vxor.u32 %v1618, 2147483648
    %v1627 = vmul.f32 %v1626, 1.442695
    %v1628 = vpow.pop %v1627
    %v1629 = vadd.f32 %v1628, 1.0
    %v1630 = vrcp.pop %v1629
    %v1631 = vmul.f32 1.0, %v1630
    %v1632 = vtanh.pop %v1618
    %v1633 = vmul.f32 %v1624, %v1506
    %1635 = vrot.lane.b32.xlu0 %v1625, 32
    %v1636 = vpop.permute.xlu0 %1635
    %v1638 = vmul.f32 %v1624, %v1636
    %1640 = vrot.lane.b32.xlu0 %v1638, 32
    %v1641 = vpop.permute.xlu0 %1640
    %v1643 = vadd.f32 %v1633, %v1641
    %v1644 = vmul.f32 %v1631, %v1517
    %1646 = vrot.lane.b32.xlu0 %v1632, 32
    %v1647 = vpop.permute.xlu0 %1646
    %v1649 = vmul.f32 %v1631, %v1647
    %1651 = vrot.lane.b32.xlu0 %v1649, 32
    %v1652 = vpop.permute.xlu0 %1651
    %v1654 = vadd.f32 %v1644, %v1652
    %v1655 = vtanh.pop %v1643
    %1657 = vrot.lane.b32.xlu0 %v1655, 32
    %v1658 = vpop.permute.xlu0 %1657
    %v1660 = vmul.f32 %v1624, %v1658
    %v1661 = vtanh.pop %v1654
    %1663 = vrot.lane.b32.xlu0 %v1661, 32
    %v1664 = vpop.permute.xlu0 %1663
    %v1666 = vmul.f32 %v1631, %v1664
    %1668 = vrot.lane.b32.xlu0 %v1660, 64
    %v1669 = vpop.permute.xlu0 %1668
    %1671 = vst.msk [vmem:[%s986] sm:$0xff] %vm64, %v1669
    %1673 = vrot.lane.b32.xlu0 %v1666, 96
    %v1674 = vpop.permute.xlu0 %1673
    %1676 = vst.msk [vmem:[%s980] sm:$0xff] %vm847, %v1674
    %v1677 = vsel %vm64, %v1669, %v1674
    %v1679 = vsel %vm710, %v1677, 0
    %1681 = vmatprep.subr.mxu0 0.0
    %1682 = vmatpush1.msra.mxu0 0.0
    %1683 = vmatprep.subr.mxu0 0.0
    %1684 = vmatpush1.msra.mxu0 0.0
    %1685 = vmatprep.subr.mxu0 0.0
    %1686 = vmatpush1.msra.mxu0 0.0
    %1687 = vmatprep.subr.mxu0 0.0
    %1688 = vmatpush1.msra.mxu0 0.0
    %1689 = vmatprep.subr.mxu0 0.0
    %1690 = vmatpush1.msra.mxu0 0.0
    %1691 = vmatprep.subr.mxu0 0.0
    %1692 = vmatpush1.msra.mxu0 0.0
    %1693 = vmatprep.subr.mxu0 0.0
    %1694 = vmatpush1.msra.mxu0 0.0
    %1695 = vmatprep.subr.mxu0 0.0
    %1696 = vmatpush1.msra.mxu0 0.0
    %1697 = vmatprep.subr.mxu0 %v709
    %1698 = vmatpush1.msra.mxu0 %v708
    %1699 = vmatprep.subr.mxu0 %v707
    %1700 = vmatpush1.msra.mxu0 %v706
    %1701 = vmatprep.subr.mxu0 %v705
    %1702 = vmatpush1.msra.mxu0 %v704
    %1703 = vmatprep.subr.mxu0 %v703
    %1704 = vmatpush1.msra.mxu0 %v702
    %1705 = vmatprep.subr.mxu0 %v701
    %1706 = vmatpush1.msra.mxu0 %v700
    %1707 = vmatprep.subr.mxu0 %v699
    %1708 = vmatpush1.msra.mxu0 %v698
    %1709 = vmatprep.subr.mxu0 %v697
    %1710 = vmatpush1.msra.mxu0 %v696
    %1711 = vmatprep.subr.mxu0 %v695
    %1712 = vmatpush1.msra.mxu0 %v694
    %1713 = vmatprep.subr.mxu0 0.0
    %1714 = vmatpush2.msra.mxu0 0.0
    %1715 = vmatprep.subr.mxu0 0.0
    %1716 = vmatpush2.msra.mxu0 0.0
    %1717 = vmatprep.subr.mxu0 0.0
    %1718 = vmatpush2.msra.mxu0 0.0
    %1719 = vmatprep.subr.mxu0 0.0
    %1720 = vmatpush2.msra.mxu0 0.0
    %1721 = vmatprep.subr.mxu0 0.0
    %1722 = vmatpush2.msra.mxu0 0.0
    %1723 = vmatprep.subr.mxu0 0.0
    %1724 = vmatpush2.msra.mxu0 0.0
    %1725 = vmatprep.subr.mxu0 0.0
    %1726 = vmatpush2.msra.mxu0 0.0
    %1727 = vmatprep.subr.mxu0 0.0
    %1728 = vmatpush2.msra.mxu0 0.0
    %1729 = vmatprep.subr.mxu0 0.0
    %1730 = vmatpush2.msra.mxu0 0.0
    %1731 = vmatprep.subr.mxu0 0.0
    %1732 = vmatpush2.msra.mxu0 0.0
    %1733 = vmatprep.subr.mxu0 0.0
    %1734 = vmatpush2.msra.mxu0 0.0
    %1735 = vmatprep.subr.mxu0 0.0
    %1736 = vmatpush2.msra.mxu0 0.0
    %1737 = vmatprep.subr.mxu0 0.0
    %1738 = vmatpush2.msra.mxu0 0.0
    %1739 = vmatprep.subr.mxu0 0.0
    %1740 = vmatpush2.msra.mxu0 0.0
    %1741 = vmatprep.subr.mxu0 0.0
    %1742 = vmatpush2.msra.mxu0 0.0
    %1743 = vmatprep.subr.mxu0 0.0
    %1744 = vmatpush2.msra.mxu0 0.0
    %1745 = vmatprep.mubr.f32.mxu0 0.0
    %1746 = vmatmul.mubr.f32.gmra.mxu0 %v1679
    %v1747 = vpop.f32.mrf.mxu0
    %v1748 = vadd.f32 0.0, %v1747
    %v1749 = vpop.f32.mrf.mxu0
    %v1750 = vadd.f32 0.0, %v1749
    %1751 = vdwg.mxu0
    %v1752 = vld [vmem:[%s691] sm:$0xff]
    %v1753 = vadd.f32 %v1752, %v1748
    %v1754 = vld [vmem:[#allocation2 + $0x8] sm:$0xff]
    %v1755 = vadd.f32 %v1754, %v1750
    %v1756 = vxor.u32 %v1753, 2147483648
    %v1757 = vmul.f32 %v1756, 1.442695
    %v1758 = vpow.pop %v1757
    %v1759 = vadd.f32 %v1758, 1.0
    %v1760 = vrcp.pop %v1759
    %v1761 = vmul.f32 1.0, %v1760
    %v1762 = vtanh.pop %v1753
    %v1763 = vxor.u32 %v1755, 2147483648
    %v1764 = vmul.f32 %v1763, 1.442695
    %v1765 = vpow.pop %v1764
    %v1766 = vadd.f32 %v1765, 1.0
    %v1767 = vrcp.pop %v1766
    %v1768 = vmul.f32 1.0, %v1767
    %v1769 = vtanh.pop %v1755
    %v1770 = vmul.f32 %v1761, %v1643
    %1772 = vrot.lane.b32.xlu0 %v1762, 32
    %v1773 = vpop.permute.xlu0 %1772
    %v1775 = vmul.f32 %v1761, %v1773
    %1777 = vrot.lane.b32.xlu0 %v1775, 32
    %v1778 = vpop.permute.xlu0 %1777
    %v1780 = vadd.f32 %v1770, %v1778
    %v1781 = vmul.f32 %v1768, %v1654
    %1783 = vrot.lane.b32.xlu0 %v1769, 32
    %v1784 = vpop.permute.xlu0 %1783
    %v1786 = vmul.f32 %v1768, %v1784
    %1788 = vrot.lane.b32.xlu0 %v1786, 32
    %v1789 = vpop.permute.xlu0 %1788
    %v1791 = vadd.f32 %v1781, %v1789
    %v1792 = vtanh.pop %v1780
    %1794 = vrot.lane.b32.xlu0 %v1792, 32
    %v1795 = vpop.permute.xlu0 %1794
    %v1797 = vmul.f32 %v1761, %v1795
    %v1798 = vtanh.pop %v1791
    %1800 = vrot.lane.b32.xlu0 %v1798, 32
    %v1801 = vpop.permute.xlu0 %1800
    %v1803 = vmul.f32 %v1768, %v1801
    %1805 = vrot.lane.b32.xlu0 %v1797, 64
    %v1806 = vpop.permute.xlu0 %1805
    %1808 = vst.msk [vmem:[%s846] sm:$0xff] %vm64, %v1806
    %1810 = vrot.lane.b32.xlu0 %v1803, 96
    %v1811 = vpop.permute.xlu0 %1810
    %1813 = vst.msk [vmem:[#allocation3] sm:$0xff] %vm847, %v1811
    %v1814 = vld [vmem:[#allocation4] sm:$0xff]
    %v1815 = vld [vmem:[#allocation4 + $0x8] sm:$0xff]
    %v1816 = vld [vmem:[#allocation4 + $0x10] sm:$0xff]
    %v1817 = vld [vmem:[#allocation4 + $0x18] sm:$0xff]
    %v1818 = vld [vmem:[#allocation4 + $0x20] sm:$0xff]
    %v1819 = vld [vmem:[#allocation4 + $0x28] sm:$0xff]
    %v1820 = vld [vmem:[#allocation4 + $0x30] sm:$0xff]
    %v1821 = vld [vmem:[#allocation4 + $0x38] sm:$0xff]
    %v1822 = vld [vmem:[%s5] sm:$0x1]
    %v1823 = vld [vmem:[%s6] sm:$0xff]
    %v1824 = vld [vmem:[%s6 + $0x8] sm:$0xff]
    %v1825 = vld [vmem:[%s6 + $0x10] sm:$0xff]
    %v1826 = vld [vmem:[%s6 + $0x18] sm:$0xff]
    %v1827 = vld [vmem:[%s6 + $0x20] sm:$0xff]
    %v1828 = vld [vmem:[%s6 + $0x28] sm:$0xff]
    %v1829 = vld [vmem:[%s6 + $0x30] sm:$0xff]
    %v1830 = vld [vmem:[%s6 + $0x38] sm:$0xff]
    %v1831 = vld [vmem:[%s6 + $0x40] sm:$0xff]
    %v1832 = vld [vmem:[%s6 + $0x48] sm:$0xff]
    %v1833 = vld [vmem:[%s6 + $0x50] sm:$0xff]
    %v1834 = vld [vmem:[%s6 + $0x58] sm:$0xff]
    %v1835 = vld [vmem:[%s6 + $0x60] sm:$0xff]
    %v1836 = vld [vmem:[%s6 + $0x68] sm:$0xff]
    %v1837 = vld [vmem:[%s6 + $0x70] sm:$0xff]
    %v1838 = vld [vmem:[%s6 + $0x78] sm:$0xff]
    %v1839 = vld [vmem:[%s7] sm:$0x1]
    %v1840 = vld [vmem:[#allocation3] sm:$0xff]
    %v1842 = vlaneseq
    %v1843 = vshrl.u32 %v1842, 7
    %v1844 = vsub.s32 0, %v1843
    %v1845 = vrot.slane %v1822, %v1844
    %v1848 = vsel %vm710, %v1840, 0
    %1850 = vmatprep.subr.mxu0 0.0
    %1851 = vmatpush1.msra.mxu0 0.0
    %1852 = vmatprep.subr.mxu0 0.0
    %1853 = vmatpush1.msra.mxu0 0.0
    %1854 = vmatprep.subr.mxu0 0.0
    %1855 = vmatpush1.msra.mxu0 0.0
    %1856 = vmatprep.subr.mxu0 0.0
    %1857 = vmatpush1.msra.mxu0 0.0
    %1858 = vmatprep.subr.mxu0 0.0
    %1859 = vmatpush1.msra.mxu0 0.0
    %1860 = vmatprep.subr.mxu0 0.0
    %1861 = vmatpush1.msra.mxu0 0.0
    %1862 = vmatprep.subr.mxu0 0.0
    %1863 = vmatpush1.msra.mxu0 0.0
    %1864 = vmatprep.subr.mxu0 0.0
    %1865 = vmatpush1.msra.mxu0 0.0
    %1866 = vmatprep.subr.mxu0 0.0
    %1867 = vmatpush1.msra.mxu0 %v1821
    %1868 = vmatprep.subr.mxu0 0.0
    %1869 = vmatpush1.msra.mxu0 %v1820
    %1870 = vmatprep.subr.mxu0 0.0
    %1871 = vmatpush1.msra.mxu0 %v1819
    %1872 = vmatprep.subr.mxu0 0.0
    %1873 = vmatpush1.msra.mxu0 %v1818
    %1874 = vmatprep.subr.mxu0 0.0
    %1875 = vmatpush1.msra.mxu0 %v1817
    %1876 = vmatprep.subr.mxu0 0.0
    %1877 = vmatpush1.msra.mxu0 %v1816
    %1878 = vmatprep.subr.mxu0 0.0
    %1879 = vmatpush1.msra.mxu0 %v1815
    %1880 = vmatprep.subr.mxu0 0.0
    %1881 = vmatpush1.msra.mxu0 %v1814
    %1882 = vmatprep.subr.mxu0 0.0
    %1883 = vmatpush2.msra.mxu0 0.0
    %1884 = vmatprep.subr.mxu0 0.0
    %1885 = vmatpush2.msra.mxu0 0.0
    %1886 = vmatprep.subr.mxu0 0.0
    %1887 = vmatpush2.msra.mxu0 0.0
    %1888 = vmatprep.subr.mxu0 0.0
    %1889 = vmatpush2.msra.mxu0 0.0
    %1890 = vmatprep.subr.mxu0 0.0
    %1891 = vmatpush2.msra.mxu0 0.0
    %1892 = vmatprep.subr.mxu0 0.0
    %1893 = vmatpush2.msra.mxu0 0.0
    %1894 = vmatprep.subr.mxu0 0.0
    %1895 = vmatpush2.msra.mxu0 0.0
    %1896 = vmatprep.subr.mxu0 0.0
    %1897 = vmatpush2.msra.mxu0 0.0
    %1898 = vmatprep.subr.mxu0 0.0
    %1899 = vmatpush2.msra.mxu0 0.0
    %1900 = vmatprep.subr.mxu0 0.0
    %1901 = vmatpush2.msra.mxu0 0.0
    %1902 = vmatprep.subr.mxu0 0.0
    %1903 = vmatpush2.msra.mxu0 0.0
    %1904 = vmatprep.subr.mxu0 0.0
    %1905 = vmatpush2.msra.mxu0 0.0
    %1906 = vmatprep.subr.mxu0 0.0
    %1907 = vmatpush2.msra.mxu0 0.0
    %1908 = vmatprep.subr.mxu0 0.0
    %1909 = vmatpush2.msra.mxu0 0.0
    %1910 = vmatprep.subr.mxu0 0.0
    %1911 = vmatpush2.msra.mxu0 0.0
    %1912 = vmatprep.subr.mxu0 0.0
    %1913 = vmatpush2.msra.mxu0 0.0
    %1914 = vmatprep.mubr.f32.mxu0 0.0
    %1915 = vmatmul.mubr.f32.gmra.mxu0 %v1848
    %v1916 = vpop.f32.mrf.mxu0
    %v1917 = vadd.f32 %v1845, %v1916
    %v1918 = vpop.f32.mrf.mxu0
    %1919 = vdwg.mxu0
    %v1920 = vmax.f32 %v1917, 0.0
    %v1922 = vlaneseq
    %v1923 = vshrl.u32 %v1922, 7
    %v1924 = vsub.s32 0, %v1923
    %v1925 = vrot.slane %v1839, %v1924
    %1927 = vmatprep.subr.mxu0 0.0
    %1928 = vmatpush1.msra.mxu0 %v1838
    %1929 = vmatprep.subr.mxu0 0.0
    %1930 = vmatpush1.msra.mxu0 %v1837
    %1931 = vmatprep.subr.mxu0 0.0
    %1932 = vmatpush1.msra.mxu0 %v1836
    %1933 = vmatprep.subr.mxu0 0.0
    %1934 = vmatpush1.msra.mxu0 %v1835
    %1935 = vmatprep.subr.mxu0 0.0
    %1936 = vmatpush1.msra.mxu0 %v1834
    %1937 = vmatprep.subr.mxu0 0.0
    %1938 = vmatpush1.msra.mxu0 %v1833
    %1939 = vmatprep.subr.mxu0 0.0
    %1940 = vmatpush1.msra.mxu0 %v1832
    %1941 = vmatprep.subr.mxu0 0.0
    %1942 = vmatpush1.msra.mxu0 %v1831
    %1943 = vmatprep.subr.mxu0 0.0
    %1944 = vmatpush1.msra.mxu0 %v1830
    %1945 = vmatprep.subr.mxu0 0.0
    %1946 = vmatpush1.msra.mxu0 %v1829
    %1947 = vmatprep.subr.mxu0 0.0
    %1948 = vmatpush1.msra.mxu0 %v1828
    %1949 = vmatprep.subr.mxu0 0.0
    %1950 = vmatpush1.msra.mxu0 %v1827
    %1951 = vmatprep.subr.mxu0 0.0
    %1952 = vmatpush1.msra.mxu0 %v1826
    %1953 = vmatprep.subr.mxu0 0.0
    %1954 = vmatpush1.msra.mxu0 %v1825
    %1955 = vmatprep.subr.mxu0 0.0
    %1956 = vmatpush1.msra.mxu0 %v1824
    %1957 = vmatprep.subr.mxu0 0.0
    %1958 = vmatpush1.msra.mxu0 %v1823
    %1959 = vmatprep.subr.mxu0 0.0
    %1960 = vmatpush2.msra.mxu0 0.0
    %1961 = vmatprep.subr.mxu0 0.0
    %1962 = vmatpush2.msra.mxu0 0.0
    %1963 = vmatprep.subr.mxu0 0.0
    %1964 = vmatpush2.msra.mxu0 0.0
    %1965 = vmatprep.subr.mxu0 0.0
    %1966 = vmatpush2.msra.mxu0 0.0
    %1967 = vmatprep.subr.mxu0 0.0
    %1968 = vmatpush2.msra.mxu0 0.0
    %1969 = vmatprep.subr.mxu0 0.0
    %1970 = vmatpush2.msra.mxu0 0.0
    %1971 = vmatprep.subr.mxu0 0.0
    %1972 = vmatpush2.msra.mxu0 0.0
    %1973 = vmatprep.subr.mxu0 0.0
    %1974 = vmatpush2.msra.mxu0 0.0
    %1975 = vmatprep.subr.mxu0 0.0
    %1976 = vmatpush2.msra.mxu0 0.0
    %1977 = vmatprep.subr.mxu0 0.0
    %1978 = vmatpush2.msra.mxu0 0.0
    %1979 = vmatprep.subr.mxu0 0.0
    %1980 = vmatpush2.msra.mxu0 0.0
    %1981 = vmatprep.subr.mxu0 0.0
    %1982 = vmatpush2.msra.mxu0 0.0
    %1983 = vmatprep.subr.mxu0 0.0
    %1984 = vmatpush2.msra.mxu0 0.0
    %1985 = vmatprep.subr.mxu0 0.0
    %1986 = vmatpush2.msra.mxu0 0.0
    %1987 = vmatprep.subr.mxu0 0.0
    %1988 = vmatpush2.msra.mxu0 0.0
    %1989 = vmatprep.subr.mxu0 0.0
    %1990 = vmatpush2.msra.mxu0 0.0
    %1991 = vmatprep.mubr.f32.mxu0 0.0
    %1992 = vmatmul.mubr.f32.gmra.mxu0 %v1920
    %v1993 = vpop.f32.mrf.mxu0
    %v1994 = vadd.f32 %v1925, %v1993
    %v1995 = vpop.f32.mrf.mxu0
    %1996 = vdwg.mxu0
    %v1997 = vmul.f32 %v1994, 0.5
    %v1998 = vld [vmem:[%s0] sm:$0xff]
    %v1999 = vmul.f32 %v1998, 0.5
    %v2000 = vadd.f32 %v1997, %v1999
    %2001 = vst.msk [vmem:[%s8] sm:$0xff] %vm64, %v2000
    %v2002 = vld [vmem:[%s980] sm:$0xff]
    %v2004 = vsel %vm710, %v2002, 0
    %2006 = vmatprep.subr.mxu0 0.0
    %2007 = vmatpush1.msra.mxu0 0.0
    %2008 = vmatprep.subr.mxu0 0.0
    %2009 = vmatpush1.msra.mxu0 0.0
    %2010 = vmatprep.subr.mxu0 0.0
    %2011 = vmatpush1.msra.mxu0 0.0
    %2012 = vmatprep.subr.mxu0 0.0
    %2013 = vmatpush1.msra.mxu0 0.0
    %2014 = vmatprep.subr.mxu0 0.0
    %2015 = vmatpush1.msra.mxu0 0.0
    %2016 = vmatprep.subr.mxu0 0.0
    %2017 = vmatpush1.msra.mxu0 0.0
    %2018 = vmatprep.subr.mxu0 0.0
    %2019 = vmatpush1.msra.mxu0 0.0
    %2020 = vmatprep.subr.mxu0 0.0
    %2021 = vmatpush1.msra.mxu0 0.0
    %2022 = vmatprep.subr.mxu0 0.0
    %2023 = vmatpush1.msra.mxu0 %v1821
    %2024 = vmatprep.subr.mxu0 0.0
    %2025 = vmatpush1.msra.mxu0 %v1820
    %2026 = vmatprep.subr.mxu0 0.0
    %2027 = vmatpush1.msra.mxu0 %v1819
    %2028 = vmatprep.subr.mxu0 0.0
    %2029 = vmatpush1.msra.mxu0 %v1818
    %2030 = vmatprep.subr.mxu0 0.0
    %2031 = vmatpush1.msra.mxu0 %v1817
    %2032 = vmatprep.subr.mxu0 0.0
    %2033 = vmatpush1.msra.mxu0 %v1816
    %2034 = vmatprep.subr.mxu0 0.0
    %2035 = vmatpush1.msra.mxu0 %v1815
    %2036 = vmatprep.subr.mxu0 0.0
    %2037 = vmatpush1.msra.mxu0 %v1814
    %2038 = vmatprep.subr.mxu0 0.0
    %2039 = vmatpush2.msra.mxu0 0.0
    %2040 = vmatprep.subr.mxu0 0.0
    %2041 = vmatpush2.msra.mxu0 0.0
    %2042 = vmatprep.subr.mxu0 0.0
    %2043 = vmatpush2.msra.mxu0 0.0
    %2044 = vmatprep.subr.mxu0 0.0
    %2045 = vmatpush2.msra.mxu0 0.0
    %2046 = vmatprep.subr.mxu0 0.0
    %2047 = vmatpush2.msra.mxu0 0.0
    %2048 = vmatprep.subr.mxu0 0.0
    %2049 = vmatpush2.msra.mxu0 0.0
    %2050 = vmatprep.subr.mxu0 0.0
    %2051 = vmatpush2.msra.mxu0 0.0
    %2052 = vmatprep.subr.mxu0 0.0
    %2053 = vmatpush2.msra.mxu0 0.0
    %2054 = vmatprep.subr.mxu0 0.0
    %2055 = vmatpush2.msra.mxu0 0.0
    %2056 = vmatprep.subr.mxu0 0.0
    %2057 = vmatpush2.msra.mxu0 0.0
    %2058 = vmatprep.subr.mxu0 0.0
    %2059 = vmatpush2.msra.mxu0 0.0
    %2060 = vmatprep.subr.mxu0 0.0
    %2061 = vmatpush2.msra.mxu0 0.0
    %2062 = vmatprep.subr.mxu0 0.0
    %2063 = vmatpush2.msra.mxu0 0.0
    %2064 = vmatprep.subr.mxu0 0.0
    %2065 = vmatpush2.msra.mxu0 0.0
    %2066 = vmatprep.subr.mxu0 0.0
    %2067 = vmatpush2.msra.mxu0 0.0
    %2068 = vmatprep.subr.mxu0 0.0
    %2069 = vmatpush2.msra.mxu0 0.0
    %2070 = vmatprep.mubr.f32.mxu0 0.0
    %2071 = vmatmul.mubr.f32.gmra.mxu0 %v2004
    %v2072 = vpop.f32.mrf.mxu0
    %v2073 = vadd.f32 %v1845, %v2072
    %v2074 = vpop.f32.mrf.mxu0
    %2075 = vdwg.mxu0
    %v2076 = vmax.f32 %v2073, 0.0
    %2077 = vmatprep.subr.mxu0 0.0
    %2078 = vmatpush1.msra.mxu0 %v1838
    %2079 = vmatprep.subr.mxu0 0.0
    %2080 = vmatpush1.msra.mxu0 %v1837
    %2081 = vmatprep.subr.mxu0 0.0
    %2082 = vmatpush1.msra.mxu0 %v1836
    %2083 = vmatprep.subr.mxu0 0.0
    %2084 = vmatpush1.msra.mxu0 %v1835
    %2085 = vmatprep.subr.mxu0 0.0
    %2086 = vmatpush1.msra.mxu0 %v1834
    %2087 = vmatprep.subr.mxu0 0.0
    %2088 = vmatpush1.msra.mxu0 %v1833
    %2089 = vmatprep.subr.mxu0 0.0
    %2090 = vmatpush1.msra.mxu0 %v1832
    %2091 = vmatprep.subr.mxu0 0.0
    %2092 = vmatpush1.msra.mxu0 %v1831
    %2093 = vmatprep.subr.mxu0 0.0
    %2094 = vmatpush1.msra.mxu0 %v1830
    %2095 = vmatprep.subr.mxu0 0.0
    %2096 = vmatpush1.msra.mxu0 %v1829
    %2097 = vmatprep.subr.mxu0 0.0
    %2098 = vmatpush1.msra.mxu0 %v1828
    %2099 = vmatprep.subr.mxu0 0.0
    %2100 = vmatpush1.msra.mxu0 %v1827
    %2101 = vmatprep.subr.mxu0 0.0
    %2102 = vmatpush1.msra.mxu0 %v1826
    %2103 = vmatprep.subr.mxu0 0.0
    %2104 = vmatpush1.msra.mxu0 %v1825
    %2105 = vmatprep.subr.mxu0 0.0
    %2106 = vmatpush1.msra.mxu0 %v1824
    %2107 = vmatprep.subr.mxu0 0.0
    %2108 = vmatpush1.msra.mxu0 %v1823
    %2109 = vmatprep.subr.mxu0 0.0
    %2110 = vmatpush2.msra.mxu0 0.0
    %2111 = vmatprep.subr.mxu0 0.0
    %2112 = vmatpush2.msra.mxu0 0.0
    %2113 = vmatprep.subr.mxu0 0.0
    %2114 = vmatpush2.msra.mxu0 0.0
    %2115 = vmatprep.subr.mxu0 0.0
    %2116 = vmatpush2.msra.mxu0 0.0
    %2117 = vmatprep.subr.mxu0 0.0
    %2118 = vmatpush2.msra.mxu0 0.0
    %2119 = vmatprep.subr.mxu0 0.0
    %2120 = vmatpush2.msra.mxu0 0.0
    %2121 = vmatprep.subr.mxu0 0.0
    %2122 = vmatpush2.msra.mxu0 0.0
    %2123 = vmatprep.subr.mxu0 0.0
    %2124 = vmatpush2.msra.mxu0 0.0
    %2125 = vmatprep.subr.mxu0 0.0
    %2126 = vmatpush2.msra.mxu0 0.0
    %2127 = vmatprep.subr.mxu0 0.0
    %2128 = vmatpush2.msra.mxu0 0.0
    %2129 = vmatprep.subr.mxu0 0.0
    %2130 = vmatpush2.msra.mxu0 0.0
    %2131 = vmatprep.subr.mxu0 0.0
    %2132 = vmatpush2.msra.mxu0 0.0
    %2133 = vmatprep.subr.mxu0 0.0
    %2134 = vmatpush2.msra.mxu0 0.0
    %2135 = vmatprep.subr.mxu0 0.0
    %2136 = vmatpush2.msra.mxu0 0.0
    %2137 = vmatprep.subr.mxu0 0.0
    %2138 = vmatpush2.msra.mxu0 0.0
    %2139 = vmatprep.subr.mxu0 0.0
    %2140 = vmatpush2.msra.mxu0 0.0
    %2141 = vmatprep.mubr.f32.mxu0 0.0
    %2142 = vmatmul.mubr.f32.gmra.mxu0 %v2076
    %v2143 = vpop.f32.mrf.mxu0
    %v2144 = vadd.f32 %v1925, %v2143
    %v2145 = vpop.f32.mrf.mxu0
    %2146 = vdwg.mxu0
    %v2147 = vmul.f32 %v2144, 0.5
    %v2148 = vld [vmem:[%s141] sm:$0xff]
    %v2149 = vmul.f32 %v2148, 0.5
    %v2150 = vadd.f32 %v2147, %v2149
    %s2151 = scalar_lea.vmem %s8, 8
    %2152 = vst.msk [vmem:[%s2151] sm:$0xff] %vm64, %v2150
    %v2153 = vld [vmem:[%s1119] sm:$0xff]
    %v2155 = vsel %vm710, %v2153, 0
    %2157 = vmatprep.subr.mxu0 0.0
    %2158 = vmatpush1.msra.mxu0 0.0
    %2159 = vmatprep.subr.mxu0 0.0
    %2160 = vmatpush1.msra.mxu0 0.0
    %2161 = vmatprep.subr.mxu0 0.0
    %2162 = vmatpush1.msra.mxu0 0.0
    %2163 = vmatprep.subr.mxu0 0.0
    %2164 = vmatpush1.msra.mxu0 0.0
    %2165 = vmatprep.subr.mxu0 0.0
    %2166 = vmatpush1.msra.mxu0 0.0
    %2167 = vmatprep.subr.mxu0 0.0
    %2168 = vmatpush1.msra.mxu0 0.0
    %2169 = vmatprep.subr.mxu0 0.0
    %2170 = vmatpush1.msra.mxu0 0.0
    %2171 = vmatprep.subr.mxu0 0.0
    %2172 = vmatpush1.msra.mxu0 0.0
    %2173 = vmatprep.subr.mxu0 0.0
    %2174 = vmatpush1.msra.mxu0 %v1821
    %2175 = vmatprep.subr.mxu0 0.0
    %2176 = vmatpush1.msra.mxu0 %v1820
    %2177 = vmatprep.subr.mxu0 0.0
    %2178 = vmatpush1.msra.mxu0 %v1819
    %2179 = vmatprep.subr.mxu0 0.0
    %2180 = vmatpush1.msra.mxu0 %v1818
    %2181 = vmatprep.subr.mxu0 0.0
    %2182 = vmatpush1.msra.mxu0 %v1817
    %2183 = vmatprep.subr.mxu0 0.0
    %2184 = vmatpush1.msra.mxu0 %v1816
    %2185 = vmatprep.subr.mxu0 0.0
    %2186 = vmatpush1.msra.mxu0 %v1815
    %2187 = vmatprep.subr.mxu0 0.0
    %2188 = vmatpush1.msra.mxu0 %v1814
    %2189 = vmatprep.subr.mxu0 0.0
    %2190 = vmatpush2.msra.mxu0 0.0
    %2191 = vmatprep.subr.mxu0 0.0
    %2192 = vmatpush2.msra.mxu0 0.0
    %2193 = vmatprep.subr.mxu0 0.0
    %2194 = vmatpush2.msra.mxu0 0.0
    %2195 = vmatprep.subr.mxu0 0.0
    %2196 = vmatpush2.msra.mxu0 0.0
    %2197 = vmatprep.subr.mxu0 0.0
    %2198 = vmatpush2.msra.mxu0 0.0
    %2199 = vmatprep.subr.mxu0 0.0
    %2200 = vmatpush2.msra.mxu0 0.0
    %2201 = vmatprep.subr.mxu0 0.0
    %2202 = vmatpush2.msra.mxu0 0.0
    %2203 = vmatprep.subr.mxu0 0.0
    %2204 = vmatpush2.msra.mxu0 0.0
    %2205 = vmatprep.subr.mxu0 0.0
    %2206 = vmatpush2.msra.mxu0 0.0
    %2207 = vmatprep.subr.mxu0 0.0
    %2208 = vmatpush2.msra.mxu0 0.0
    %2209 = vmatprep.subr.mxu0 0.0
    %2210 = vmatpush2.msra.mxu0 0.0
    %2211 = vmatprep.subr.mxu0 0.0
    %2212 = vmatpush2.msra.mxu0 0.0
    %2213 = vmatprep.subr.mxu0 0.0
    %2214 = vmatpush2.msra.mxu0 0.0
    %2215 = vmatprep.subr.mxu0 0.0
    %2216 = vmatpush2.msra.mxu0 0.0
    %2217 = vmatprep.subr.mxu0 0.0
    %2218 = vmatpush2.msra.mxu0 0.0
    %2219 = vmatprep.subr.mxu0 0.0
    %2220 = vmatpush2.msra.mxu0 0.0
    %2221 = vmatprep.mubr.f32.mxu0 0.0
    %2222 = vmatmul.mubr.f32.gmra.mxu0 %v2155
    %v2223 = vpop.f32.mrf.mxu0
    %v2224 = vadd.f32 %v1845, %v2223
    %v2225 = vpop.f32.mrf.mxu0
    %2226 = vdwg.mxu0
    %v2227 = vmax.f32 %v2224, 0.0
    %2228 = vmatprep.subr.mxu0 0.0
    %2229 = vmatpush1.msra.mxu0 %v1838
    %2230 = vmatprep.subr.mxu0 0.0
    %2231 = vmatpush1.msra.mxu0 %v1837
    %2232 = vmatprep.subr.mxu0 0.0
    %2233 = vmatpush1.msra.mxu0 %v1836
    %2234 = vmatprep.subr.mxu0 0.0
    %2235 = vmatpush1.msra.mxu0 %v1835
    %2236 = vmatprep.subr.mxu0 0.0
    %2237 = vmatpush1.msra.mxu0 %v1834
    %2238 = vmatprep.subr.mxu0 0.0
    %2239 = vmatpush1.msra.mxu0 %v1833
    %2240 = vmatprep.subr.mxu0 0.0
    %2241 = vmatpush1.msra.mxu0 %v1832
    %2242 = vmatprep.subr.mxu0 0.0
    %2243 = vmatpush1.msra.mxu0 %v1831
    %2244 = vmatprep.subr.mxu0 0.0
    %2245 = vmatpush1.msra.mxu0 %v1830
    %2246 = vmatprep.subr.mxu0 0.0
    %2247 = vmatpush1.msra.mxu0 %v1829
    %2248 = vmatprep.subr.mxu0 0.0
    %2249 = vmatpush1.msra.mxu0 %v1828
    %2250 = vmatprep.subr.mxu0 0.0
    %2251 = vmatpush1.msra.mxu0 %v1827
    %2252 = vmatprep.subr.mxu0 0.0
    %2253 = vmatpush1.msra.mxu0 %v1826
    %2254 = vmatprep.subr.mxu0 0.0
    %2255 = vmatpush1.msra.mxu0 %v1825
    %2256 = vmatprep.subr.mxu0 0.0
    %2257 = vmatpush1.msra.mxu0 %v1824
    %2258 = vmatprep.subr.mxu0 0.0
    %2259 = vmatpush1.msra.mxu0 %v1823
    %2260 = vmatprep.subr.mxu0 0.0
    %2261 = vmatpush2.msra.mxu0 0.0
    %2262 = vmatprep.subr.mxu0 0.0
    %2263 = vmatpush2.msra.mxu0 0.0
    %2264 = vmatprep.subr.mxu0 0.0
    %2265 = vmatpush2.msra.mxu0 0.0
    %2266 = vmatprep.subr.mxu0 0.0
    %2267 = vmatpush2.msra.mxu0 0.0
    %2268 = vmatprep.subr.mxu0 0.0
    %2269 = vmatpush2.msra.mxu0 0.0
    %2270 = vmatprep.subr.mxu0 0.0
    %2271 = vmatpush2.msra.mxu0 0.0
    %2272 = vmatprep.subr.mxu0 0.0
    %2273 = vmatpush2.msra.mxu0 0.0
    %2274 = vmatprep.subr.mxu0 0.0
    %2275 = vmatpush2.msra.mxu0 0.0
    %2276 = vmatprep.subr.mxu0 0.0
    %2277 = vmatpush2.msra.mxu0 0.0
    %2278 = vmatprep.subr.mxu0 0.0
    %2279 = vmatpush2.msra.mxu0 0.0
    %2280 = vmatprep.subr.mxu0 0.0
    %2281 = vmatpush2.msra.mxu0 0.0
    %2282 = vmatprep.subr.mxu0 0.0
    %2283 = vmatpush2.msra.mxu0 0.0
    %2284 = vmatprep.subr.mxu0 0.0
    %2285 = vmatpush2.msra.mxu0 0.0
    %2286 = vmatprep.subr.mxu0 0.0
    %2287 = vmatpush2.msra.mxu0 0.0
    %2288 = vmatprep.subr.mxu0 0.0
    %2289 = vmatpush2.msra.mxu0 0.0
    %2290 = vmatprep.subr.mxu0 0.0
    %2291 = vmatpush2.msra.mxu0 0.0
    %2292 = vmatprep.mubr.f32.mxu0 0.0
    %2293 = vmatmul.mubr.f32.gmra.mxu0 %v2227
    %v2294 = vpop.f32.mrf.mxu0
    %v2295 = vadd.f32 %v1925, %v2294
    %v2296 = vpop.f32.mrf.mxu0
    %2297 = vdwg.mxu0
    %v2298 = vmul.f32 %v2295, 0.5
    %v2299 = vld [vmem:[%s220] sm:$0xff]
    %v2300 = vmul.f32 %v2299, 0.5
    %v2301 = vadd.f32 %v2298, %v2300
    %s2302 = scalar_lea.vmem %s8, 16
    %2303 = vst.msk [vmem:[%s2302] sm:$0xff] %vm64, %v2301
    %v2304 = vld [vmem:[%s1258] sm:$0xff]
    %v2306 = vsel %vm710, %v2304, 0
    %2308 = vmatprep.subr.mxu0 0.0
    %2309 = vmatpush1.msra.mxu0 0.0
    %2310 = vmatprep.subr.mxu0 0.0
    %2311 = vmatpush1.msra.mxu0 0.0
    %2312 = vmatprep.subr.mxu0 0.0
    %2313 = vmatpush1.msra.mxu0 0.0
    %2314 = vmatprep.subr.mxu0 0.0
    %2315 = vmatpush1.msra.mxu0 0.0
    %2316 = vmatprep.subr.mxu0 0.0
    %2317 = vmatpush1.msra.mxu0 0.0
    %2318 = vmatprep.subr.mxu0 0.0
    %2319 = vmatpush1.msra.mxu0 0.0
    %2320 = vmatprep.subr.mxu0 0.0
    %2321 = vmatpush1.msra.mxu0 0.0
    %2322 = vmatprep.subr.mxu0 0.0
    %2323 = vmatpush1.msra.mxu0 0.0
    %2324 = vmatprep.subr.mxu0 0.0
    %2325 = vmatpush1.msra.mxu0 %v1821
    %2326 = vmatprep.subr.mxu0 0.0
    %2327 = vmatpush1.msra.mxu0 %v1820
    %2328 = vmatprep.subr.mxu0 0.0
    %2329 = vmatpush1.msra.mxu0 %v1819
    %2330 = vmatprep.subr.mxu0 0.0
    %2331 = vmatpush1.msra.mxu0 %v1818
    %2332 = vmatprep.subr.mxu0 0.0
    %2333 = vmatpush1.msra.mxu0 %v1817
    %2334 = vmatprep.subr.mxu0 0.0
    %2335 = vmatpush1.msra.mxu0 %v1816
    %2336 = vmatprep.subr.mxu0 0.0
    %2337 = vmatpush1.msra.mxu0 %v1815
    %2338 = vmatprep.subr.mxu0 0.0
    %2339 = vmatpush1.msra.mxu0 %v1814
    %2340 = vmatprep.subr.mxu0 0.0
    %2341 = vmatpush2.msra.mxu0 0.0
    %2342 = vmatprep.subr.mxu0 0.0
    %2343 = vmatpush2.msra.mxu0 0.0
    %2344 = vmatprep.subr.mxu0 0.0
    %2345 = vmatpush2.msra.mxu0 0.0
    %2346 = vmatprep.subr.mxu0 0.0
    %2347 = vmatpush2.msra.mxu0 0.0
    %2348 = vmatprep.subr.mxu0 0.0
    %2349 = vmatpush2.msra.mxu0 0.0
    %2350 = vmatprep.subr.mxu0 0.0
    %2351 = vmatpush2.msra.mxu0 0.0
    %2352 = vmatprep.subr.mxu0 0.0
    %2353 = vmatpush2.msra.mxu0 0.0
    %2354 = vmatprep.subr.mxu0 0.0
    %2355 = vmatpush2.msra.mxu0 0.0
    %2356 = vmatprep.subr.mxu0 0.0
    %2357 = vmatpush2.msra.mxu0 0.0
    %2358 = vmatprep.subr.mxu0 0.0
    %2359 = vmatpush2.msra.mxu0 0.0
    %2360 = vmatprep.subr.mxu0 0.0
    %2361 = vmatpush2.msra.mxu0 0.0
    %2362 = vmatprep.subr.mxu0 0.0
    %2363 = vmatpush2.msra.mxu0 0.0
    %2364 = vmatprep.subr.mxu0 0.0
    %2365 = vmatpush2.msra.mxu0 0.0
    %2366 = vmatprep.subr.mxu0 0.0
    %2367 = vmatpush2.msra.mxu0 0.0
    %2368 = vmatprep.subr.mxu0 0.0
    %2369 = vmatpush2.msra.mxu0 0.0
    %2370 = vmatprep.subr.mxu0 0.0
    %2371 = vmatpush2.msra.mxu0 0.0
    %2372 = vmatprep.mubr.f32.mxu0 0.0
    %2373 = vmatmul.mubr.f32.gmra.mxu0 %v2306
    %v2374 = vpop.f32.mrf.mxu0
    %v2375 = vadd.f32 %v1845, %v2374
    %v2376 = vpop.f32.mrf.mxu0
    %2377 = vdwg.mxu0
    %v2378 = vmax.f32 %v2375, 0.0
    %2379 = vmatprep.subr.mxu0 0.0
    %2380 = vmatpush1.msra.mxu0 %v1838
    %2381 = vmatprep.subr.mxu0 0.0
    %2382 = vmatpush1.msra.mxu0 %v1837
    %2383 = vmatprep.subr.mxu0 0.0
    %2384 = vmatpush1.msra.mxu0 %v1836
    %2385 = vmatprep.subr.mxu0 0.0
    %2386 = vmatpush1.msra.mxu0 %v1835
    %2387 = vmatprep.subr.mxu0 0.0
    %2388 = vmatpush1.msra.mxu0 %v1834
    %2389 = vmatprep.subr.mxu0 0.0
    %2390 = vmatpush1.msra.mxu0 %v1833
    %2391 = vmatprep.subr.mxu0 0.0
    %2392 = vmatpush1.msra.mxu0 %v1832
    %2393 = vmatprep.subr.mxu0 0.0
    %2394 = vmatpush1.msra.mxu0 %v1831
    %2395 = vmatprep.subr.mxu0 0.0
    %2396 = vmatpush1.msra.mxu0 %v1830
    %2397 = vmatprep.subr.mxu0 0.0
    %2398 = vmatpush1.msra.mxu0 %v1829
    %2399 = vmatprep.subr.mxu0 0.0
    %2400 = vmatpush1.msra.mxu0 %v1828
    %2401 = vmatprep.subr.mxu0 0.0
    %2402 = vmatpush1.msra.mxu0 %v1827
    %2403 = vmatprep.subr.mxu0 0.0
    %2404 = vmatpush1.msra.mxu0 %v1826
    %2405 = vmatprep.subr.mxu0 0.0
    %2406 = vmatpush1.msra.mxu0 %v1825
    %2407 = vmatprep.subr.mxu0 0.0
    %2408 = vmatpush1.msra.mxu0 %v1824
    %2409 = vmatprep.subr.mxu0 0.0
    %2410 = vmatpush1.msra.mxu0 %v1823
    %2411 = vmatprep.subr.mxu0 0.0
    %2412 = vmatpush2.msra.mxu0 0.0
    %2413 = vmatprep.subr.mxu0 0.0
    %2414 = vmatpush2.msra.mxu0 0.0
    %2415 = vmatprep.subr.mxu0 0.0
    %2416 = vmatpush2.msra.mxu0 0.0
    %2417 = vmatprep.subr.mxu0 0.0
    %2418 = vmatpush2.msra.mxu0 0.0
    %2419 = vmatprep.subr.mxu0 0.0
    %2420 = vmatpush2.msra.mxu0 0.0
    %2421 = vmatprep.subr.mxu0 0.0
    %2422 = vmatpush2.msra.mxu0 0.0
    %2423 = vmatprep.subr.mxu0 0.0
    %2424 = vmatpush2.msra.mxu0 0.0
    %2425 = vmatprep.subr.mxu0 0.0
    %2426 = vmatpush2.msra.mxu0 0.0
    %2427 = vmatprep.subr.mxu0 0.0
    %2428 = vmatpush2.msra.mxu0 0.0
    %2429 = vmatprep.subr.mxu0 0.0
    %2430 = vmatpush2.msra.mxu0 0.0
    %2431 = vmatprep.subr.mxu0 0.0
    %2432 = vmatpush2.msra.mxu0 0.0
    %2433 = vmatprep.subr.mxu0 0.0
    %2434 = vmatpush2.msra.mxu0 0.0
    %2435 = vmatprep.subr.mxu0 0.0
    %2436 = vmatpush2.msra.mxu0 0.0
    %2437 = vmatprep.subr.mxu0 0.0
    %2438 = vmatpush2.msra.mxu0 0.0
    %2439 = vmatprep.subr.mxu0 0.0
    %2440 = vmatpush2.msra.mxu0 0.0
    %2441 = vmatprep.subr.mxu0 0.0
    %2442 = vmatpush2.msra.mxu0 0.0
    %2443 = vmatprep.mubr.f32.mxu0 0.0
    %2444 = vmatmul.mubr.f32.gmra.mxu0 %v2378
    %v2445 = vpop.f32.mrf.mxu0
    %v2446 = vadd.f32 %v1925, %v2445
    %v2447 = vpop.f32.mrf.mxu0
    %2448 = vdwg.mxu0
    %v2449 = vmul.f32 %v2446, 0.5
    %v2450 = vld [vmem:[%s299] sm:$0xff]
    %v2451 = vmul.f32 %v2450, 0.5
    %v2452 = vadd.f32 %v2449, %v2451
    %s2453 = scalar_lea.vmem %s8, 24
    %2454 = vst.msk [vmem:[%s2453] sm:$0xff] %vm64, %v2452
    %v2455 = vld [vmem:[%s1264] sm:$0xff]
    %v2457 = vsel %vm710, %v2455, 0
    %2459 = vmatprep.subr.mxu0 0.0
    %2460 = vmatpush1.msra.mxu0 0.0
    %2461 = vmatprep.subr.mxu0 0.0
    %2462 = vmatpush1.msra.mxu0 0.0
    %2463 = vmatprep.subr.mxu0 0.0
    %2464 = vmatpush1.msra.mxu0 0.0
    %2465 = vmatprep.subr.mxu0 0.0
    %2466 = vmatpush1.msra.mxu0 0.0
    %2467 = vmatprep.subr.mxu0 0.0
    %2468 = vmatpush1.msra.mxu0 0.0
    %2469 = vmatprep.subr.mxu0 0.0
    %2470 = vmatpush1.msra.mxu0 0.0
    %2471 = vmatprep.subr.mxu0 0.0
    %2472 = vmatpush1.msra.mxu0 0.0
    %2473 = vmatprep.subr.mxu0 0.0
    %2474 = vmatpush1.msra.mxu0 0.0
    %2475 = vmatprep.subr.mxu0 0.0
    %2476 = vmatpush1.msra.mxu0 %v1821
    %2477 = vmatprep.subr.mxu0 0.0
    %2478 = vmatpush1.msra.mxu0 %v1820
    %2479 = vmatprep.subr.mxu0 0.0
    %2480 = vmatpush1.msra.mxu0 %v1819
    %2481 = vmatprep.subr.mxu0 0.0
    %2482 = vmatpush1.msra.mxu0 %v1818
    %2483 = vmatprep.subr.mxu0 0.0
    %2484 = vmatpush1.msra.mxu0 %v1817
    %2485 = vmatprep.subr.mxu0 0.0
    %2486 = vmatpush1.msra.mxu0 %v1816
    %2487 = vmatprep.subr.mxu0 0.0
    %2488 = vmatpush1.msra.mxu0 %v1815
    %2489 = vmatprep.subr.mxu0 0.0
    %2490 = vmatpush1.msra.mxu0 %v1814
    %2491 = vmatprep.subr.mxu0 0.0
    %2492 = vmatpush2.msra.mxu0 0.0
    %2493 = vmatprep.subr.mxu0 0.0
    %2494 = vmatpush2.msra.mxu0 0.0
    %2495 = vmatprep.subr.mxu0 0.0
    %2496 = vmatpush2.msra.mxu0 0.0
    %2497 = vmatprep.subr.mxu0 0.0
    %2498 = vmatpush2.msra.mxu0 0.0
    %2499 = vmatprep.subr.mxu0 0.0
    %2500 = vmatpush2.msra.mxu0 0.0
    %2501 = vmatprep.subr.mxu0 0.0
    %2502 = vmatpush2.msra.mxu0 0.0
    %2503 = vmatprep.subr.mxu0 0.0
    %2504 = vmatpush2.msra.mxu0 0.0
    %2505 = vmatprep.subr.mxu0 0.0
    %2506 = vmatpush2.msra.mxu0 0.0
    %2507 = vmatprep.subr.mxu0 0.0
    %2508 = vmatpush2.msra.mxu0 0.0
    %2509 = vmatprep.subr.mxu0 0.0
    %2510 = vmatpush2.msra.mxu0 0.0
    %2511 = vmatprep.subr.mxu0 0.0
    %2512 = vmatpush2.msra.mxu0 0.0
    %2513 = vmatprep.subr.mxu0 0.0
    %2514 = vmatpush2.msra.mxu0 0.0
    %2515 = vmatprep.subr.mxu0 0.0
    %2516 = vmatpush2.msra.mxu0 0.0
    %2517 = vmatprep.subr.mxu0 0.0
    %2518 = vmatpush2.msra.mxu0 0.0
    %2519 = vmatprep.subr.mxu0 0.0
    %2520 = vmatpush2.msra.mxu0 0.0
    %2521 = vmatprep.subr.mxu0 0.0
    %2522 = vmatpush2.msra.mxu0 0.0
    %2523 = vmatprep.mubr.f32.mxu0 0.0
    %2524 = vmatmul.mubr.f32.gmra.mxu0 %v2457
    %v2525 = vpop.f32.mrf.mxu0
    %v2526 = vadd.f32 %v1845, %v2525
    %v2527 = vpop.f32.mrf.mxu0
    %2528 = vdwg.mxu0
    %v2529 = vmax.f32 %v2526, 0.0
    %2530 = vmatprep.subr.mxu0 0.0
    %2531 = vmatpush1.msra.mxu0 %v1838
    %2532 = vmatprep.subr.mxu0 0.0
    %2533 = vmatpush1.msra.mxu0 %v1837
    %2534 = vmatprep.subr.mxu0 0.0
    %2535 = vmatpush1.msra.mxu0 %v1836
    %2536 = vmatprep.subr.mxu0 0.0
    %2537 = vmatpush1.msra.mxu0 %v1835
    %2538 = vmatprep.subr.mxu0 0.0
    %2539 = vmatpush1.msra.mxu0 %v1834
    %2540 = vmatprep.subr.mxu0 0.0
    %2541 = vmatpush1.msra.mxu0 %v1833
    %2542 = vmatprep.subr.mxu0 0.0
    %2543 = vmatpush1.msra.mxu0 %v1832
    %2544 = vmatprep.subr.mxu0 0.0
    %2545 = vmatpush1.msra.mxu0 %v1831
    %2546 = vmatprep.subr.mxu0 0.0
    %2547 = vmatpush1.msra.mxu0 %v1830
    %2548 = vmatprep.subr.mxu0 0.0
    %2549 = vmatpush1.msra.mxu0 %v1829
    %2550 = vmatprep.subr.mxu0 0.0
    %2551 = vmatpush1.msra.mxu0 %v1828
    %2552 = vmatprep.subr.mxu0 0.0
    %2553 = vmatpush1.msra.mxu0 %v1827
    %2554 = vmatprep.subr.mxu0 0.0
    %2555 = vmatpush1.msra.mxu0 %v1826
    %2556 = vmatprep.subr.mxu0 0.0
    %2557 = vmatpush1.msra.mxu0 %v1825
    %2558 = vmatprep.subr.mxu0 0.0
    %2559 = vmatpush1.msra.mxu0 %v1824
    %2560 = vmatprep.subr.mxu0 0.0
    %2561 = vmatpush1.msra.mxu0 %v1823
    %2562 = vmatprep.subr.mxu0 0.0
    %2563 = vmatpush2.msra.mxu0 0.0
    %2564 = vmatprep.subr.mxu0 0.0
    %2565 = vmatpush2.msra.mxu0 0.0
    %2566 = vmatprep.subr.mxu0 0.0
    %2567 = vmatpush2.msra.mxu0 0.0
    %2568 = vmatprep.subr.mxu0 0.0
    %2569 = vmatpush2.msra.mxu0 0.0
    %2570 = vmatprep.subr.mxu0 0.0
    %2571 = vmatpush2.msra.mxu0 0.0
    %2572 = vmatprep.subr.mxu0 0.0
    %2573 = vmatpush2.msra.mxu0 0.0
    %2574 = vmatprep.subr.mxu0 0.0
    %2575 = vmatpush2.msra.mxu0 0.0
    %2576 = vmatprep.subr.mxu0 0.0
    %2577 = vmatpush2.msra.mxu0 0.0
    %2578 = vmatprep.subr.mxu0 0.0
    %2579 = vmatpush2.msra.mxu0 0.0
    %2580 = vmatprep.subr.mxu0 0.0
    %2581 = vmatpush2.msra.mxu0 0.0
    %2582 = vmatprep.subr.mxu0 0.0
    %2583 = vmatpush2.msra.mxu0 0.0
    %2584 = vmatprep.subr.mxu0 0.0
    %2585 = vmatpush2.msra.mxu0 0.0
    %2586 = vmatprep.subr.mxu0 0.0
    %2587 = vmatpush2.msra.mxu0 0.0
    %2588 = vmatprep.subr.mxu0 0.0
    %2589 = vmatpush2.msra.mxu0 0.0
    %2590 = vmatprep.subr.mxu0 0.0
    %2591 = vmatpush2.msra.mxu0 0.0
    %2592 = vmatprep.subr.mxu0 0.0
    %2593 = vmatpush2.msra.mxu0 0.0
    %2594 = vmatprep.mubr.f32.mxu0 0.0
    %2595 = vmatmul.mubr.f32.gmra.mxu0 %v2529
    %v2596 = vpop.f32.mrf.mxu0
    %v2597 = vadd.f32 %v1925, %v2596
    %v2598 = vpop.f32.mrf.mxu0
    %2599 = vdwg.mxu0
    %v2600 = vmul.f32 %v2597, 0.5
    %v2601 = vld [vmem:[%s378] sm:$0xff]
    %v2602 = vmul.f32 %v2601, 0.5
    %v2603 = vadd.f32 %v2600, %v2602
    %s2604 = scalar_lea.vmem %s8, 32
    %2605 = vst.msk [vmem:[%s2604] sm:$0xff] %vm64, %v2603
    %v2606 = vld [vmem:[%s1125] sm:$0xff]
    %v2608 = vsel %vm710, %v2606, 0
    %2610 = vmatprep.subr.mxu0 0.0
    %2611 = vmatpush1.msra.mxu0 0.0
    %2612 = vmatprep.subr.mxu0 0.0
    %2613 = vmatpush1.msra.mxu0 0.0
    %2614 = vmatprep.subr.mxu0 0.0
    %2615 = vmatpush1.msra.mxu0 0.0
    %2616 = vmatprep.subr.mxu0 0.0
    %2617 = vmatpush1.msra.mxu0 0.0
    %2618 = vmatprep.subr.mxu0 0.0
    %2619 = vmatpush1.msra.mxu0 0.0
    %2620 = vmatprep.subr.mxu0 0.0
    %2621 = vmatpush1.msra.mxu0 0.0
    %2622 = vmatprep.subr.mxu0 0.0
    %2623 = vmatpush1.msra.mxu0 0.0
    %2624 = vmatprep.subr.mxu0 0.0
    %2625 = vmatpush1.msra.mxu0 0.0
    %2626 = vmatprep.subr.mxu0 0.0
    %2627 = vmatpush1.msra.mxu0 %v1821
    %2628 = vmatprep.subr.mxu0 0.0
    %2629 = vmatpush1.msra.mxu0 %v1820
    %2630 = vmatprep.subr.mxu0 0.0
    %2631 = vmatpush1.msra.mxu0 %v1819
    %2632 = vmatprep.subr.mxu0 0.0
    %2633 = vmatpush1.msra.mxu0 %v1818
    %2634 = vmatprep.subr.mxu0 0.0
    %2635 = vmatpush1.msra.mxu0 %v1817
    %2636 = vmatprep.subr.mxu0 0.0
    %2637 = vmatpush1.msra.mxu0 %v1816
    %2638 = vmatprep.subr.mxu0 0.0
    %2639 = vmatpush1.msra.mxu0 %v1815
    %2640 = vmatprep.subr.mxu0 0.0
    %2641 = vmatpush1.msra.mxu0 %v1814
    %2642 = vmatprep.subr.mxu0 0.0
    %2643 = vmatpush2.msra.mxu0 0.0
    %2644 = vmatprep.subr.mxu0 0.0
    %2645 = vmatpush2.msra.mxu0 0.0
    %2646 = vmatprep.subr.mxu0 0.0
    %2647 = vmatpush2.msra.mxu0 0.0
    %2648 = vmatprep.subr.mxu0 0.0
    %2649 = vmatpush2.msra.mxu0 0.0
    %2650 = vmatprep.subr.mxu0 0.0
    %2651 = vmatpush2.msra.mxu0 0.0
    %2652 = vmatprep.subr.mxu0 0.0
    %2653 = vmatpush2.msra.mxu0 0.0
    %2654 = vmatprep.subr.mxu0 0.0
    %2655 = vmatpush2.msra.mxu0 0.0
    %2656 = vmatprep.subr.mxu0 0.0
    %2657 = vmatpush2.msra.mxu0 0.0
    %2658 = vmatprep.subr.mxu0 0.0
    %2659 = vmatpush2.msra.mxu0 0.0
    %2660 = vmatprep.subr.mxu0 0.0
    %2661 = vmatpush2.msra.mxu0 0.0
    %2662 = vmatprep.subr.mxu0 0.0
    %2663 = vmatpush2.msra.mxu0 0.0
    %2664 = vmatprep.subr.mxu0 0.0
    %2665 = vmatpush2.msra.mxu0 0.0
    %2666 = vmatprep.subr.mxu0 0.0
    %2667 = vmatpush2.msra.mxu0 0.0
    %2668 = vmatprep.subr.mxu0 0.0
    %2669 = vmatpush2.msra.mxu0 0.0
    %2670 = vmatprep.subr.mxu0 0.0
    %2671 = vmatpush2.msra.mxu0 0.0
    %2672 = vmatprep.subr.mxu0 0.0
    %2673 = vmatpush2.msra.mxu0 0.0
    %2674 = vmatprep.mubr.f32.mxu0 0.0
    %2675 = vmatmul.mubr.f32.gmra.mxu0 %v2608
    %v2676 = vpop.f32.mrf.mxu0
    %v2677 = vadd.f32 %v1845, %v2676
    %v2678 = vpop.f32.mrf.mxu0
    %2679 = vdwg.mxu0
    %v2680 = vmax.f32 %v2677, 0.0
    %2681 = vmatprep.subr.mxu0 0.0
    %2682 = vmatpush1.msra.mxu0 %v1838
    %2683 = vmatprep.subr.mxu0 0.0
    %2684 = vmatpush1.msra.mxu0 %v1837
    %2685 = vmatprep.subr.mxu0 0.0
    %2686 = vmatpush1.msra.mxu0 %v1836
    %2687 = vmatprep.subr.mxu0 0.0
    %2688 = vmatpush1.msra.mxu0 %v1835
    %2689 = vmatprep.subr.mxu0 0.0
    %2690 = vmatpush1.msra.mxu0 %v1834
    %2691 = vmatprep.subr.mxu0 0.0
    %2692 = vmatpush1.msra.mxu0 %v1833
    %2693 = vmatprep.subr.mxu0 0.0
    %2694 = vmatpush1.msra.mxu0 %v1832
    %2695 = vmatprep.subr.mxu0 0.0
    %2696 = vmatpush1.msra.mxu0 %v1831
    %2697 = vmatprep.subr.mxu0 0.0
    %2698 = vmatpush1.msra.mxu0 %v1830
    %2699 = vmatprep.subr.mxu0 0.0
    %2700 = vmatpush1.msra.mxu0 %v1829
    %2701 = vmatprep.subr.mxu0 0.0
    %2702 = vmatpush1.msra.mxu0 %v1828
    %2703 = vmatprep.subr.mxu0 0.0
    %2704 = vmatpush1.msra.mxu0 %v1827
    %2705 = vmatprep.subr.mxu0 0.0
    %2706 = vmatpush1.msra.mxu0 %v1826
    %2707 = vmatprep.subr.mxu0 0.0
    %2708 = vmatpush1.msra.mxu0 %v1825
    %2709 = vmatprep.subr.mxu0 0.0
    %2710 = vmatpush1.msra.mxu0 %v1824
    %2711 = vmatprep.subr.mxu0 0.0
    %2712 = vmatpush1.msra.mxu0 %v1823
    %2713 = vmatprep.subr.mxu0 0.0
    %2714 = vmatpush2.msra.mxu0 0.0
    %2715 = vmatprep.subr.mxu0 0.0
    %2716 = vmatpush2.msra.mxu0 0.0
    %2717 = vmatprep.subr.mxu0 0.0
    %2718 = vmatpush2.msra.mxu0 0.0
    %2719 = vmatprep.subr.mxu0 0.0
    %2720 = vmatpush2.msra.mxu0 0.0
    %2721 = vmatprep.subr.mxu0 0.0
    %2722 = vmatpush2.msra.mxu0 0.0
    %2723 = vmatprep.subr.mxu0 0.0
    %2724 = vmatpush2.msra.mxu0 0.0
    %2725 = vmatprep.subr.mxu0 0.0
    %2726 = vmatpush2.msra.mxu0 0.0
    %2727 = vmatprep.subr.mxu0 0.0
    %2728 = vmatpush2.msra.mxu0 0.0
    %2729 = vmatprep.subr.mxu0 0.0
    %2730 = vmatpush2.msra.mxu0 0.0
    %2731 = vmatprep.subr.mxu0 0.0
    %2732 = vmatpush2.msra.mxu0 0.0
    %2733 = vmatprep.subr.mxu0 0.0
    %2734 = vmatpush2.msra.mxu0 0.0
    %2735 = vmatprep.subr.mxu0 0.0
    %2736 = vmatpush2.msra.mxu0 0.0
    %2737 = vmatprep.subr.mxu0 0.0
    %2738 = vmatpush2.msra.mxu0 0.0
    %2739 = vmatprep.subr.mxu0 0.0
    %2740 = vmatpush2.msra.mxu0 0.0
    %2741 = vmatprep.subr.mxu0 0.0
    %2742 = vmatpush2.msra.mxu0 0.0
    %2743 = vmatprep.subr.mxu0 0.0
    %2744 = vmatpush2.msra.mxu0 0.0
    %2745 = vmatprep.mubr.f32.mxu0 0.0
    %2746 = vmatmul.mubr.f32.gmra.mxu0 %v2680
    %v2747 = vpop.f32.mrf.mxu0
    %v2748 = vadd.f32 %v1925, %v2747
    %v2749 = vpop.f32.mrf.mxu0
    %2750 = vdwg.mxu0
    %v2751 = vmul.f32 %v2748, 0.5
    %v2752 = vld [vmem:[%s457] sm:$0xff]
    %v2753 = vmul.f32 %v2752, 0.5
    %v2754 = vadd.f32 %v2751, %v2753
    %s2755 = scalar_lea.vmem %s8, 40
    %2756 = vst.msk [vmem:[%s2755] sm:$0xff] %vm64, %v2754
    %v2757 = vld [vmem:[%s986] sm:$0xff]
    %v2759 = vsel %vm710, %v2757, 0
    %2761 = vmatprep.subr.mxu0 0.0
    %2762 = vmatpush1.msra.mxu0 0.0
    %2763 = vmatprep.subr.mxu0 0.0
    %2764 = vmatpush1.msra.mxu0 0.0
    %2765 = vmatprep.subr.mxu0 0.0
    %2766 = vmatpush1.msra.mxu0 0.0
    %2767 = vmatprep.subr.mxu0 0.0
    %2768 = vmatpush1.msra.mxu0 0.0
    %2769 = vmatprep.subr.mxu0 0.0
    %2770 = vmatpush1.msra.mxu0 0.0
    %2771 = vmatprep.subr.mxu0 0.0
    %2772 = vmatpush1.msra.mxu0 0.0
    %2773 = vmatprep.subr.mxu0 0.0
    %2774 = vmatpush1.msra.mxu0 0.0
    %2775 = vmatprep.subr.mxu0 0.0
    %2776 = vmatpush1.msra.mxu0 0.0
    %2777 = vmatprep.subr.mxu0 0.0
    %2778 = vmatpush1.msra.mxu0 %v1821
    %2779 = vmatprep.subr.mxu0 0.0
    %2780 = vmatpush1.msra.mxu0 %v1820
    %2781 = vmatprep.subr.mxu0 0.0
    %2782 = vmatpush1.msra.mxu0 %v1819
    %2783 = vmatprep.subr.mxu0 0.0
    %2784 = vmatpush1.msra.mxu0 %v1818
    %2785 = vmatprep.subr.mxu0 0.0
    %2786 = vmatpush1.msra.mxu0 %v1817
    %2787 = vmatprep.subr.mxu0 0.0
    %2788 = vmatpush1.msra.mxu0 %v1816
    %2789 = vmatprep.subr.mxu0 0.0
    %2790 = vmatpush1.msra.mxu0 %v1815
    %2791 = vmatprep.subr.mxu0 0.0
    %2792 = vmatpush1.msra.mxu0 %v1814
    %2793 = vmatprep.subr.mxu0 0.0
    %2794 = vmatpush2.msra.mxu0 0.0
    %2795 = vmatprep.subr.mxu0 0.0
    %2796 = vmatpush2.msra.mxu0 0.0
    %2797 = vmatprep.subr.mxu0 0.0
    %2798 = vmatpush2.msra.mxu0 0.0
    %2799 = vmatprep.subr.mxu0 0.0
    %2800 = vmatpush2.msra.mxu0 0.0
    %2801 = vmatprep.subr.mxu0 0.0
    %2802 = vmatpush2.msra.mxu0 0.0
    %2803 = vmatprep.subr.mxu0 0.0
    %2804 = vmatpush2.msra.mxu0 0.0
    %2805 = vmatprep.subr.mxu0 0.0
    %2806 = vmatpush2.msra.mxu0 0.0
    %2807 = vmatprep.subr.mxu0 0.0
    %2808 = vmatpush2.msra.mxu0 0.0
    %2809 = vmatprep.subr.mxu0 0.0
    %2810 = vmatpush2.msra.mxu0 0.0
    %2811 = vmatprep.subr.mxu0 0.0
    %2812 = vmatpush2.msra.mxu0 0.0
    %2813 = vmatprep.subr.mxu0 0.0
    %2814 = vmatpush2.msra.mxu0 0.0
    %2815 = vmatprep.subr.mxu0 0.0
    %2816 = vmatpush2.msra.mxu0 0.0
    %2817 = vmatprep.subr.mxu0 0.0
    %2818 = vmatpush2.msra.mxu0 0.0
    %2819 = vmatprep.subr.mxu0 0.0
    %2820 = vmatpush2.msra.mxu0 0.0
    %2821 = vmatprep.subr.mxu0 0.0
    %2822 = vmatpush2.msra.mxu0 0.0
    %2823 = vmatprep.subr.mxu0 0.0
    %2824 = vmatpush2.msra.mxu0 0.0
    %2825 = vmatprep.mubr.f32.mxu0 0.0
    %2826 = vmatmul.mubr.f32.gmra.mxu0 %v2759
    %v2827 = vpop.f32.mrf.mxu0
    %v2828 = vadd.f32 %v1845, %v2827
    %v2829 = vpop.f32.mrf.mxu0
    %2830 = vdwg.mxu0
    %v2831 = vmax.f32 %v2828, 0.0
    %2832 = vmatprep.subr.mxu0 0.0
    %2833 = vmatpush1.msra.mxu0 %v1838
    %2834 = vmatprep.subr.mxu0 0.0
    %2835 = vmatpush1.msra.mxu0 %v1837
    %2836 = vmatprep.subr.mxu0 0.0
    %2837 = vmatpush1.msra.mxu0 %v1836
    %2838 = vmatprep.subr.mxu0 0.0
    %2839 = vmatpush1.msra.mxu0 %v1835
    %2840 = vmatprep.subr.mxu0 0.0
    %2841 = vmatpush1.msra.mxu0 %v1834
    %2842 = vmatprep.subr.mxu0 0.0
    %2843 = vmatpush1.msra.mxu0 %v1833
    %2844 = vmatprep.subr.mxu0 0.0
    %2845 = vmatpush1.msra.mxu0 %v1832
    %2846 = vmatprep.subr.mxu0 0.0
    %2847 = vmatpush1.msra.mxu0 %v1831
    %2848 = vmatprep.subr.mxu0 0.0
    %2849 = vmatpush1.msra.mxu0 %v1830
    %2850 = vmatprep.subr.mxu0 0.0
    %2851 = vmatpush1.msra.mxu0 %v1829
    %2852 = vmatprep.subr.mxu0 0.0
    %2853 = vmatpush1.msra.mxu0 %v1828
    %2854 = vmatprep.subr.mxu0 0.0
    %2855 = vmatpush1.msra.mxu0 %v1827
    %2856 = vmatprep.subr.mxu0 0.0
    %2857 = vmatpush1.msra.mxu0 %v1826
    %2858 = vmatprep.subr.mxu0 0.0
    %2859 = vmatpush1.msra.mxu0 %v1825
    %2860 = vmatprep.subr.mxu0 0.0
    %2861 = vmatpush1.msra.mxu0 %v1824
    %2862 = vmatprep.subr.mxu0 0.0
    %2863 = vmatpush1.msra.mxu0 %v1823
    %2864 = vmatprep.subr.mxu0 0.0
    %2865 = vmatpush2.msra.mxu0 0.0
    %2866 = vmatprep.subr.mxu0 0.0
    %2867 = vmatpush2.msra.mxu0 0.0
    %2868 = vmatprep.subr.mxu0 0.0
    %2869 = vmatpush2.msra.mxu0 0.0
    %2870 = vmatprep.subr.mxu0 0.0
    %2871 = vmatpush2.msra.mxu0 0.0
    %2872 = vmatprep.subr.mxu0 0.0
    %2873 = vmatpush2.msra.mxu0 0.0
    %2874 = vmatprep.subr.mxu0 0.0
    %2875 = vmatpush2.msra.mxu0 0.0
    %2876 = vmatprep.subr.mxu0 0.0
    %2877 = vmatpush2.msra.mxu0 0.0
    %2878 = vmatprep.subr.mxu0 0.0
    %2879 = vmatpush2.msra.mxu0 0.0
    %2880 = vmatprep.subr.mxu0 0.0
    %2881 = vmatpush2.msra.mxu0 0.0
    %2882 = vmatprep.subr.mxu0 0.0
    %2883 = vmatpush2.msra.mxu0 0.0
    %2884 = vmatprep.subr.mxu0 0.0
    %2885 = vmatpush2.msra.mxu0 0.0
    %2886 = vmatprep.subr.mxu0 0.0
    %2887 = vmatpush2.msra.mxu0 0.0
    %2888 = vmatprep.subr.mxu0 0.0
    %2889 = vmatpush2.msra.mxu0 0.0
    %2890 = vmatprep.subr.mxu0 0.0
    %2891 = vmatpush2.msra.mxu0 0.0
    %2892 = vmatprep.subr.mxu0 0.0
    %2893 = vmatpush2.msra.mxu0 0.0
    %2894 = vmatprep.subr.mxu0 0.0
    %2895 = vmatpush2.msra.mxu0 0.0
    %2896 = vmatprep.mubr.f32.mxu0 0.0
    %2897 = vmatmul.mubr.f32.gmra.mxu0 %v2831
    %v2898 = vpop.f32.mrf.mxu0
    %v2899 = vadd.f32 %v1925, %v2898
    %v2900 = vpop.f32.mrf.mxu0
    %2901 = vdwg.mxu0
    %v2902 = vmul.f32 %v2899, 0.5
    %v2903 = vld [vmem:[%s536] sm:$0xff]
    %v2904 = vmul.f32 %v2903, 0.5
    %v2905 = vadd.f32 %v2902, %v2904
    %s2906 = scalar_lea.vmem %s8, 48
    %2907 = vst.msk [vmem:[%s2906] sm:$0xff] %vm64, %v2905
    %v2908 = vld [vmem:[%s846] sm:$0xff]
    %v2910 = vsel %vm710, %v2908, 0
    %2912 = vmatprep.subr.mxu0 0.0
    %2913 = vmatpush1.msra.mxu0 0.0
    %2914 = vmatprep.subr.mxu0 0.0
    %2915 = vmatpush1.msra.mxu0 0.0
    %2916 = vmatprep.subr.mxu0 0.0
    %2917 = vmatpush1.msra.mxu0 0.0
    %2918 = vmatprep.subr.mxu0 0.0
    %2919 = vmatpush1.msra.mxu0 0.0
    %2920 = vmatprep.subr.mxu0 0.0
    %2921 = vmatpush1.msra.mxu0 0.0
    %2922 = vmatprep.subr.mxu0 0.0
    %2923 = vmatpush1.msra.mxu0 0.0
    %2924 = vmatprep.subr.mxu0 0.0
    %2925 = vmatpush1.msra.mxu0 0.0
    %2926 = vmatprep.subr.mxu0 0.0
    %2927 = vmatpush1.msra.mxu0 0.0
    %2928 = vmatprep.subr.mxu0 0.0
    %2929 = vmatpush1.msra.mxu0 %v1821
    %2930 = vmatprep.subr.mxu0 0.0
    %2931 = vmatpush1.msra.mxu0 %v1820
    %2932 = vmatprep.subr.mxu0 0.0
    %2933 = vmatpush1.msra.mxu0 %v1819
    %2934 = vmatprep.subr.mxu0 0.0
    %2935 = vmatpush1.msra.mxu0 %v1818
    %2936 = vmatprep.subr.mxu0 0.0
    %2937 = vmatpush1.msra.mxu0 %v1817
    %2938 = vmatprep.subr.mxu0 0.0
    %2939 = vmatpush1.msra.mxu0 %v1816
    %2940 = vmatprep.subr.mxu0 0.0
    %2941 = vmatpush1.msra.mxu0 %v1815
    %2942 = vmatprep.subr.mxu0 0.0
    %2943 = vmatpush1.msra.mxu0 %v1814
    %2944 = vmatprep.subr.mxu0 0.0
    %2945 = vmatpush2.msra.mxu0 0.0
    %2946 = vmatprep.subr.mxu0 0.0
    %2947 = vmatpush2.msra.mxu0 0.0
    %2948 = vmatprep.subr.mxu0 0.0
    %2949 = vmatpush2.msra.mxu0 0.0
    %2950 = vmatprep.subr.mxu0 0.0
    %2951 = vmatpush2.msra.mxu0 0.0
    %2952 = vmatprep.subr.mxu0 0.0
    %2953 = vmatpush2.msra.mxu0 0.0
    %2954 = vmatprep.subr.mxu0 0.0
    %2955 = vmatpush2.msra.mxu0 0.0
    %2956 = vmatprep.subr.mxu0 0.0
    %2957 = vmatpush2.msra.mxu0 0.0
    %2958 = vmatprep.subr.mxu0 0.0
    %2959 = vmatpush2.msra.mxu0 0.0
    %2960 = vmatprep.subr.mxu0 0.0
    %2961 = vmatpush2.msra.mxu0 0.0
    %2962 = vmatprep.subr.mxu0 0.0
    %2963 = vmatpush2.msra.mxu0 0.0
    %2964 = vmatprep.subr.mxu0 0.0
    %2965 = vmatpush2.msra.mxu0 0.0
    %2966 = vmatprep.subr.mxu0 0.0
    %2967 = vmatpush2.msra.mxu0 0.0
    %2968 = vmatprep.subr.mxu0 0.0
    %2969 = vmatpush2.msra.mxu0 0.0
    %2970 = vmatprep.subr.mxu0 0.0
    %2971 = vmatpush2.msra.mxu0 0.0
    %2972 = vmatprep.subr.mxu0 0.0
    %2973 = vmatpush2.msra.mxu0 0.0
    %2974 = vmatprep.subr.mxu0 0.0
    %2975 = vmatpush2.msra.mxu0 0.0
    %2976 = vmatprep.mubr.f32.mxu0 0.0
    %2977 = vmatmul.mubr.f32.gmra.mxu0 %v2910
    %v2978 = vpop.f32.mrf.mxu0
    %v2979 = vadd.f32 %v1845, %v2978
    %v2980 = vpop.f32.mrf.mxu0
    %2981 = vdwg.mxu0
    %v2982 = vmax.f32 %v2979, 0.0
    %2983 = vmatprep.subr.mxu0 0.0
    %2984 = vmatpush1.msra.mxu0 %v1838
    %2985 = vmatprep.subr.mxu0 0.0
    %2986 = vmatpush1.msra.mxu0 %v1837
    %2987 = vmatprep.subr.mxu0 0.0
    %2988 = vmatpush1.msra.mxu0 %v1836
    %2989 = vmatprep.subr.mxu0 0.0
    %2990 = vmatpush1.msra.mxu0 %v1835
    %2991 = vmatprep.subr.mxu0 0.0
    %2992 = vmatpush1.msra.mxu0 %v1834
    %2993 = vmatprep.subr.mxu0 0.0
    %2994 = vmatpush1.msra.mxu0 %v1833
    %2995 = vmatprep.subr.mxu0 0.0
    %2996 = vmatpush1.msra.mxu0 %v1832
    %2997 = vmatprep.subr.mxu0 0.0
    %2998 = vmatpush1.msra.mxu0 %v1831
    %2999 = vmatprep.subr.mxu0 0.0
    %3000 = vmatpush1.msra.mxu0 %v1830
    %3001 = vmatprep.subr.mxu0 0.0
    %3002 = vmatpush1.msra.mxu0 %v1829
    %3003 = vmatprep.subr.mxu0 0.0
    %3004 = vmatpush1.msra.mxu0 %v1828
    %3005 = vmatprep.subr.mxu0 0.0
    %3006 = vmatpush1.msra.mxu0 %v1827
    %3007 = vmatprep.subr.mxu0 0.0
    %3008 = vmatpush1.msra.mxu0 %v1826
    %3009 = vmatprep.subr.mxu0 0.0
    %3010 = vmatpush1.msra.mxu0 %v1825
    %3011 = vmatprep.subr.mxu0 0.0
    %3012 = vmatpush1.msra.mxu0 %v1824
    %3013 = vmatprep.subr.mxu0 0.0
    %3014 = vmatpush1.msra.mxu0 %v1823
    %3015 = vmatprep.subr.mxu0 0.0
    %3016 = vmatpush2.msra.mxu0 0.0
    %3017 = vmatprep.subr.mxu0 0.0
    %3018 = vmatpush2.msra.mxu0 0.0
    %3019 = vmatprep.subr.mxu0 0.0
    %3020 = vmatpush2.msra.mxu0 0.0
    %3021 = vmatprep.subr.mxu0 0.0
    %3022 = vmatpush2.msra.mxu0 0.0
    %3023 = vmatprep.subr.mxu0 0.0
    %3024 = vmatpush2.msra.mxu0 0.0
    %3025 = vmatprep.subr.mxu0 0.0
    %3026 = vmatpush2.msra.mxu0 0.0
    %3027 = vmatprep.subr.mxu0 0.0
    %3028 = vmatpush2.msra.mxu0 0.0
    %3029 = vmatprep.subr.mxu0 0.0
    %3030 = vmatpush2.msra.mxu0 0.0
    %3031 = vmatprep.subr.mxu0 0.0
    %3032 = vmatpush2.msra.mxu0 0.0
    %3033 = vmatprep.subr.mxu0 0.0
    %3034 = vmatpush2.msra.mxu0 0.0
    %3035 = vmatprep.subr.mxu0 0.0
    %3036 = vmatpush2.msra.mxu0 0.0
    %3037 = vmatprep.subr.mxu0 0.0
    %3038 = vmatpush2.msra.mxu0 0.0
    %3039 = vmatprep.subr.mxu0 0.0
    %3040 = vmatpush2.msra.mxu0 0.0
    %3041 = vmatprep.subr.mxu0 0.0
    %3042 = vmatpush2.msra.mxu0 0.0
    %3043 = vmatprep.subr.mxu0 0.0
    %3044 = vmatpush2.msra.mxu0 0.0
    %3045 = vmatprep.subr.mxu0 0.0
    %3046 = vmatpush2.msra.mxu0 0.0
    %3047 = vmatprep.mubr.f32.mxu0 0.0
    %3048 = vmatmul.mubr.f32.gmra.mxu0 %v2982
    %v3049 = vpop.f32.mrf.mxu0
    %v3050 = vadd.f32 %v1925, %v3049
    %v3051 = vpop.f32.mrf.mxu0
    %3052 = vdwg.mxu0
    %v3053 = vmul.f32 %v3050, 0.5
    %v3054 = vld [vmem:[%s615] sm:$0xff]
    %v3055 = vmul.f32 %v3054, 0.5
    %v3056 = vadd.f32 %v3053, %v3055
    %s3057 = scalar_lea.vmem %s8, 56
    %3058 = vst.msk [vmem:[%s3057] sm:$0xff] %vm64, %v3056
    // Predicated region
    $region38: #{residual_lstm.1} parent=1 // pred_check
      _
    $region39: #{residual_lstm.1} parent=1 // pred_check_branch
      %3060 = sbr.rel (0) target = $region41
    $region40: #{residual_lstm.1} parent=1 // pred_region
      _
    $region41: #{residual_lstm.1} parent=1 // pred_fallthru
      _
    // Predicated region
    $region42: #{residual_lstm.1} parent=1 // pred_check
      _
    $region43: #{residual_lstm.1} parent=1 // pred_check_branch
      %3062 = sbr.rel (0) target = $region45
    $region44: #{residual_lstm.1} parent=1 // pred_region
      _
    $region45: #{residual_lstm.1} parent=1 // pred_fallthru
      _
    %3063 = vsyncpa [#allocation5], 1

</llo_original>
